<compile_context>
chip_gen: v7x
topology: tpu7x:2x2x1
jax: 0.10.0
libtpu: 0.0.40
codegen_flags: <defaults>
</compile_context>

<pallas_src>
import jax
import jax.numpy as jnp
from jax import lax
from jax.experimental import pallas as pl
from jax.experimental.pallas import tpu as pltpu


def _lstm_kernel(x_ref,      # (T*B, I)    time-major flattened input, f32
                 wih0_ref,   # (I, 4*HP)   layer-0 input weights (gate-scaled), f32
                 whh0_ref,   # (HP, 4*HP)  layer-0 recurrent weights, bf16
                 b0_ref,     # (1, 4*HP)   b_ih_l0 + b_hh_l0 (gate-scaled), f32
                 wih1_ref,   # (HP, 4*HP)  layer-1 input weights, bf16
                 whh1_ref,   # (HP, 4*HP)  layer-1 recurrent weights, bf16
                 b1_ref,     # (1, 4*HP)   b_ih_l1 + b_hh_l1 (gate-scaled), f32
                 wfc_ref,    # (O, HP)     FC weight, lane-padded, f32
                 bfc_ref,    # (1, O)      FC bias, f32
                 out_ref,    # (B, O)
                 h0_all_ref  # (T*B, HP)   bf16 VMEM scratch: all layer-0 h(t)
                 ):
    TB, I = x_ref.shape
    B, O = out_ref.shape
    T = TB // B
    HP4 = whh0_ref.shape[1]
    HP = HP4 // 4

    # Hoist recurrent/stationary weight loads out of the loops.
    whh0 = whh0_ref[...]                                   # bf16, stationary in pass 1
    wih1 = wih1_ref[...]                                   # bf16, used in one batched matmul
    whh1 = whh1_ref[...]                                   # bf16, stationary in pass 2

    # ---- layer-0 input projection for ALL timesteps (hoisted) ----
    x = x_ref[...].astype(jnp.float32)                     # (TB, I)
    if I == 1:
        # degenerate K=1 "matmul" -> pure VPU broadcast multiply
        xproj0 = x * wih0_ref[...] + b0_ref[...]           # (TB, 4HP) f32
    else:
        xproj0 = jnp.dot(x.astype(jnp.bfloat16),
                         wih0_ref[...].astype(jnp.bfloat16),
                         preferred_element_type=jnp.float32) + b0_ref[...]

    def gates_to_hc(g, c):
        # sigmoid(z) = 0.5*tanh(0.5*z) + 0.5; the 0.5 pre-scale is folded into
        # the i/f/o weight columns offline, so here it is just tanh, *0.5, +0.5.
        i_g = 0.5 * jnp.tanh(g[:, 0 * HP:1 * HP]) + 0.5
        f_g = 0.5 * jnp.tanh(g[:, 1 * HP:2 * HP]) + 0.5
        g_g = jnp.tanh(g[:, 2 * HP:3 * HP])
        o_g = 0.5 * jnp.tanh(g[:, 3 * HP:4 * HP]) + 0.5
        c_new = f_g * c + i_g * g_g
        return o_g * jnp.tanh(c_new), c_new

    zeros = jnp.zeros((B, HP), jnp.float32)

    # ---- pass 1: layer-0 recurrence (single stationary RHS whh0) ----
    h0, c0 = zeros, zeros
    for t in range(T):
        g0 = xproj0[t * B:(t + 1) * B] + jnp.dot(
            h0.astype(jnp.bfloat16), whh0, preferred_element_type=jnp.float32)
        h0, c0 = gates_to_hc(g0, c0)
        h0_all_ref[t * B:(t + 1) * B, :] = h0.astype(jnp.bfloat16)

    # ---- layer-1 input projection: ONE batched matmul over all timesteps ----
    xproj1 = jnp.dot(h0_all_ref[...], wih1,
                     preferred_element_type=jnp.float32) + b1_ref[...]   # (TB, 4HP)

    # ---- pass 2: layer-1 recurrence (single stationary RHS whh1, K=HP) ----
    h1, c1 = zeros, zeros
    for t in range(T):
        g1 = xproj1[t * B:(t + 1) * B] + jnp.dot(
            h1.astype(jnp.bfloat16), whh1, preferred_element_type=jnp.float32)
        h1, c1 = gates_to_hc(g1, c1)

    # ---- final FC on last timestep's top-layer hidden state ----
    wfc = wfc_ref[...]                                      # (O, HP)
    bfc = bfc_ref[...]                                      # (1, O)
    if O == 1:
        # VPU multiply + cross-lane reduce instead of an N=1 MXU matmul
        out = jnp.sum(h1 * wfc, axis=-1, keepdims=True) + bfc
    else:
        # TODO(synk): if O ever exceeds 1, repack wfc as (HP, O_padded) so the
        # MXU gets a non-transposed RHS.
        out = lax.dot_general(h1, wfc, (((1,), (1,)), ((), ())),
                              preferred_element_type=jnp.float32) + bfc
    out_ref[...] = out.astype(out_ref.dtype)


# PyTorch gate order is [i, f, g, o]; fold sigmoid's 0.5 pre-scale into i/f/o.
_GATE_SCALE = (0.5, 0.5, 1.0, 0.5)


def _pad_gated(w, H, HP, scale_gates):
    """Pad each of the 4 gate blocks of the last dim from H to HP lanes,
    optionally pre-scaling the i/f/o blocks by 0.5 (sigmoid fold)."""
    rows = w.shape[0]
    w4 = w.reshape(rows, 4, H)
    if scale_gates:
        w4 = w4 * jnp.asarray(_GATE_SCALE, jnp.float32).reshape(1, 4, 1)
    w4 = jnp.pad(w4, ((0, 0), (0, 0), (0, HP - H)))
    return w4.reshape(rows, 4 * HP)


def pack_params(params):
    """One-time weight packing (pad/fuse/scale/cast). Call once, reuse per forward."""
    H = params["whh0_t"].shape[0]
    HP = ((H + 127) // 128) * 128            # lane-aligned per-gate width

    wih0_p = _pad_gated(params["wih0_t"], H, HP, True)                   # (I, 4HP) f32
    whh0_p = jnp.pad(_pad_gated(params["whh0_t"], H, HP, True),
                     ((0, HP - H), (0, 0))).astype(jnp.bfloat16)         # (HP, 4HP)
    b0_p = _pad_gated(params["b0"], H, HP, True)                         # (1, 4HP) f32
    wih1_p = jnp.pad(_pad_gated(params["wih1_t"], H, HP, True),
                     ((0, HP - H), (0, 0))).astype(jnp.bfloat16)         # (HP, 4HP)
    whh1_p = jnp.pad(_pad_gated(params["whh1_t"], H, HP, True),
                     ((0, HP - H), (0, 0))).astype(jnp.bfloat16)         # (HP, 4HP)
    b1_p = _pad_gated(params["b1"], H, HP, True)                         # (1, 4HP) f32
    wfc_p = jnp.pad(params["wfc_t"].T, ((0, 0), (0, HP - H)))            # (O, HP) f32
    bfc = params["bfc"]                                                  # (1, O) f32

    packed = dict(wih0=wih0_p, whh0=whh0_p, b0=b0_p,
                  wih1=wih1_p, whh1=whh1_p, b1=b1_p,
                  wfc=wfc_p, bfc=bfc)
    return jax.tree_util.tree_map(jax.block_until_ready, packed)


def lstm_time_series_forward(x, packed):
    """x: (B, T, I) batch_first, float32. `packed` from pack_params(). Returns (B, O)."""
    B, T, I = x.shape
    HP = packed["whh0"].shape[0]
    O = packed["wfc"].shape[0]

    # time-major, flattened to (T*B, I) so per-step slices are static row blocks
    x_2d = jnp.transpose(x, (1, 0, 2)).reshape(T * B, I).astype(jnp.float32)

    vmem = pl.BlockSpec(memory_space=pltpu.MemorySpace.VMEM)
    args = (x_2d, packed["wih0"], packed["whh0"], packed["b0"],
            packed["wih1"], packed["whh1"], packed["b1"],
            packed["wfc"], packed["bfc"])

    return pl.pallas_call(
        _lstm_kernel,
        out_shape=jax.ShapeDtypeStruct((B, O), jnp.float32),
        in_specs=[vmem] * len(args),
        out_specs=vmem,
        scratch_shapes=[pltpu.VMEM((T * B, HP), jnp.bfloat16)],
    )(*args)


def init_params(key, input_size=1, hidden_size=50, output_size=1):
    """Deterministic init matching PyTorch default shapes (uniform +-1/sqrt(H))."""
    H, I, O = hidden_size, input_size, output_size
    k = 1.0 / jnp.sqrt(jnp.float32(H))
    keys = jax.random.split(key, 10)
    u = lambda kk, shape: jax.random.uniform(kk, shape, jnp.float32, -k, k)

    # torch layouts: weight_ih_l0 (4H, I), weight_hh_l0 (4H, H), biases (4H,)
    w_ih0 = u(keys[0], (4 * H, I))
    w_hh0 = u(keys[1], (4 * H, H))
    b_ih0 = u(keys[2], (4 * H,))
    b_hh0 = u(keys[3], (4 * H,))
    w_ih1 = u(keys[4], (4 * H, H))
    w_hh1 = u(keys[5], (4 * H, H))
    b_ih1 = u(keys[6], (4 * H,))
    b_hh1 = u(keys[7], (4 * H,))
    w_fc = u(keys[8], (O, H))
    b_fc = u(keys[9], (O,))

    return {
        "wih0_t": w_ih0.T,                       # (I, 4H)
        "whh0_t": w_hh0.T,                       # (H, 4H)
        "b0": (b_ih0 + b_hh0).reshape(1, 4 * H),
        "wih1_t": w_ih1.T,                       # (H, 4H)
        "whh1_t": w_hh1.T,                       # (H, 4H)
        "b1": (b_ih1 + b_hh1).reshape(1, 4 * H),
        "wfc_t": w_fc.T,                         # (H, O)
        "bfc": b_fc.reshape(1, O),
    }


def _reference_forward(x, params):
    """Pure-JAX f32 reference (same math, unpadded, no folds) for correctness."""
    B, T, I = x.shape
    H = params["whh0_t"].shape[0]

    def cell(x_t, h, c, wih, whh, b):
        g = x_t @ wih + h @ whh + b
        i = jax.nn.sigmoid(g[:, :H])
        f = jax.nn.sigmoid(g[:, H:2 * H])
        gg = jnp.tanh(g[:, 2 * H:3 * H])
        o = jax.nn.sigmoid(g[:, 3 * H:])
        c = f * c + i * gg
        return o * jnp.tanh(c), c

    h0 = c0 = h1 = c1 = jnp.zeros((B, H), jnp.float32)
    for t in range(T):
        h0, c0 = cell(x[:, t, :], h0, c0, params["wih0_t"], params["whh0_t"], params["b0"])
        h1, c1 = cell(h0, h1, c1, params["wih1_t"], params["whh1_t"], params["b1"])
    return h1 @ params["wfc_t"] + params["bfc"]


if __name__ == "__main__":
    B, T, I, H, O = 4, 8, 1, 50, 1

    key = jax.random.PRNGKey(0)
    kx, kp = jax.random.split(key)
    x = jax.random.normal(kx, (B, T, I), jnp.float32)
    params = init_params(kp, input_size=I, hidden_size=H, output_size=O)

    packed = pack_params(params)               # one-time packing, cached by caller

    out = lstm_time_series_forward(x, packed)
    out = jax.block_until_ready(out)

    ref = _reference_forward(x, params)
    assert out.shape == (B, O)
    # bf16 weights / bf16 LHS with f32 accumulation -> looser tolerance than pure f32
    assert jnp.allclose(out, ref, atol=2e-2, rtol=2e-2), (out, ref)

    print("KERNEL_OK")
</pallas_src>

<mosaic_0001>
module attributes {stable_mosaic.version = 11 : i64} {
  func.func @_lstm_kernel(%arg0: memref<32x1xf32, #tpu.memory_space<vmem>>, %arg1: memref<1x512xf32, #tpu.memory_space<vmem>>, %arg2: memref<128x512xbf16, #tpu.memory_space<vmem>>, %arg3: memref<1x512xf32, #tpu.memory_space<vmem>>, %arg4: memref<128x512xbf16, #tpu.memory_space<vmem>>, %arg5: memref<128x512xbf16, #tpu.memory_space<vmem>>, %arg6: memref<1x512xf32, #tpu.memory_space<vmem>>, %arg7: memref<1x128xf32, #tpu.memory_space<vmem>>, %arg8: memref<1x1xf32, #tpu.memory_space<vmem>>, %arg9: memref<4x1xf32, #tpu.memory_space<vmem>>, %arg10: memref<32x128xbf16, #tpu.memory_space<vmem>>) attributes {dimension_semantics = [], scalar_prefetch = 0 : i64, scratch_operands = 1 : i64, tpu.core_type = #tpu.core_type<tc>} {
    %c0 = arith.constant 0 : index
    %c0_0 = arith.constant 0 : index
    %0 = vector.load %arg2[%c0, %c0_0] : memref<128x512xbf16, #tpu.memory_space<vmem>>, vector<128x512xbf16>
    %c0_1 = arith.constant 0 : index
    %c0_2 = arith.constant 0 : index
    %1 = vector.load %arg4[%c0_1, %c0_2] : memref<128x512xbf16, #tpu.memory_space<vmem>>, vector<128x512xbf16>
    %c0_3 = arith.constant 0 : index
    %c0_4 = arith.constant 0 : index
    %2 = vector.load %arg5[%c0_3, %c0_4] : memref<128x512xbf16, #tpu.memory_space<vmem>>, vector<128x512xbf16>
    %c0_5 = arith.constant 0 : index
    %c0_6 = arith.constant 0 : index
    %3 = vector.load %arg0[%c0_5, %c0_6] : memref<32x1xf32, #tpu.memory_space<vmem>>, vector<32x1xf32>
    %c0_7 = arith.constant 0 : index
    %c0_8 = arith.constant 0 : index
    %4 = vector.load %arg1[%c0_7, %c0_8] : memref<1x512xf32, #tpu.memory_space<vmem>>, vector<1x512xf32>
    %5 = vector.broadcast %3 : vector<32x1xf32> to vector<32x512xf32>
    %6 = vector.broadcast %4 : vector<1x512xf32> to vector<32x512xf32>
    %7 = arith.mulf %5, %6 : vector<32x512xf32>
    %c0_9 = arith.constant 0 : index
    %c0_10 = arith.constant 0 : index
    %8 = vector.load %arg3[%c0_9, %c0_10] : memref<1x512xf32, #tpu.memory_space<vmem>>, vector<1x512xf32>
    %9 = vector.broadcast %8 : vector<1x512xf32> to vector<32x512xf32>
    %10 = arith.addf %7, %9 : vector<32x512xf32>
    %cst = arith.constant 0.000000e+00 : f32
    %11 = vector.broadcast %cst : f32 to vector<4x128xf32>
    %12 = vector.extract_strided_slice %10 {offsets = [0, 0], sizes = [4, 512], strides = [1, 1]} : vector<32x512xf32> to vector<4x512xf32>
    %13 = arith.truncf %11 : vector<4x128xf32> to vector<4x128xbf16>
    %cst_11 = arith.constant dense<0.000000e+00> : vector<4x512xf32>
    %14 = tpu.matmul %13, %0, %cst_11 {dimension_numbers = #tpu.dot_dimension_numbers<[1], [0], [0], [1], [0, 0, 1, 1], [], []>} : vector<4x128xbf16>, vector<128x512xbf16>, vector<4x512xf32> -> vector<4x512xf32>
    %15 = arith.addf %12, %14 : vector<4x512xf32>
    %16 = vector.extract_strided_slice %15 {offsets = [0, 0], sizes = [4, 128], strides = [1, 1]} : vector<4x512xf32> to vector<4x128xf32>
    %17 = math.tanh %16 : vector<4x128xf32>
    %cst_12 = arith.constant 5.000000e-01 : f32
    %18 = vector.broadcast %cst_12 : f32 to vector<4x128xf32>
    %19 = arith.mulf %18, %17 : vector<4x128xf32>
    %cst_13 = arith.constant 5.000000e-01 : f32
    %20 = vector.broadcast %cst_13 : f32 to vector<4x128xf32>
    %21 = arith.addf %19, %20 : vector<4x128xf32>
    %22 = vector.extract_strided_slice %15 {offsets = [0, 128], sizes = [4, 128], strides = [1, 1]} : vector<4x512xf32> to vector<4x128xf32>
    %23 = math.tanh %22 : vector<4x128xf32>
    %cst_14 = arith.constant 5.000000e-01 : f32
    %24 = vector.broadcast %cst_14 : f32 to vector<4x128xf32>
    %25 = arith.mulf %24, %23 : vector<4x128xf32>
    %cst_15 = arith.constant 5.000000e-01 : f32
    %26 = vector.broadcast %cst_15 : f32 to vector<4x128xf32>
    %27 = arith.addf %25, %26 : vector<4x128xf32>
    %28 = vector.extract_strided_slice %15 {offsets = [0, 256], sizes = [4, 128], strides = [1, 1]} : vector<4x512xf32> to vector<4x128xf32>
    %29 = math.tanh %28 : vector<4x128xf32>
    %30 = vector.extract_strided_slice %15 {offsets = [0, 384], sizes = [4, 128], strides = [1, 1]} : vector<4x512xf32> to vector<4x128xf32>
    %31 = math.tanh %30 : vector<4x128xf32>
    %cst_16 = arith.constant 5.000000e-01 : f32
    %32 = vector.broadcast %cst_16 : f32 to vector<4x128xf32>
    %33 = arith.mulf %32, %31 : vector<4x128xf32>
    %cst_17 = arith.constant 5.000000e-01 : f32
    %34 = vector.broadcast %cst_17 : f32 to vector<4x128xf32>
    %35 = arith.addf %33, %34 : vector<4x128xf32>
    %36 = arith.mulf %27, %11 : vector<4x128xf32>
    %37 = arith.mulf %21, %29 : vector<4x128xf32>
    %38 = arith.addf %36, %37 : vector<4x128xf32>
    %39 = math.tanh %38 : vector<4x128xf32>
    %40 = arith.mulf %35, %39 : vector<4x128xf32>
    %41 = arith.truncf %40 : vector<4x128xf32> to vector<4x128xbf16>
    %c0_18 = arith.constant 0 : index
    %c0_19 = arith.constant 0 : index
    %42 = vector.load %arg10[%c0_18, %c0_19] : memref<32x128xbf16, #tpu.memory_space<vmem>>, vector<4x128xbf16>
    tpu.vector_store %arg10[%c0_18, %c0_19], %41 {strides = array<i32>} : memref<32x128xbf16, #tpu.memory_space<vmem>>, vector<4x128xbf16>,
    %43 = vector.extract_strided_slice %10 {offsets = [4, 0], sizes = [4, 512], strides = [1, 1]} : vector<32x512xf32> to vector<4x512xf32>
    %44 = arith.truncf %40 : vector<4x128xf32> to vector<4x128xbf16>
    %cst_20 = arith.constant dense<0.000000e+00> : vector<4x512xf32>
    %45 = tpu.matmul %44, %0, %cst_20 {dimension_numbers = #tpu.dot_dimension_numbers<[1], [0], [0], [1], [0, 0, 1, 1], [], []>} : vector<4x128xbf16>, vector<128x512xbf16>, vector<4x512xf32> -> vector<4x512xf32>
    %46 = arith.addf %43, %45 : vector<4x512xf32>
    %47 = vector.extract_strided_slice %46 {offsets = [0, 0], sizes = [4, 128], strides = [1, 1]} : vector<4x512xf32> to vector<4x128xf32>
    %48 = math.tanh %47 : vector<4x128xf32>
    %cst_21 = arith.constant 5.000000e-01 : f32
    %49 = vector.broadcast %cst_21 : f32 to vector<4x128xf32>
    %50 = arith.mulf %49, %48 : vector<4x128xf32>
    %cst_22 = arith.constant 5.000000e-01 : f32
    %51 = vector.broadcast %cst_22 : f32 to vector<4x128xf32>
    %52 = arith.addf %50, %51 : vector<4x128xf32>
    %53 = vector.extract_strided_slice %46 {offsets = [0, 128], sizes = [4, 128], strides = [1, 1]} : vector<4x512xf32> to vector<4x128xf32>
    %54 = math.tanh %53 : vector<4x128xf32>
    %cst_23 = arith.constant 5.000000e-01 : f32
    %55 = vector.broadcast %cst_23 : f32 to vector<4x128xf32>
    %56 = arith.mulf %55, %54 : vector<4x128xf32>
    %cst_24 = arith.constant 5.000000e-01 : f32
    %57 = vector.broadcast %cst_24 : f32 to vector<4x128xf32>
    %58 = arith.addf %56, %57 : vector<4x128xf32>
    %59 = vector.extract_strided_slice %46 {offsets = [0, 256], sizes = [4, 128], strides = [1, 1]} : vector<4x512xf32> to vector<4x128xf32>
    %60 = math.tanh %59 : vector<4x128xf32>
    %61 = vector.extract_strided_slice %46 {offsets = [0, 384], sizes = [4, 128], strides = [1, 1]} : vector<4x512xf32> to vector<4x128xf32>
    %62 = math.tanh %61 : vector<4x128xf32>
    %cst_25 = arith.constant 5.000000e-01 : f32
    %63 = vector.broadcast %cst_25 : f32 to vector<4x128xf32>
    %64 = arith.mulf %63, %62 : vector<4x128xf32>
    %cst_26 = arith.constant 5.000000e-01 : f32
    %65 = vector.broadcast %cst_26 : f32 to vector<4x128xf32>
    %66 = arith.addf %64, %65 : vector<4x128xf32>
    %67 = arith.mulf %58, %38 : vector<4x128xf32>
    %68 = arith.mulf %52, %60 : vector<4x128xf32>
    %69 = arith.addf %67, %68 : vector<4x128xf32>
    %70 = math.tanh %69 : vector<4x128xf32>
    %71 = arith.mulf %66, %70 : vector<4x128xf32>
    %72 = arith.truncf %71 : vector<4x128xf32> to vector<4x128xbf16>
    %c4 = arith.constant 4 : index
    %c0_27 = arith.constant 0 : index
    %73 = vector.load %arg10[%c4, %c0_27] : memref<32x128xbf16, #tpu.memory_space<vmem>>, vector<4x128xbf16>
    tpu.vector_store %arg10[%c4, %c0_27], %72 {strides = array<i32>} : memref<32x128xbf16, #tpu.memory_space<vmem>>, vector<4x128xbf16>,
    %74 = vector.extract_strided_slice %10 {offsets = [8, 0], sizes = [4, 512], strides = [1, 1]} : vector<32x512xf32> to vector<4x512xf32>
    %75 = arith.truncf %71 : vector<4x128xf32> to vector<4x128xbf16>
    %cst_28 = arith.constant dense<0.000000e+00> : vector<4x512xf32>
    %76 = tpu.matmul %75, %0, %cst_28 {dimension_numbers = #tpu.dot_dimension_numbers<[1], [0], [0], [1], [0, 0, 1, 1], [], []>} : vector<4x128xbf16>, vector<128x512xbf16>, vector<4x512xf32> -> vector<4x512xf32>
    %77 = arith.addf %74, %76 : vector<4x512xf32>
    %78 = vector.extract_strided_slice %77 {offsets = [0, 0], sizes = [4, 128], strides = [1, 1]} : vector<4x512xf32> to vector<4x128xf32>
    %79 = math.tanh %78 : vector<4x128xf32>
    %cst_29 = arith.constant 5.000000e-01 : f32
    %80 = vector.broadcast %cst_29 : f32 to vector<4x128xf32>
    %81 = arith.mulf %80, %79 : vector<4x128xf32>
    %cst_30 = arith.constant 5.000000e-01 : f32
    %82 = vector.broadcast %cst_30 : f32 to vector<4x128xf32>
    %83 = arith.addf %81, %82 : vector<4x128xf32>
    %84 = vector.extract_strided_slice %77 {offsets = [0, 128], sizes = [4, 128], strides = [1, 1]} : vector<4x512xf32> to vector<4x128xf32>
    %85 = math.tanh %84 : vector<4x128xf32>
    %cst_31 = arith.constant 5.000000e-01 : f32
    %86 = vector.broadcast %cst_31 : f32 to vector<4x128xf32>
    %87 = arith.mulf %86, %85 : vector<4x128xf32>
    %cst_32 = arith.constant 5.000000e-01 : f32
    %88 = vector.broadcast %cst_32 : f32 to vector<4x128xf32>
    %89 = arith.addf %87, %88 : vector<4x128xf32>
    %90 = vector.extract_strided_slice %77 {offsets = [0, 256], sizes = [4, 128], strides = [1, 1]} : vector<4x512xf32> to vector<4x128xf32>
    %91 = math.tanh %90 : vector<4x128xf32>
    %92 = vector.extract_strided_slice %77 {offsets = [0, 384], sizes = [4, 128], strides = [1, 1]} : vector<4x512xf32> to vector<4x128xf32>
    %93 = math.tanh %92 : vector<4x128xf32>
    %cst_33 = arith.constant 5.000000e-01 : f32
    %94 = vector.broadcast %cst_33 : f32 to vector<4x128xf32>
    %95 = arith.mulf %94, %93 : vector<4x128xf32>
    %cst_34 = arith.constant 5.000000e-01 : f32
    %96 = vector.broadcast %cst_34 : f32 to vector<4x128xf32>
    %97 = arith.addf %95, %96 : vector<4x128xf32>
    %98 = arith.mulf %89, %69 : vector<4x128xf32>
    %99 = arith.mulf %83, %91 : vector<4x128xf32>
    %100 = arith.addf %98, %99 : vector<4x128xf32>
    %101 = math.tanh %100 : vector<4x128xf32>
    %102 = arith.mulf %97, %101 : vector<4x128xf32>
    %103 = arith.truncf %102 : vector<4x128xf32> to vector<4x128xbf16>
    %c8 = arith.constant 8 : index
    %c0_35 = arith.constant 0 : index
    %104 = vector.load %arg10[%c8, %c0_35] : memref<32x128xbf16, #tpu.memory_space<vmem>>, vector<4x128xbf16>
    tpu.vector_store %arg10[%c8, %c0_35], %103 {strides = array<i32>} : memref<32x128xbf16, #tpu.memory_space<vmem>>, vector<4x128xbf16>,
    %105 = vector.extract_strided_slice %10 {offsets = [12, 0], sizes = [4, 512], strides = [1, 1]} : vector<32x512xf32> to vector<4x512xf32>
    %106 = arith.truncf %102 : vector<4x128xf32> to vector<4x128xbf16>
    %cst_36 = arith.constant dense<0.000000e+00> : vector<4x512xf32>
    %107 = tpu.matmul %106, %0, %cst_36 {dimension_numbers = #tpu.dot_dimension_numbers<[1], [0], [0], [1], [0, 0, 1, 1], [], []>} : vector<4x128xbf16>, vector<128x512xbf16>, vector<4x512xf32> -> vector<4x512xf32>
    %108 = arith.addf %105, %107 : vector<4x512xf32>
    %109 = vector.extract_strided_slice %108 {offsets = [0, 0], sizes = [4, 128], strides = [1, 1]} : vector<4x512xf32> to vector<4x128xf32>
    %110 = math.tanh %109 : vector<4x128xf32>
    %cst_37 = arith.constant 5.000000e-01 : f32
    %111 = vector.broadcast %cst_37 : f32 to vector<4x128xf32>
    %112 = arith.mulf %111, %110 : vector<4x128xf32>
    %cst_38 = arith.constant 5.000000e-01 : f32
    %113 = vector.broadcast %cst_38 : f32 to vector<4x128xf32>
    %114 = arith.addf %112, %113 : vector<4x128xf32>
    %115 = vector.extract_strided_slice %108 {offsets = [0, 128], sizes = [4, 128], strides = [1, 1]} : vector<4x512xf32> to vector<4x128xf32>
    %116 = math.tanh %115 : vector<4x128xf32>
    %cst_39 = arith.constant 5.000000e-01 : f32
    %117 = vector.broadcast %cst_39 : f32 to vector<4x128xf32>
    %118 = arith.mulf %117, %116 : vector<4x128xf32>
    %cst_40 = arith.constant 5.000000e-01 : f32
    %119 = vector.broadcast %cst_40 : f32 to vector<4x128xf32>
    %120 = arith.addf %118, %119 : vector<4x128xf32>
    %121 = vector.extract_strided_slice %108 {offsets = [0, 256], sizes = [4, 128], strides = [1, 1]} : vector<4x512xf32> to vector<4x128xf32>
    %122 = math.tanh %121 : vector<4x128xf32>
    %123 = vector.extract_strided_slice %108 {offsets = [0, 384], sizes = [4, 128], strides = [1, 1]} : vector<4x512xf32> to vector<4x128xf32>
    %124 = math.tanh %123 : vector<4x128xf32>
    %cst_41 = arith.constant 5.000000e-01 : f32
    %125 = vector.broadcast %cst_41 : f32 to vector<4x128xf32>
    %126 = arith.mulf %125, %124 : vector<4x128xf32>
    %cst_42 = arith.constant 5.000000e-01 : f32
    %127 = vector.broadcast %cst_42 : f32 to vector<4x128xf32>
    %128 = arith.addf %126, %127 : vector<4x128xf32>
    %129 = arith.mulf %120, %100 : vector<4x128xf32>
    %130 = arith.mulf %114, %122 : vector<4x128xf32>
    %131 = arith.addf %129, %130 : vector<4x128xf32>
    %132 = math.tanh %131 : vector<4x128xf32>
    %133 = arith.mulf %128, %132 : vector<4x128xf32>
    %134 = arith.truncf %133 : vector<4x128xf32> to vector<4x128xbf16>
    %c12 = arith.constant 12 : index
    %c0_43 = arith.constant 0 : index
    %135 = vector.load %arg10[%c12, %c0_43] : memref<32x128xbf16, #tpu.memory_space<vmem>>, vector<4x128xbf16>
    tpu.vector_store %arg10[%c12, %c0_43], %134 {strides = array<i32>} : memref<32x128xbf16, #tpu.memory_space<vmem>>, vector<4x128xbf16>,
    %136 = vector.extract_strided_slice %10 {offsets = [16, 0], sizes = [4, 512], strides = [1, 1]} : vector<32x512xf32> to vector<4x512xf32>
    %137 = arith.truncf %133 : vector<4x128xf32> to vector<4x128xbf16>
    %cst_44 = arith.constant dense<0.000000e+00> : vector<4x512xf32>
    %138 = tpu.matmul %137, %0, %cst_44 {dimension_numbers = #tpu.dot_dimension_numbers<[1], [0], [0], [1], [0, 0, 1, 1], [], []>} : vector<4x128xbf16>, vector<128x512xbf16>, vector<4x512xf32> -> vector<4x512xf32>
    %139 = arith.addf %136, %138 : vector<4x512xf32>
    %140 = vector.extract_strided_slice %139 {offsets = [0, 0], sizes = [4, 128], strides = [1, 1]} : vector<4x512xf32> to vector<4x128xf32>
    %141 = math.tanh %140 : vector<4x128xf32>
    %cst_45 = arith.constant 5.000000e-01 : f32
    %142 = vector.broadcast %cst_45 : f32 to vector<4x128xf32>
    %143 = arith.mulf %142, %141 : vector<4x128xf32>
    %cst_46 = arith.constant 5.000000e-01 : f32
    %144 = vector.broadcast %cst_46 : f32 to vector<4x128xf32>
    %145 = arith.addf %143, %144 : vector<4x128xf32>
    %146 = vector.extract_strided_slice %139 {offsets = [0, 128], sizes = [4, 128], strides = [1, 1]} : vector<4x512xf32> to vector<4x128xf32>
    %147 = math.tanh %146 : vector<4x128xf32>
    %cst_47 = arith.constant 5.000000e-01 : f32
    %148 = vector.broadcast %cst_47 : f32 to vector<4x128xf32>
    %149 = arith.mulf %148, %147 : vector<4x128xf32>
    %cst_48 = arith.constant 5.000000e-01 : f32
    %150 = vector.broadcast %cst_48 : f32 to vector<4x128xf32>
    %151 = arith.addf %149, %150 : vector<4x128xf32>
    %152 = vector.extract_strided_slice %139 {offsets = [0, 256], sizes = [4, 128], strides = [1, 1]} : vector<4x512xf32> to vector<4x128xf32>
    %153 = math.tanh %152 : vector<4x128xf32>
    %154 = vector.extract_strided_slice %139 {offsets = [0, 384], sizes = [4, 128], strides = [1, 1]} : vector<4x512xf32> to vector<4x128xf32>
    %155 = math.tanh %154 : vector<4x128xf32>
    %cst_49 = arith.constant 5.000000e-01 : f32
    %156 = vector.broadcast %cst_49 : f32 to vector<4x128xf32>
    %157 = arith.mulf %156, %155 : vector<4x128xf32>
    %cst_50 = arith.constant 5.000000e-01 : f32
    %158 = vector.broadcast %cst_50 : f32 to vector<4x128xf32>
    %159 = arith.addf %157, %158 : vector<4x128xf32>
    %160 = arith.mulf %151, %131 : vector<4x128xf32>
    %161 = arith.mulf %145, %153 : vector<4x128xf32>
    %162 = arith.addf %160, %161 : vector<4x128xf32>
    %163 = math.tanh %162 : vector<4x128xf32>
    %164 = arith.mulf %159, %163 : vector<4x128xf32>
    %165 = arith.truncf %164 : vector<4x128xf32> to vector<4x128xbf16>
    %c16 = arith.constant 16 : index
    %c0_51 = arith.constant 0 : index
    %166 = vector.load %arg10[%c16, %c0_51] : memref<32x128xbf16, #tpu.memory_space<vmem>>, vector<4x128xbf16>
    tpu.vector_store %arg10[%c16, %c0_51], %165 {strides = array<i32>} : memref<32x128xbf16, #tpu.memory_space<vmem>>, vector<4x128xbf16>,
    %167 = vector.extract_strided_slice %10 {offsets = [20, 0], sizes = [4, 512], strides = [1, 1]} : vector<32x512xf32> to vector<4x512xf32>
    %168 = arith.truncf %164 : vector<4x128xf32> to vector<4x128xbf16>
    %cst_52 = arith.constant dense<0.000000e+00> : vector<4x512xf32>
    %169 = tpu.matmul %168, %0, %cst_52 {dimension_numbers = #tpu.dot_dimension_numbers<[1], [0], [0], [1], [0, 0, 1, 1], [], []>} : vector<4x128xbf16>, vector<128x512xbf16>, vector<4x512xf32> -> vector<4x512xf32>
    %170 = arith.addf %167, %169 : vector<4x512xf32>
    %171 = vector.extract_strided_slice %170 {offsets = [0, 0], sizes = [4, 128], strides = [1, 1]} : vector<4x512xf32> to vector<4x128xf32>
    %172 = math.tanh %171 : vector<4x128xf32>
    %cst_53 = arith.constant 5.000000e-01 : f32
    %173 = vector.broadcast %cst_53 : f32 to vector<4x128xf32>
    %174 = arith.mulf %173, %172 : vector<4x128xf32>
    %cst_54 = arith.constant 5.000000e-01 : f32
    %175 = vector.broadcast %cst_54 : f32 to vector<4x128xf32>
    %176 = arith.addf %174, %175 : vector<4x128xf32>
    %177 = vector.extract_strided_slice %170 {offsets = [0, 128], sizes = [4, 128], strides = [1, 1]} : vector<4x512xf32> to vector<4x128xf32>
    %178 = math.tanh %177 : vector<4x128xf32>
    %cst_55 = arith.constant 5.000000e-01 : f32
    %179 = vector.broadcast %cst_55 : f32 to vector<4x128xf32>
    %180 = arith.mulf %179, %178 : vector<4x128xf32>
    %cst_56 = arith.constant 5.000000e-01 : f32
    %181 = vector.broadcast %cst_56 : f32 to vector<4x128xf32>
    %182 = arith.addf %180, %181 : vector<4x128xf32>
    %183 = vector.extract_strided_slice %170 {offsets = [0, 256], sizes = [4, 128], strides = [1, 1]} : vector<4x512xf32> to vector<4x128xf32>
    %184 = math.tanh %183 : vector<4x128xf32>
    %185 = vector.extract_strided_slice %170 {offsets = [0, 384], sizes = [4, 128], strides = [1, 1]} : vector<4x512xf32> to vector<4x128xf32>
    %186 = math.tanh %185 : vector<4x128xf32>
    %cst_57 = arith.constant 5.000000e-01 : f32
    %187 = vector.broadcast %cst_57 : f32 to vector<4x128xf32>
    %188 = arith.mulf %187, %186 : vector<4x128xf32>
    %cst_58 = arith.constant 5.000000e-01 : f32
    %189 = vector.broadcast %cst_58 : f32 to vector<4x128xf32>
    %190 = arith.addf %188, %189 : vector<4x128xf32>
    %191 = arith.mulf %182, %162 : vector<4x128xf32>
    %192 = arith.mulf %176, %184 : vector<4x128xf32>
    %193 = arith.addf %191, %192 : vector<4x128xf32>
    %194 = math.tanh %193 : vector<4x128xf32>
    %195 = arith.mulf %190, %194 : vector<4x128xf32>
    %196 = arith.truncf %195 : vector<4x128xf32> to vector<4x128xbf16>
    %c20 = arith.constant 20 : index
    %c0_59 = arith.constant 0 : index
    %197 = vector.load %arg10[%c20, %c0_59] : memref<32x128xbf16, #tpu.memory_space<vmem>>, vector<4x128xbf16>
    tpu.vector_store %arg10[%c20, %c0_59], %196 {strides = array<i32>} : memref<32x128xbf16, #tpu.memory_space<vmem>>, vector<4x128xbf16>,
    %198 = vector.extract_strided_slice %10 {offsets = [24, 0], sizes = [4, 512], strides = [1, 1]} : vector<32x512xf32> to vector<4x512xf32>
    %199 = arith.truncf %195 : vector<4x128xf32> to vector<4x128xbf16>
    %cst_60 = arith.constant dense<0.000000e+00> : vector<4x512xf32>
    %200 = tpu.matmul %199, %0, %cst_60 {dimension_numbers = #tpu.dot_dimension_numbers<[1], [0], [0], [1], [0, 0, 1, 1], [], []>} : vector<4x128xbf16>, vector<128x512xbf16>, vector<4x512xf32> -> vector<4x512xf32>
    %201 = arith.addf %198, %200 : vector<4x512xf32>
    %202 = vector.extract_strided_slice %201 {offsets = [0, 0], sizes = [4, 128], strides = [1, 1]} : vector<4x512xf32> to vector<4x128xf32>
    %203 = math.tanh %202 : vector<4x128xf32>
    %cst_61 = arith.constant 5.000000e-01 : f32
    %204 = vector.broadcast %cst_61 : f32 to vector<4x128xf32>
    %205 = arith.mulf %204, %203 : vector<4x128xf32>
    %cst_62 = arith.constant 5.000000e-01 : f32
    %206 = vector.broadcast %cst_62 : f32 to vector<4x128xf32>
    %207 = arith.addf %205, %206 : vector<4x128xf32>
    %208 = vector.extract_strided_slice %201 {offsets = [0, 128], sizes = [4, 128], strides = [1, 1]} : vector<4x512xf32> to vector<4x128xf32>
    %209 = math.tanh %208 : vector<4x128xf32>
    %cst_63 = arith.constant 5.000000e-01 : f32
    %210 = vector.broadcast %cst_63 : f32 to vector<4x128xf32>
    %211 = arith.mulf %210, %209 : vector<4x128xf32>
    %cst_64 = arith.constant 5.000000e-01 : f32
    %212 = vector.broadcast %cst_64 : f32 to vector<4x128xf32>
    %213 = arith.addf %211, %212 : vector<4x128xf32>
    %214 = vector.extract_strided_slice %201 {offsets = [0, 256], sizes = [4, 128], strides = [1, 1]} : vector<4x512xf32> to vector<4x128xf32>
    %215 = math.tanh %214 : vector<4x128xf32>
    %216 = vector.extract_strided_slice %201 {offsets = [0, 384], sizes = [4, 128], strides = [1, 1]} : vector<4x512xf32> to vector<4x128xf32>
    %217 = math.tanh %216 : vector<4x128xf32>
    %cst_65 = arith.constant 5.000000e-01 : f32
    %218 = vector.broadcast %cst_65 : f32 to vector<4x128xf32>
    %219 = arith.mulf %218, %217 : vector<4x128xf32>
    %cst_66 = arith.constant 5.000000e-01 : f32
    %220 = vector.broadcast %cst_66 : f32 to vector<4x128xf32>
    %221 = arith.addf %219, %220 : vector<4x128xf32>
    %222 = arith.mulf %213, %193 : vector<4x128xf32>
    %223 = arith.mulf %207, %215 : vector<4x128xf32>
    %224 = arith.addf %222, %223 : vector<4x128xf32>
    %225 = math.tanh %224 : vector<4x128xf32>
    %226 = arith.mulf %221, %225 : vector<4x128xf32>
    %227 = arith.truncf %226 : vector<4x128xf32> to vector<4x128xbf16>
    %c24 = arith.constant 24 : index
    %c0_67 = arith.constant 0 : index
    %228 = vector.load %arg10[%c24, %c0_67] : memref<32x128xbf16, #tpu.memory_space<vmem>>, vector<4x128xbf16>
    tpu.vector_store %arg10[%c24, %c0_67], %227 {strides = array<i32>} : memref<32x128xbf16, #tpu.memory_space<vmem>>, vector<4x128xbf16>,
    %229 = vector.extract_strided_slice %10 {offsets = [28, 0], sizes = [4, 512], strides = [1, 1]} : vector<32x512xf32> to vector<4x512xf32>
    %230 = arith.truncf %226 : vector<4x128xf32> to vector<4x128xbf16>
    %cst_68 = arith.constant dense<0.000000e+00> : vector<4x512xf32>
    %231 = tpu.matmul %230, %0, %cst_68 {dimension_numbers = #tpu.dot_dimension_numbers<[1], [0], [0], [1], [0, 0, 1, 1], [], []>} : vector<4x128xbf16>, vector<128x512xbf16>, vector<4x512xf32> -> vector<4x512xf32>
    %232 = arith.addf %229, %231 : vector<4x512xf32>
    %233 = vector.extract_strided_slice %232 {offsets = [0, 0], sizes = [4, 128], strides = [1, 1]} : vector<4x512xf32> to vector<4x128xf32>
    %234 = math.tanh %233 : vector<4x128xf32>
    %cst_69 = arith.constant 5.000000e-01 : f32
    %235 = vector.broadcast %cst_69 : f32 to vector<4x128xf32>
    %236 = arith.mulf %235, %234 : vector<4x128xf32>
    %cst_70 = arith.constant 5.000000e-01 : f32
    %237 = vector.broadcast %cst_70 : f32 to vector<4x128xf32>
    %238 = arith.addf %236, %237 : vector<4x128xf32>
    %239 = vector.extract_strided_slice %232 {offsets = [0, 128], sizes = [4, 128], strides = [1, 1]} : vector<4x512xf32> to vector<4x128xf32>
    %240 = math.tanh %239 : vector<4x128xf32>
    %cst_71 = arith.constant 5.000000e-01 : f32
    %241 = vector.broadcast %cst_71 : f32 to vector<4x128xf32>
    %242 = arith.mulf %241, %240 : vector<4x128xf32>
    %cst_72 = arith.constant 5.000000e-01 : f32
    %243 = vector.broadcast %cst_72 : f32 to vector<4x128xf32>
    %244 = arith.addf %242, %243 : vector<4x128xf32>
    %245 = vector.extract_strided_slice %232 {offsets = [0, 256], sizes = [4, 128], strides = [1, 1]} : vector<4x512xf32> to vector<4x128xf32>
    %246 = math.tanh %245 : vector<4x128xf32>
    %247 = vector.extract_strided_slice %232 {offsets = [0, 384], sizes = [4, 128], strides = [1, 1]} : vector<4x512xf32> to vector<4x128xf32>
    %248 = math.tanh %247 : vector<4x128xf32>
    %cst_73 = arith.constant 5.000000e-01 : f32
    %249 = vector.broadcast %cst_73 : f32 to vector<4x128xf32>
    %250 = arith.mulf %249, %248 : vector<4x128xf32>
    %cst_74 = arith.constant 5.000000e-01 : f32
    %251 = vector.broadcast %cst_74 : f32 to vector<4x128xf32>
    %252 = arith.addf %250, %251 : vector<4x128xf32>
    %253 = arith.mulf %244, %224 : vector<4x128xf32>
    %254 = arith.mulf %238, %246 : vector<4x128xf32>
    %255 = arith.addf %253, %254 : vector<4x128xf32>
    %256 = math.tanh %255 : vector<4x128xf32>
    %257 = arith.mulf %252, %256 : vector<4x128xf32>
    %258 = arith.truncf %257 : vector<4x128xf32> to vector<4x128xbf16>
    %c28 = arith.constant 28 : index
    %c0_75 = arith.constant 0 : index
    %259 = vector.load %arg10[%c28, %c0_75] : memref<32x128xbf16, #tpu.memory_space<vmem>>, vector<4x128xbf16>
    tpu.vector_store %arg10[%c28, %c0_75], %258 {strides = array<i32>} : memref<32x128xbf16, #tpu.memory_space<vmem>>, vector<4x128xbf16>,
    %c0_76 = arith.constant 0 : index
    %c0_77 = arith.constant 0 : index
    %260 = vector.load %arg10[%c0_76, %c0_77] : memref<32x128xbf16, #tpu.memory_space<vmem>>, vector<32x128xbf16>
    %cst_78 = arith.constant dense<0.000000e+00> : vector<32x512xf32>
    %261 = tpu.matmul %260, %1, %cst_78 {dimension_numbers = #tpu.dot_dimension_numbers<[1], [0], [0], [1], [0, 0, 1, 1], [], []>} : vector<32x128xbf16>, vector<128x512xbf16>, vector<32x512xf32> -> vector<32x512xf32>
    %c0_79 = arith.constant 0 : index
    %c0_80 = arith.constant 0 : index
    %262 = vector.load %arg6[%c0_79, %c0_80] : memref<1x512xf32, #tpu.memory_space<vmem>>, vector<1x512xf32>
    %263 = vector.broadcast %262 : vector<1x512xf32> to vector<32x512xf32>
    %264 = arith.addf %261, %263 : vector<32x512xf32>
    %265 = vector.extract_strided_slice %264 {offsets = [0, 0], sizes = [4, 512], strides = [1, 1]} : vector<32x512xf32> to vector<4x512xf32>
    %266 = arith.truncf %11 : vector<4x128xf32> to vector<4x128xbf16>
    %cst_81 = arith.constant dense<0.000000e+00> : vector<4x512xf32>
    %267 = tpu.matmul %266, %2, %cst_81 {dimension_numbers = #tpu.dot_dimension_numbers<[1], [0], [0], [1], [0, 0, 1, 1], [], []>} : vector<4x128xbf16>, vector<128x512xbf16>, vector<4x512xf32> -> vector<4x512xf32>
    %268 = arith.addf %265, %267 : vector<4x512xf32>
    %269 = vector.extract_strided_slice %268 {offsets = [0, 0], sizes = [4, 128], strides = [1, 1]} : vector<4x512xf32> to vector<4x128xf32>
    %270 = math.tanh %269 : vector<4x128xf32>
    %cst_82 = arith.constant 5.000000e-01 : f32
    %271 = vector.broadcast %cst_82 : f32 to vector<4x128xf32>
    %272 = arith.mulf %271, %270 : vector<4x128xf32>
    %cst_83 = arith.constant 5.000000e-01 : f32
    %273 = vector.broadcast %cst_83 : f32 to vector<4x128xf32>
    %274 = arith.addf %272, %273 : vector<4x128xf32>
    %275 = vector.extract_strided_slice %268 {offsets = [0, 128], sizes = [4, 128], strides = [1, 1]} : vector<4x512xf32> to vector<4x128xf32>
    %276 = math.tanh %275 : vector<4x128xf32>
    %cst_84 = arith.constant 5.000000e-01 : f32
    %277 = vector.broadcast %cst_84 : f32 to vector<4x128xf32>
    %278 = arith.mulf %277, %276 : vector<4x128xf32>
    %cst_85 = arith.constant 5.000000e-01 : f32
    %279 = vector.broadcast %cst_85 : f32 to vector<4x128xf32>
    %280 = arith.addf %278, %279 : vector<4x128xf32>
    %281 = vector.extract_strided_slice %268 {offsets = [0, 256], sizes = [4, 128], strides = [1, 1]} : vector<4x512xf32> to vector<4x128xf32>
    %282 = math.tanh %281 : vector<4x128xf32>
    %283 = vector.extract_strided_slice %268 {offsets = [0, 384], sizes = [4, 128], strides = [1, 1]} : vector<4x512xf32> to vector<4x128xf32>
    %284 = math.tanh %283 : vector<4x128xf32>
    %cst_86 = arith.constant 5.000000e-01 : f32
    %285 = vector.broadcast %cst_86 : f32 to vector<4x128xf32>
    %286 = arith.mulf %285, %284 : vector<4x128xf32>
    %cst_87 = arith.constant 5.000000e-01 : f32
    %287 = vector.broadcast %cst_87 : f32 to vector<4x128xf32>
    %288 = arith.addf %286, %287 : vector<4x128xf32>
    %289 = arith.mulf %280, %11 : vector<4x128xf32>
    %290 = arith.mulf %274, %282 : vector<4x128xf32>
    %291 = arith.addf %289, %290 : vector<4x128xf32>
    %292 = math.tanh %291 : vector<4x128xf32>
    %293 = arith.mulf %288, %292 : vector<4x128xf32>
    %294 = vector.extract_strided_slice %264 {offsets = [4, 0], sizes = [4, 512], strides = [1, 1]} : vector<32x512xf32> to vector<4x512xf32>
    %295 = arith.truncf %293 : vector<4x128xf32> to vector<4x128xbf16>
    %cst_88 = arith.constant dense<0.000000e+00> : vector<4x512xf32>
    %296 = tpu.matmul %295, %2, %cst_88 {dimension_numbers = #tpu.dot_dimension_numbers<[1], [0], [0], [1], [0, 0, 1, 1], [], []>} : vector<4x128xbf16>, vector<128x512xbf16>, vector<4x512xf32> -> vector<4x512xf32>
    %297 = arith.addf %294, %296 : vector<4x512xf32>
    %298 = vector.extract_strided_slice %297 {offsets = [0, 0], sizes = [4, 128], strides = [1, 1]} : vector<4x512xf32> to vector<4x128xf32>
    %299 = math.tanh %298 : vector<4x128xf32>
    %cst_89 = arith.constant 5.000000e-01 : f32
    %300 = vector.broadcast %cst_89 : f32 to vector<4x128xf32>
    %301 = arith.mulf %300, %299 : vector<4x128xf32>
    %cst_90 = arith.constant 5.000000e-01 : f32
    %302 = vector.broadcast %cst_90 : f32 to vector<4x128xf32>
    %303 = arith.addf %301, %302 : vector<4x128xf32>
    %304 = vector.extract_strided_slice %297 {offsets = [0, 128], sizes = [4, 128], strides = [1, 1]} : vector<4x512xf32> to vector<4x128xf32>
    %305 = math.tanh %304 : vector<4x128xf32>
    %cst_91 = arith.constant 5.000000e-01 : f32
    %306 = vector.broadcast %cst_91 : f32 to vector<4x128xf32>
    %307 = arith.mulf %306, %305 : vector<4x128xf32>
    %cst_92 = arith.constant 5.000000e-01 : f32
    %308 = vector.broadcast %cst_92 : f32 to vector<4x128xf32>
    %309 = arith.addf %307, %308 : vector<4x128xf32>
    %310 = vector.extract_strided_slice %297 {offsets = [0, 256], sizes = [4, 128], strides = [1, 1]} : vector<4x512xf32> to vector<4x128xf32>
    %311 = math.tanh %310 : vector<4x128xf32>
    %312 = vector.extract_strided_slice %297 {offsets = [0, 384], sizes = [4, 128], strides = [1, 1]} : vector<4x512xf32> to vector<4x128xf32>
    %313 = math.tanh %312 : vector<4x128xf32>
    %cst_93 = arith.constant 5.000000e-01 : f32
    %314 = vector.broadcast %cst_93 : f32 to vector<4x128xf32>
    %315 = arith.mulf %314, %313 : vector<4x128xf32>
    %cst_94 = arith.constant 5.000000e-01 : f32
    %316 = vector.broadcast %cst_94 : f32 to vector<4x128xf32>
    %317 = arith.addf %315, %316 : vector<4x128xf32>
    %318 = arith.mulf %309, %291 : vector<4x128xf32>
    %319 = arith.mulf %303, %311 : vector<4x128xf32>
    %320 = arith.addf %318, %319 : vector<4x128xf32>
    %321 = math.tanh %320 : vector<4x128xf32>
    %322 = arith.mulf %317, %321 : vector<4x128xf32>
    %323 = vector.extract_strided_slice %264 {offsets = [8, 0], sizes = [4, 512], strides = [1, 1]} : vector<32x512xf32> to vector<4x512xf32>
    %324 = arith.truncf %322 : vector<4x128xf32> to vector<4x128xbf16>
    %cst_95 = arith.constant dense<0.000000e+00> : vector<4x512xf32>
    %325 = tpu.matmul %324, %2, %cst_95 {dimension_numbers = #tpu.dot_dimension_numbers<[1], [0], [0], [1], [0, 0, 1, 1], [], []>} : vector<4x128xbf16>, vector<128x512xbf16>, vector<4x512xf32> -> vector<4x512xf32>
    %326 = arith.addf %323, %325 : vector<4x512xf32>
    %327 = vector.extract_strided_slice %326 {offsets = [0, 0], sizes = [4, 128], strides = [1, 1]} : vector<4x512xf32> to vector<4x128xf32>
    %328 = math.tanh %327 : vector<4x128xf32>
    %cst_96 = arith.constant 5.000000e-01 : f32
    %329 = vector.broadcast %cst_96 : f32 to vector<4x128xf32>
    %330 = arith.mulf %329, %328 : vector<4x128xf32>
    %cst_97 = arith.constant 5.000000e-01 : f32
    %331 = vector.broadcast %cst_97 : f32 to vector<4x128xf32>
    %332 = arith.addf %330, %331 : vector<4x128xf32>
    %333 = vector.extract_strided_slice %326 {offsets = [0, 128], sizes = [4, 128], strides = [1, 1]} : vector<4x512xf32> to vector<4x128xf32>
    %334 = math.tanh %333 : vector<4x128xf32>
    %cst_98 = arith.constant 5.000000e-01 : f32
    %335 = vector.broadcast %cst_98 : f32 to vector<4x128xf32>
    %336 = arith.mulf %335, %334 : vector<4x128xf32>
    %cst_99 = arith.constant 5.000000e-01 : f32
    %337 = vector.broadcast %cst_99 : f32 to vector<4x128xf32>
    %338 = arith.addf %336, %337 : vector<4x128xf32>
    %339 = vector.extract_strided_slice %326 {offsets = [0, 256], sizes = [4, 128], strides = [1, 1]} : vector<4x512xf32> to vector<4x128xf32>
    %340 = math.tanh %339 : vector<4x128xf32>
    %341 = vector.extract_strided_slice %326 {offsets = [0, 384], sizes = [4, 128], strides = [1, 1]} : vector<4x512xf32> to vector<4x128xf32>
    %342 = math.tanh %341 : vector<4x128xf32>
    %cst_100 = arith.constant 5.000000e-01 : f32
    %343 = vector.broadcast %cst_100 : f32 to vector<4x128xf32>
    %344 = arith.mulf %343, %342 : vector<4x128xf32>
    %cst_101 = arith.constant 5.000000e-01 : f32
    %345 = vector.broadcast %cst_101 : f32 to vector<4x128xf32>
    %346 = arith.addf %344, %345 : vector<4x128xf32>
    %347 = arith.mulf %338, %320 : vector<4x128xf32>
    %348 = arith.mulf %332, %340 : vector<4x128xf32>
    %349 = arith.addf %347, %348 : vector<4x128xf32>
    %350 = math.tanh %349 : vector<4x128xf32>
    %351 = arith.mulf %346, %350 : vector<4x128xf32>
    %352 = vector.extract_strided_slice %264 {offsets = [12, 0], sizes = [4, 512], strides = [1, 1]} : vector<32x512xf32> to vector<4x512xf32>
    %353 = arith.truncf %351 : vector<4x128xf32> to vector<4x128xbf16>
    %cst_102 = arith.constant dense<0.000000e+00> : vector<4x512xf32>
    %354 = tpu.matmul %353, %2, %cst_102 {dimension_numbers = #tpu.dot_dimension_numbers<[1], [0], [0], [1], [0, 0, 1, 1], [], []>} : vector<4x128xbf16>, vector<128x512xbf16>, vector<4x512xf32> -> vector<4x512xf32>
    %355 = arith.addf %352, %354 : vector<4x512xf32>
    %356 = vector.extract_strided_slice %355 {offsets = [0, 0], sizes = [4, 128], strides = [1, 1]} : vector<4x512xf32> to vector<4x128xf32>
    %357 = math.tanh %356 : vector<4x128xf32>
    %cst_103 = arith.constant 5.000000e-01 : f32
    %358 = vector.broadcast %cst_103 : f32 to vector<4x128xf32>
    %359 = arith.mulf %358, %357 : vector<4x128xf32>
    %cst_104 = arith.constant 5.000000e-01 : f32
    %360 = vector.broadcast %cst_104 : f32 to vector<4x128xf32>
    %361 = arith.addf %359, %360 : vector<4x128xf32>
    %362 = vector.extract_strided_slice %355 {offsets = [0, 128], sizes = [4, 128], strides = [1, 1]} : vector<4x512xf32> to vector<4x128xf32>
    %363 = math.tanh %362 : vector<4x128xf32>
    %cst_105 = arith.constant 5.000000e-01 : f32
    %364 = vector.broadcast %cst_105 : f32 to vector<4x128xf32>
    %365 = arith.mulf %364, %363 : vector<4x128xf32>
    %cst_106 = arith.constant 5.000000e-01 : f32
    %366 = vector.broadcast %cst_106 : f32 to vector<4x128xf32>
    %367 = arith.addf %365, %366 : vector<4x128xf32>
    %368 = vector.extract_strided_slice %355 {offsets = [0, 256], sizes = [4, 128], strides = [1, 1]} : vector<4x512xf32> to vector<4x128xf32>
    %369 = math.tanh %368 : vector<4x128xf32>
    %370 = vector.extract_strided_slice %355 {offsets = [0, 384], sizes = [4, 128], strides = [1, 1]} : vector<4x512xf32> to vector<4x128xf32>
    %371 = math.tanh %370 : vector<4x128xf32>
    %cst_107 = arith.constant 5.000000e-01 : f32
    %372 = vector.broadcast %cst_107 : f32 to vector<4x128xf32>
    %373 = arith.mulf %372, %371 : vector<4x128xf32>
    %cst_108 = arith.constant 5.000000e-01 : f32
    %374 = vector.broadcast %cst_108 : f32 to vector<4x128xf32>
    %375 = arith.addf %373, %374 : vector<4x128xf32>
    %376 = arith.mulf %367, %349 : vector<4x128xf32>
    %377 = arith.mulf %361, %369 : vector<4x128xf32>
    %378 = arith.addf %376, %377 : vector<4x128xf32>
    %379 = math.tanh %378 : vector<4x128xf32>
    %380 = arith.mulf %375, %379 : vector<4x128xf32>
    %381 = vector.extract_strided_slice %264 {offsets = [16, 0], sizes = [4, 512], strides = [1, 1]} : vector<32x512xf32> to vector<4x512xf32>
    %382 = arith.truncf %380 : vector<4x128xf32> to vector<4x128xbf16>
    %cst_109 = arith.constant dense<0.000000e+00> : vector<4x512xf32>
    %383 = tpu.matmul %382, %2, %cst_109 {dimension_numbers = #tpu.dot_dimension_numbers<[1], [0], [0], [1], [0, 0, 1, 1], [], []>} : vector<4x128xbf16>, vector<128x512xbf16>, vector<4x512xf32> -> vector<4x512xf32>
    %384 = arith.addf %381, %383 : vector<4x512xf32>
    %385 = vector.extract_strided_slice %384 {offsets = [0, 0], sizes = [4, 128], strides = [1, 1]} : vector<4x512xf32> to vector<4x128xf32>
    %386 = math.tanh %385 : vector<4x128xf32>
    %cst_110 = arith.constant 5.000000e-01 : f32
    %387 = vector.broadcast %cst_110 : f32 to vector<4x128xf32>
    %388 = arith.mulf %387, %386 : vector<4x128xf32>
    %cst_111 = arith.constant 5.000000e-01 : f32
    %389 = vector.broadcast %cst_111 : f32 to vector<4x128xf32>
    %390 = arith.addf %388, %389 : vector<4x128xf32>
    %391 = vector.extract_strided_slice %384 {offsets = [0, 128], sizes = [4, 128], strides = [1, 1]} : vector<4x512xf32> to vector<4x128xf32>
    %392 = math.tanh %391 : vector<4x128xf32>
    %cst_112 = arith.constant 5.000000e-01 : f32
    %393 = vector.broadcast %cst_112 : f32 to vector<4x128xf32>
    %394 = arith.mulf %393, %392 : vector<4x128xf32>
    %cst_113 = arith.constant 5.000000e-01 : f32
    %395 = vector.broadcast %cst_113 : f32 to vector<4x128xf32>
    %396 = arith.addf %394, %395 : vector<4x128xf32>
    %397 = vector.extract_strided_slice %384 {offsets = [0, 256], sizes = [4, 128], strides = [1, 1]} : vector<4x512xf32> to vector<4x128xf32>
    %398 = math.tanh %397 : vector<4x128xf32>
    %399 = vector.extract_strided_slice %384 {offsets = [0, 384], sizes = [4, 128], strides = [1, 1]} : vector<4x512xf32> to vector<4x128xf32>
    %400 = math.tanh %399 : vector<4x128xf32>
    %cst_114 = arith.constant 5.000000e-01 : f32
    %401 = vector.broadcast %cst_114 : f32 to vector<4x128xf32>
    %402 = arith.mulf %401, %400 : vector<4x128xf32>
    %cst_115 = arith.constant 5.000000e-01 : f32
    %403 = vector.broadcast %cst_115 : f32 to vector<4x128xf32>
    %404 = arith.addf %402, %403 : vector<4x128xf32>
    %405 = arith.mulf %396, %378 : vector<4x128xf32>
    %406 = arith.mulf %390, %398 : vector<4x128xf32>
    %407 = arith.addf %405, %406 : vector<4x128xf32>
    %408 = math.tanh %407 : vector<4x128xf32>
    %409 = arith.mulf %404, %408 : vector<4x128xf32>
    %410 = vector.extract_strided_slice %264 {offsets = [20, 0], sizes = [4, 512], strides = [1, 1]} : vector<32x512xf32> to vector<4x512xf32>
    %411 = arith.truncf %409 : vector<4x128xf32> to vector<4x128xbf16>
    %cst_116 = arith.constant dense<0.000000e+00> : vector<4x512xf32>
    %412 = tpu.matmul %411, %2, %cst_116 {dimension_numbers = #tpu.dot_dimension_numbers<[1], [0], [0], [1], [0, 0, 1, 1], [], []>} : vector<4x128xbf16>, vector<128x512xbf16>, vector<4x512xf32> -> vector<4x512xf32>
    %413 = arith.addf %410, %412 : vector<4x512xf32>
    %414 = vector.extract_strided_slice %413 {offsets = [0, 0], sizes = [4, 128], strides = [1, 1]} : vector<4x512xf32> to vector<4x128xf32>
    %415 = math.tanh %414 : vector<4x128xf32>
    %cst_117 = arith.constant 5.000000e-01 : f32
    %416 = vector.broadcast %cst_117 : f32 to vector<4x128xf32>
    %417 = arith.mulf %416, %415 : vector<4x128xf32>
    %cst_118 = arith.constant 5.000000e-01 : f32
    %418 = vector.broadcast %cst_118 : f32 to vector<4x128xf32>
    %419 = arith.addf %417, %418 : vector<4x128xf32>
    %420 = vector.extract_strided_slice %413 {offsets = [0, 128], sizes = [4, 128], strides = [1, 1]} : vector<4x512xf32> to vector<4x128xf32>
    %421 = math.tanh %420 : vector<4x128xf32>
    %cst_119 = arith.constant 5.000000e-01 : f32
    %422 = vector.broadcast %cst_119 : f32 to vector<4x128xf32>
    %423 = arith.mulf %422, %421 : vector<4x128xf32>
    %cst_120 = arith.constant 5.000000e-01 : f32
    %424 = vector.broadcast %cst_120 : f32 to vector<4x128xf32>
    %425 = arith.addf %423, %424 : vector<4x128xf32>
    %426 = vector.extract_strided_slice %413 {offsets = [0, 256], sizes = [4, 128], strides = [1, 1]} : vector<4x512xf32> to vector<4x128xf32>
    %427 = math.tanh %426 : vector<4x128xf32>
    %428 = vector.extract_strided_slice %413 {offsets = [0, 384], sizes = [4, 128], strides = [1, 1]} : vector<4x512xf32> to vector<4x128xf32>
    %429 = math.tanh %428 : vector<4x128xf32>
    %cst_121 = arith.constant 5.000000e-01 : f32
    %430 = vector.broadcast %cst_121 : f32 to vector<4x128xf32>
    %431 = arith.mulf %430, %429 : vector<4x128xf32>
    %cst_122 = arith.constant 5.000000e-01 : f32
    %432 = vector.broadcast %cst_122 : f32 to vector<4x128xf32>
    %433 = arith.addf %431, %432 : vector<4x128xf32>
    %434 = arith.mulf %425, %407 : vector<4x128xf32>
    %435 = arith.mulf %419, %427 : vector<4x128xf32>
    %436 = arith.addf %434, %435 : vector<4x128xf32>
    %437 = math.tanh %436 : vector<4x128xf32>
    %438 = arith.mulf %433, %437 : vector<4x128xf32>
    %439 = vector.extract_strided_slice %264 {offsets = [24, 0], sizes = [4, 512], strides = [1, 1]} : vector<32x512xf32> to vector<4x512xf32>
    %440 = arith.truncf %438 : vector<4x128xf32> to vector<4x128xbf16>
    %cst_123 = arith.constant dense<0.000000e+00> : vector<4x512xf32>
    %441 = tpu.matmul %440, %2, %cst_123 {dimension_numbers = #tpu.dot_dimension_numbers<[1], [0], [0], [1], [0, 0, 1, 1], [], []>} : vector<4x128xbf16>, vector<128x512xbf16>, vector<4x512xf32> -> vector<4x512xf32>
    %442 = arith.addf %439, %441 : vector<4x512xf32>
    %443 = vector.extract_strided_slice %442 {offsets = [0, 0], sizes = [4, 128], strides = [1, 1]} : vector<4x512xf32> to vector<4x128xf32>
    %444 = math.tanh %443 : vector<4x128xf32>
    %cst_124 = arith.constant 5.000000e-01 : f32
    %445 = vector.broadcast %cst_124 : f32 to vector<4x128xf32>
    %446 = arith.mulf %445, %444 : vector<4x128xf32>
    %cst_125 = arith.constant 5.000000e-01 : f32
    %447 = vector.broadcast %cst_125 : f32 to vector<4x128xf32>
    %448 = arith.addf %446, %447 : vector<4x128xf32>
    %449 = vector.extract_strided_slice %442 {offsets = [0, 128], sizes = [4, 128], strides = [1, 1]} : vector<4x512xf32> to vector<4x128xf32>
    %450 = math.tanh %449 : vector<4x128xf32>
    %cst_126 = arith.constant 5.000000e-01 : f32
    %451 = vector.broadcast %cst_126 : f32 to vector<4x128xf32>
    %452 = arith.mulf %451, %450 : vector<4x128xf32>
    %cst_127 = arith.constant 5.000000e-01 : f32
    %453 = vector.broadcast %cst_127 : f32 to vector<4x128xf32>
    %454 = arith.addf %452, %453 : vector<4x128xf32>
    %455 = vector.extract_strided_slice %442 {offsets = [0, 256], sizes = [4, 128], strides = [1, 1]} : vector<4x512xf32> to vector<4x128xf32>
    %456 = math.tanh %455 : vector<4x128xf32>
    %457 = vector.extract_strided_slice %442 {offsets = [0, 384], sizes = [4, 128], strides = [1, 1]} : vector<4x512xf32> to vector<4x128xf32>
    %458 = math.tanh %457 : vector<4x128xf32>
    %cst_128 = arith.constant 5.000000e-01 : f32
    %459 = vector.broadcast %cst_128 : f32 to vector<4x128xf32>
    %460 = arith.mulf %459, %458 : vector<4x128xf32>
    %cst_129 = arith.constant 5.000000e-01 : f32
    %461 = vector.broadcast %cst_129 : f32 to vector<4x128xf32>
    %462 = arith.addf %460, %461 : vector<4x128xf32>
    %463 = arith.mulf %454, %436 : vector<4x128xf32>
    %464 = arith.mulf %448, %456 : vector<4x128xf32>
    %465 = arith.addf %463, %464 : vector<4x128xf32>
    %466 = math.tanh %465 : vector<4x128xf32>
    %467 = arith.mulf %462, %466 : vector<4x128xf32>
    %468 = vector.extract_strided_slice %264 {offsets = [28, 0], sizes = [4, 512], strides = [1, 1]} : vector<32x512xf32> to vector<4x512xf32>
    %469 = arith.truncf %467 : vector<4x128xf32> to vector<4x128xbf16>
    %cst_130 = arith.constant dense<0.000000e+00> : vector<4x512xf32>
    %470 = tpu.matmul %469, %2, %cst_130 {dimension_numbers = #tpu.dot_dimension_numbers<[1], [0], [0], [1], [0, 0, 1, 1], [], []>} : vector<4x128xbf16>, vector<128x512xbf16>, vector<4x512xf32> -> vector<4x512xf32>
    %471 = arith.addf %468, %470 : vector<4x512xf32>
    %472 = vector.extract_strided_slice %471 {offsets = [0, 0], sizes = [4, 128], strides = [1, 1]} : vector<4x512xf32> to vector<4x128xf32>
    %473 = math.tanh %472 : vector<4x128xf32>
    %cst_131 = arith.constant 5.000000e-01 : f32
    %474 = vector.broadcast %cst_131 : f32 to vector<4x128xf32>
    %475 = arith.mulf %474, %473 : vector<4x128xf32>
    %cst_132 = arith.constant 5.000000e-01 : f32
    %476 = vector.broadcast %cst_132 : f32 to vector<4x128xf32>
    %477 = arith.addf %475, %476 : vector<4x128xf32>
    %478 = vector.extract_strided_slice %471 {offsets = [0, 128], sizes = [4, 128], strides = [1, 1]} : vector<4x512xf32> to vector<4x128xf32>
    %479 = math.tanh %478 : vector<4x128xf32>
    %cst_133 = arith.constant 5.000000e-01 : f32
    %480 = vector.broadcast %cst_133 : f32 to vector<4x128xf32>
    %481 = arith.mulf %480, %479 : vector<4x128xf32>
    %cst_134 = arith.constant 5.000000e-01 : f32
    %482 = vector.broadcast %cst_134 : f32 to vector<4x128xf32>
    %483 = arith.addf %481, %482 : vector<4x128xf32>
    %484 = vector.extract_strided_slice %471 {offsets = [0, 256], sizes = [4, 128], strides = [1, 1]} : vector<4x512xf32> to vector<4x128xf32>
    %485 = math.tanh %484 : vector<4x128xf32>
    %486 = vector.extract_strided_slice %471 {offsets = [0, 384], sizes = [4, 128], strides = [1, 1]} : vector<4x512xf32> to vector<4x128xf32>
    %487 = math.tanh %486 : vector<4x128xf32>
    %cst_135 = arith.constant 5.000000e-01 : f32
    %488 = vector.broadcast %cst_135 : f32 to vector<4x128xf32>
    %489 = arith.mulf %488, %487 : vector<4x128xf32>
    %cst_136 = arith.constant 5.000000e-01 : f32
    %490 = vector.broadcast %cst_136 : f32 to vector<4x128xf32>
    %491 = arith.addf %489, %490 : vector<4x128xf32>
    %492 = arith.mulf %483, %465 : vector<4x128xf32>
    %493 = arith.mulf %477, %485 : vector<4x128xf32>
    %494 = arith.addf %492, %493 : vector<4x128xf32>
    %495 = math.tanh %494 : vector<4x128xf32>
    %496 = arith.mulf %491, %495 : vector<4x128xf32>
    %c0_137 = arith.constant 0 : index
    %c0_138 = arith.constant 0 : index
    %497 = vector.load %arg7[%c0_137, %c0_138] : memref<1x128xf32, #tpu.memory_space<vmem>>, vector<1x128xf32>
    %c0_139 = arith.constant 0 : index
    %c0_140 = arith.constant 0 : index
    %498 = vector.load %arg8[%c0_139, %c0_140] : memref<1x1xf32, #tpu.memory_space<vmem>>, vector<1x1xf32>
    %499 = vector.broadcast %497 : vector<1x128xf32> to vector<4x128xf32>
    %500 = arith.mulf %496, %499 : vector<4x128xf32>
    %cst_141 = arith.constant dense<0.000000e+00> : vector<4xf32>
    %501 = vector.multi_reduction <add>, %500, %cst_141 [1] : vector<4x128xf32> to vector<4xf32>
    %502 = vector.shape_cast %501 : vector<4xf32> to vector<4x1xf32>
    %503 = vector.broadcast %498 : vector<1x1xf32> to vector<4x1xf32>
    %504 = arith.addf %502, %503 : vector<4x1xf32>
    %c0_142 = arith.constant 0 : index
    %c0_143 = arith.constant 0 : index
    %505 = vector.load %arg9[%c0_142, %c0_143] : memref<4x1xf32, #tpu.memory_space<vmem>>, vector<4x1xf32>
    tpu.vector_store %arg9[%c0_142, %c0_143], %504 {strides = array<i32>} : memref<4x1xf32, #tpu.memory_space<vmem>>, vector<4x1xf32>,
    return
  }
}

</mosaic_0001>

<llo_original>
// kernel: tpu_custom_call.1
$region0: #{tpu_custom_call.1}
  #allocation0 [shape = 'u32[]', space=smem, size = 0x4, offset = 0x4, fixed_abs, tag = 'smem constant byte address 0x4 - core index']
  #allocation1 [shape = 'u32[144,128]{1,0:T(1,128)}', space=vmem, size = 0x12000, scoped, tag = 'internal scratch']
  #allocation2 [shape = 'bf16[32,128]{1,0:T(16,128)(2,1)}', space=vmem, size = 0x2000, scoped, tag = 'scratch operand']
  #allocation3 [shape = 'f32[1,1]{1,0:T(1,128)S(1)}', space=vmem, size = 0x200, scoped, tag = 'scoped memory for tpu_custom_call.1']
  %s0 = inlined_call_operand.vmem [shape: f32[32,1], index: 0, kind: input, shape index: {}]
  %s1 = inlined_call_operand.vmem [shape: f32[1,512], index: 1, kind: input, shape index: {}]
  %s2 = inlined_call_operand.hbm [shape: bf16[128,512], index: 2, kind: input, shape index: {}]
  %s3 = inlined_call_operand.vmem [shape: f32[1,512], index: 3, kind: input, shape index: {}]
  %s4 = inlined_call_operand.hbm [shape: bf16[128,512], index: 4, kind: input, shape index: {}]
  %s5 = inlined_call_operand.hbm [shape: bf16[128,512], index: 5, kind: input, shape index: {}]
  %s6 = inlined_call_operand.vmem [shape: f32[1,512], index: 6, kind: input, shape index: {}]
  %s7 = inlined_call_operand.vmem [shape: f32[1,128], index: 7, kind: input, shape index: {}]
  %s8 = inlined_call_operand.<no memory space> [shape: f32[1,1], index: 8, kind: input, shape index: {}]
  %s9 = inlined_call_operand.vmem [shape: f32[4,1], index: 9, kind: output, shape index: {}]
  %s10 = sld [smem:[#allocation0]]
  $region58: #{tpu_custom_call.1} parent=0
    _
  %s12 = ssub.s32 1, %s10
  %s13 = scalar_select 0, %s12, %s10
  %v14 = vstv %s8
  %15 = vst [vmem:[#allocation3] sm:$0x1] %v14
  $region1: #{tpu_custom_call.1} parent=0
    #allocation4 [shape = 'u8[131072]{0}', space=vmem, size = 0x20000, scoped, tag = 'input window, operand 2, single buffered']
    #allocation5 [shape = 's32[1]{0}', space=sflag, size = 0x4, scoped, tag = 'scoped memory for tpu_custom_call.1']
    #allocation6 [shape = 'u8[131072]{0}', space=vmem, size = 0x20000, scoped, tag = 'input window, operand 4, single buffered']
    #allocation7 [shape = 's32[1]{0}', space=sflag, size = 0x4, scoped, tag = 'scoped memory for tpu_custom_call.1']
    #allocation8 [shape = 'u8[131072]{0}', space=vmem, size = 0x20000, scoped, tag = 'input window, operand 5, single buffered']
    %16 = vsyncpa [#allocation5], 0
    %17 = vsyncpa [#allocation7], 0
    // Predicated region
    $region2: #{tpu_custom_call.1} parent=1 // pred_check
      _
    $region3: #{tpu_custom_call.1} parent=1 // pred_check_branch
      %19 = sbr.rel (0) target = $region5
    $region4: #{tpu_custom_call.1} parent=1 // pred_region
      _
    $region5: #{tpu_custom_call.1} parent=1 // pred_fallthru
      _
    // Predicated region
    $region6: #{tpu_custom_call.1} parent=1 // pred_check
      _
    $region7: #{tpu_custom_call.1} parent=1 // pred_check_branch
      %21 = sbr.rel (0) target = $region9
    $region8: #{tpu_custom_call.1} parent=1 // pred_region
      _
    $region9: #{tpu_custom_call.1} parent=1 // pred_fallthru
      _
    // Predicated region
    $region10: #{tpu_custom_call.1} parent=1 // pred_check
      _
    $region11: #{tpu_custom_call.1} parent=1 // pred_check_branch
      %23 = sbr.rel (0) target = $region13
    $region12: #{tpu_custom_call.1} parent=1 // pred_region
      %s25 = ssub.s32 4096, 4096
      %26 = vsyncadd [#allocation5], %s25
      %s27 = sshll.u32 [#allocation4], 4
      %s28 = int_to_ptr.vmem [resolvable:$true] %s27
      %33 = dma.hbm_to_vmem [thread:$0]  %s2, 4096, %s28, [#allocation5], 256, 256, 16
    $region13: #{tpu_custom_call.1} parent=1 // pred_fallthru
      _
    // Predicated region
    $region14: #{tpu_custom_call.1} parent=1 // pred_check
      _
    $region15: #{tpu_custom_call.1} parent=1 // pred_check_branch
      %35 = sbr.rel (0) target = $region17
    $region16: #{tpu_custom_call.1} parent=1 // pred_region
      _
    $region17: #{tpu_custom_call.1} parent=1 // pred_fallthru
      _
    // Predicated region
    $region18: #{tpu_custom_call.1} parent=1 // pred_check
      _
    $region19: #{tpu_custom_call.1} parent=1 // pred_check_branch
      %37 = sbr.rel (0) target = $region21
    $region20: #{tpu_custom_call.1} parent=1 // pred_region
      %s39 = ssub.s32 4096, 4096
      %40 = vsyncadd [#allocation7], %s39
      %s41 = sshll.u32 [#allocation6], 4
      %s42 = int_to_ptr.vmem [resolvable:$true] %s41
      %47 = dma.hbm_to_vmem [thread:$0]  %s4, 4096, %s42, [#allocation7], 256, 256, 16
    $region21: #{tpu_custom_call.1} parent=1 // pred_fallthru
      _
    // Predicated region
    $region22: #{tpu_custom_call.1} parent=1 // pred_check
      _
    $region23: #{tpu_custom_call.1} parent=1 // pred_check_branch
      %49 = sbr.rel (0) target = $region25
    $region24: #{tpu_custom_call.1} parent=1 // pred_region
      %s51 = ssub.s32 4096, 4096
      %52 = vsyncadd [#allocation7], %s51
      %s53 = sshll.u32 [#allocation8], 4
      %s54 = int_to_ptr.vmem [resolvable:$true] %s53
      %59 = dma.hbm_to_vmem [thread:$0]  %s5, 4096, %s54, [#allocation7], 256, 256, 16
    $region25: #{tpu_custom_call.1} parent=1 // pred_fallthru
      _
    // Predicated region
    $region26: #{tpu_custom_call.1} parent=1 // pred_check
      _
    $region27: #{tpu_custom_call.1} parent=1 // pred_check_branch
      %61 = sbr.rel (0) target = $region29
    $region28: #{tpu_custom_call.1} parent=1 // pred_region
      _
    $region29: #{tpu_custom_call.1} parent=1 // pred_fallthru
      _
    // Predicated region
    $region30: #{tpu_custom_call.1} parent=1 // pred_check
      _
    $region31: #{tpu_custom_call.1} parent=1 // pred_check_branch
      %63 = sbr.rel (0) target = $region33
    $region32: #{tpu_custom_call.1} parent=1 // pred_region
      _
    $region33: #{tpu_custom_call.1} parent=1 // pred_fallthru
      _
    // Predicated region
    $region34: #{tpu_custom_call.1} parent=1 // pred_check
      _
    $region35: #{tpu_custom_call.1} parent=1 // pred_check_branch
      %65 = sbr.rel (0) target = $region37
    $region36: #{tpu_custom_call.1} parent=1 // pred_region
      _
    $region37: #{tpu_custom_call.1} parent=1 // pred_fallthru
      _
    // Predicated region
    $region38: #{tpu_custom_call.1} parent=1 // pred_check
      _
    $region39: #{tpu_custom_call.1} parent=1 // pred_check_branch
      %67 = sbr.rel (0) target = $region41
    $region40: #{tpu_custom_call.1} parent=1 // pred_region
      %68 = dma.done [#allocation5], 4096
    $region41: #{tpu_custom_call.1} parent=1 // pred_fallthru
      _
    // Predicated region
    $region42: #{tpu_custom_call.1} parent=1 // pred_check
      _
    $region43: #{tpu_custom_call.1} parent=1 // pred_check_branch
      %70 = sbr.rel (0) target = $region45
    $region44: #{tpu_custom_call.1} parent=1 // pred_region
      %71 = dma.done [#allocation7], 4096
    $region45: #{tpu_custom_call.1} parent=1 // pred_fallthru
      _
    // Predicated region
    $region46: #{tpu_custom_call.1} parent=1 // pred_check
      _
    $region47: #{tpu_custom_call.1} parent=1 // pred_check_branch
      %73 = sbr.rel (0) target = $region49
    $region48: #{tpu_custom_call.1} parent=1 // pred_region
      %74 = dma.done [#allocation7], 4096
    $region49: #{tpu_custom_call.1} parent=1 // pred_fallthru
      _
    %v76 = vld [vmem:[#allocation4] sm:$0xff]
    %v77 = vld [vmem:[#allocation4 + $0x8] sm:$0xff]
    %v78 = vld [vmem:[#allocation4 + $0x10] sm:$0xff]
    %v79 = vld [vmem:[#allocation4 + $0x18] sm:$0xff]
    %v80 = vld [vmem:[#allocation4 + $0x20] sm:$0xff]
    %v81 = vld [vmem:[#allocation4 + $0x28] sm:$0xff]
    %v82 = vld [vmem:[#allocation4 + $0x30] sm:$0xff]
    %v83 = vld [vmem:[#allocation4 + $0x38] sm:$0xff]
    %v84 = vld [vmem:[#allocation4 + $0x40] sm:$0xff]
    %v85 = vld [vmem:[#allocation4 + $0x48] sm:$0xff]
    %v86 = vld [vmem:[#allocation4 + $0x50] sm:$0xff]
    %v87 = vld [vmem:[#allocation4 + $0x58] sm:$0xff]
    %v88 = vld [vmem:[#allocation4 + $0x60] sm:$0xff]
    %v89 = vld [vmem:[#allocation4 + $0x68] sm:$0xff]
    %v90 = vld [vmem:[#allocation4 + $0x70] sm:$0xff]
    %v91 = vld [vmem:[#allocation4 + $0x78] sm:$0xff]
    %v92 = vld [vmem:[#allocation4 + $0x80] sm:$0xff]
    %v93 = vld [vmem:[#allocation4 + $0x88] sm:$0xff]
    %v94 = vld [vmem:[#allocation4 + $0x90] sm:$0xff]
    %v95 = vld [vmem:[#allocation4 + $0x98] sm:$0xff]
    %v96 = vld [vmem:[#allocation4 + $0xa0] sm:$0xff]
    %v97 = vld [vmem:[#allocation4 + $0xa8] sm:$0xff]
    %v98 = vld [vmem:[#allocation4 + $0xb0] sm:$0xff]
    %v99 = vld [vmem:[#allocation4 + $0xb8] sm:$0xff]
    %v100 = vld [vmem:[#allocation4 + $0xc0] sm:$0xff]
    %v101 = vld [vmem:[#allocation4 + $0xc8] sm:$0xff]
    %v102 = vld [vmem:[#allocation4 + $0xd0] sm:$0xff]
    %v103 = vld [vmem:[#allocation4 + $0xd8] sm:$0xff]
    %v104 = vld [vmem:[#allocation4 + $0xe0] sm:$0xff]
    %v105 = vld [vmem:[#allocation4 + $0xe8] sm:$0xff]
    %v106 = vld [vmem:[#allocation4 + $0xf0] sm:$0xff]
    %v107 = vld [vmem:[#allocation4 + $0xf8] sm:$0xff]
    %v108 = vld [vmem:[#allocation6] sm:$0xff]
    %v109 = vld [vmem:[#allocation6 + $0x8] sm:$0xff]
    %v110 = vld [vmem:[#allocation6 + $0x10] sm:$0xff]
    %v111 = vld [vmem:[#allocation6 + $0x18] sm:$0xff]
    %v112 = vld [vmem:[#allocation6 + $0x20] sm:$0xff]
    %v113 = vld [vmem:[#allocation6 + $0x28] sm:$0xff]
    %v114 = vld [vmem:[#allocation6 + $0x30] sm:$0xff]
    %v115 = vld [vmem:[#allocation6 + $0x38] sm:$0xff]
    %v116 = vld [vmem:[#allocation6 + $0x40] sm:$0xff]
    %v117 = vld [vmem:[#allocation6 + $0x48] sm:$0xff]
    %v118 = vld [vmem:[#allocation6 + $0x50] sm:$0xff]
    %v119 = vld [vmem:[#allocation6 + $0x58] sm:$0xff]
    %v120 = vld [vmem:[#allocation6 + $0x60] sm:$0xff]
    %v121 = vld [vmem:[#allocation6 + $0x68] sm:$0xff]
    %v122 = vld [vmem:[#allocation6 + $0x70] sm:$0xff]
    %v123 = vld [vmem:[#allocation6 + $0x78] sm:$0xff]
    %v124 = vld [vmem:[#allocation6 + $0x80] sm:$0xff]
    %v125 = vld [vmem:[#allocation6 + $0x88] sm:$0xff]
    %v126 = vld [vmem:[#allocation6 + $0x90] sm:$0xff]
    %v127 = vld [vmem:[#allocation6 + $0x98] sm:$0xff]
    %v128 = vld [vmem:[#allocation6 + $0xa0] sm:$0xff]
    %v129 = vld [vmem:[#allocation6 + $0xa8] sm:$0xff]
    %v130 = vld [vmem:[#allocation6 + $0xb0] sm:$0xff]
    %v131 = vld [vmem:[#allocation6 + $0xb8] sm:$0xff]
    %v132 = vld [vmem:[#allocation6 + $0xc0] sm:$0xff]
    %v133 = vld [vmem:[#allocation6 + $0xc8] sm:$0xff]
    %v134 = vld [vmem:[#allocation6 + $0xd0] sm:$0xff]
    %v135 = vld [vmem:[#allocation6 + $0xd8] sm:$0xff]
    %v136 = vld [vmem:[#allocation6 + $0xe0] sm:$0xff]
    %v137 = vld [vmem:[#allocation6 + $0xe8] sm:$0xff]
    %v138 = vld [vmem:[#allocation6 + $0xf0] sm:$0xff]
    %v139 = vld [vmem:[#allocation6 + $0xf8] sm:$0xff]
    %v140 = vld [vmem:[#allocation8] sm:$0xff]
    %v141 = vld [vmem:[#allocation8 + $0x8] sm:$0xff]
    %v142 = vld [vmem:[#allocation8 + $0x10] sm:$0xff]
    %v143 = vld [vmem:[#allocation8 + $0x18] sm:$0xff]
    %v144 = vld [vmem:[#allocation8 + $0x20] sm:$0xff]
    %v145 = vld [vmem:[#allocation8 + $0x28] sm:$0xff]
    %v146 = vld [vmem:[#allocation8 + $0x30] sm:$0xff]
    %v147 = vld [vmem:[#allocation8 + $0x38] sm:$0xff]
    %v148 = vld [vmem:[#allocation8 + $0x40] sm:$0xff]
    %v149 = vld [vmem:[#allocation8 + $0x48] sm:$0xff]
    %v150 = vld [vmem:[#allocation8 + $0x50] sm:$0xff]
    %v151 = vld [vmem:[#allocation8 + $0x58] sm:$0xff]
    %v152 = vld [vmem:[#allocation8 + $0x60] sm:$0xff]
    %v153 = vld [vmem:[#allocation8 + $0x68] sm:$0xff]
    %v154 = vld [vmem:[#allocation8 + $0x70] sm:$0xff]
    %v155 = vld [vmem:[#allocation8 + $0x78] sm:$0xff]
    %v156 = vld [vmem:[#allocation8 + $0x80] sm:$0xff]
    %v157 = vld [vmem:[#allocation8 + $0x88] sm:$0xff]
    %v158 = vld [vmem:[#allocation8 + $0x90] sm:$0xff]
    %v159 = vld [vmem:[#allocation8 + $0x98] sm:$0xff]
    %v160 = vld [vmem:[#allocation8 + $0xa0] sm:$0xff]
    %v161 = vld [vmem:[#allocation8 + $0xa8] sm:$0xff]
    %v162 = vld [vmem:[#allocation8 + $0xb0] sm:$0xff]
    %v163 = vld [vmem:[#allocation8 + $0xb8] sm:$0xff]
    %v164 = vld [vmem:[#allocation8 + $0xc0] sm:$0xff]
    %v165 = vld [vmem:[#allocation8 + $0xc8] sm:$0xff]
    %v166 = vld [vmem:[#allocation8 + $0xd0] sm:$0xff]
    %v167 = vld [vmem:[#allocation8 + $0xd8] sm:$0xff]
    %v168 = vld [vmem:[#allocation8 + $0xe0] sm:$0xff]
    %v169 = vld [vmem:[#allocation8 + $0xe8] sm:$0xff]
    %v170 = vld [vmem:[#allocation8 + $0xf0] sm:$0xff]
    %v171 = vld [vmem:[#allocation8 + $0xf8] sm:$0xff]
    %v172 = vld [vmem:[%s0] sm:$0xff]
    %v173 = vld [vmem:[%s0 + $0x8] sm:$0xff]
    %v174 = vld [vmem:[%s0 + $0x10] sm:$0xff]
    %v175 = vld [vmem:[%s0 + $0x18] sm:$0xff]
    %v176 = vld [vmem:[%s1] sm:$0xf]
    %178 = vset.pattern.permute.xlu0 0
    %179 = vperm.xlu0 %178, %v172
    %v180 = vpop.permute.xlu0 %179
    %183 = vset.pattern.permute.xlu0 0
    %184 = vperm.xlu0 %183, %v173
    %v185 = vpop.permute.xlu0 %184
    %188 = vset.pattern.permute.xlu0 0
    %189 = vperm.xlu0 %188, %v174
    %v190 = vpop.permute.xlu0 %189
    %193 = vset.pattern.permute.xlu0 0
    %194 = vperm.xlu0 %193, %v175
    %v195 = vpop.permute.xlu0 %194
    %v198 = vlaneseq
    %v199 = vshrl.u32 %v198, 7
    %v200 = vsub.s32 0, %v199
    %v201 = vrot.slane %v176, %v200
    %v202 = vlaneseq
    %v203 = vshrl.u32 %v202, 7
    %v204 = vsub.s32 1, %v203
    %v205 = vrot.slane %v176, %v204
    %v206 = vlaneseq
    %v207 = vshrl.u32 %v206, 7
    %v208 = vsub.s32 2, %v207
    %v209 = vrot.slane %v176, %v208
    %v210 = vlaneseq
    %v211 = vshrl.u32 %v210, 7
    %v212 = vsub.s32 3, %v211
    %v213 = vrot.slane %v176, %v212
    %v218 = vmul.f32 %v180, %v201
    %v219 = vmul.f32 %v180, %v205
    %v220 = vmul.f32 %v180, %v209
    %v221 = vmul.f32 %v180, %v213
    %v222 = vmul.f32 %v185, %v201
    %v223 = vmul.f32 %v185, %v205
    %v224 = vmul.f32 %v185, %v209
    %v225 = vmul.f32 %v185, %v213
    %v226 = vmul.f32 %v190, %v201
    %v227 = vmul.f32 %v190, %v205
    %v228 = vmul.f32 %v190, %v209
    %v229 = vmul.f32 %v190, %v213
    %v230 = vmul.f32 %v195, %v201
    %v231 = vmul.f32 %v195, %v205
    %v232 = vmul.f32 %v195, %v209
    %v233 = vmul.f32 %v195, %v213
    %v234 = vld [vmem:[%s3] sm:$0xf]
    %v236 = vlaneseq
    %v237 = vshrl.u32 %v236, 7
    %v238 = vsub.s32 0, %v237
    %v239 = vrot.slane %v234, %v238
    %v240 = vlaneseq
    %v241 = vshrl.u32 %v240, 7
    %v242 = vsub.s32 1, %v241
    %v243 = vrot.slane %v234, %v242
    %v244 = vlaneseq
    %v245 = vshrl.u32 %v244, 7
    %v246 = vsub.s32 2, %v245
    %v247 = vrot.slane %v234, %v246
    %v248 = vlaneseq
    %v249 = vshrl.u32 %v248, 7
    %v250 = vsub.s32 3, %v249
    %v251 = vrot.slane %v234, %v250
    %v256 = vadd.f32 %v218, %v239
    %v257 = vadd.f32 %v219, %v243
    %v258 = vadd.f32 %v220, %v247
    %v259 = vadd.f32 %v221, %v251
    %v260 = vadd.f32 %v222, %v239
    %v261 = vadd.f32 %v223, %v243
    %v262 = vadd.f32 %v224, %v247
    %v263 = vadd.f32 %v225, %v251
    %v264 = vadd.f32 %v226, %v239
    %v265 = vadd.f32 %v227, %v243
    %v266 = vadd.f32 %v228, %v247
    %v267 = vadd.f32 %v229, %v251
    %v268 = vadd.f32 %v230, %v239
    %v269 = vadd.f32 %v231, %v243
    %v270 = vadd.f32 %v232, %v247
    %v271 = vadd.f32 %v233, %v251
    %v304 = vunpack.c.l.b16 %v76
    %v305 = vunpack.c.h.b16 %v76
    %v306 = vunpack.c.l.b16 %v77
    %v307 = vunpack.c.h.b16 %v77
    %v308 = vunpack.c.l.b16 %v78
    %v309 = vunpack.c.h.b16 %v78
    %v310 = vunpack.c.l.b16 %v79
    %v311 = vunpack.c.h.b16 %v79
    %v312 = vunpack.c.l.b16 %v80
    %v313 = vunpack.c.h.b16 %v80
    %v314 = vunpack.c.l.b16 %v81
    %v315 = vunpack.c.h.b16 %v81
    %v316 = vunpack.c.l.b16 %v82
    %v317 = vunpack.c.h.b16 %v82
    %v318 = vunpack.c.l.b16 %v83
    %v319 = vunpack.c.h.b16 %v83
    %v320 = vunpack.c.l.b16 %v84
    %v321 = vunpack.c.h.b16 %v84
    %v322 = vunpack.c.l.b16 %v85
    %v323 = vunpack.c.h.b16 %v85
    %v324 = vunpack.c.l.b16 %v86
    %v325 = vunpack.c.h.b16 %v86
    %v326 = vunpack.c.l.b16 %v87
    %v327 = vunpack.c.h.b16 %v87
    %v328 = vunpack.c.l.b16 %v88
    %v329 = vunpack.c.h.b16 %v88
    %v330 = vunpack.c.l.b16 %v89
    %v331 = vunpack.c.h.b16 %v89
    %v332 = vunpack.c.l.b16 %v90
    %v333 = vunpack.c.h.b16 %v90
    %v334 = vunpack.c.l.b16 %v91
    %v335 = vunpack.c.h.b16 %v91
    %v336 = vunpack.c.l.b16 %v92
    %v337 = vunpack.c.h.b16 %v92
    %v338 = vunpack.c.l.b16 %v93
    %v339 = vunpack.c.h.b16 %v93
    %v340 = vunpack.c.l.b16 %v94
    %v341 = vunpack.c.h.b16 %v94
    %v342 = vunpack.c.l.b16 %v95
    %v343 = vunpack.c.h.b16 %v95
    %v344 = vunpack.c.l.b16 %v96
    %v345 = vunpack.c.h.b16 %v96
    %v346 = vunpack.c.l.b16 %v97
    %v347 = vunpack.c.h.b16 %v97
    %v348 = vunpack.c.l.b16 %v98
    %v349 = vunpack.c.h.b16 %v98
    %v350 = vunpack.c.l.b16 %v99
    %v351 = vunpack.c.h.b16 %v99
    %v352 = vunpack.c.l.b16 %v100
    %v353 = vunpack.c.h.b16 %v100
    %v354 = vunpack.c.l.b16 %v101
    %v355 = vunpack.c.h.b16 %v101
    %v356 = vunpack.c.l.b16 %v102
    %v357 = vunpack.c.h.b16 %v102
    %v358 = vunpack.c.l.b16 %v103
    %v359 = vunpack.c.h.b16 %v103
    %v360 = vunpack.c.l.b16 %v104
    %v361 = vunpack.c.h.b16 %v104
    %v362 = vunpack.c.l.b16 %v105
    %v363 = vunpack.c.h.b16 %v105
    %v364 = vunpack.c.l.b16 %v106
    %v365 = vunpack.c.h.b16 %v106
    %v366 = vunpack.c.l.b16 %v107
    %v367 = vunpack.c.h.b16 %v107
    %v368 = vpack.c.b16 %v308, %v304
    %v369 = vpack.c.b16 %v309, %v305
    %v370 = vpack.c.b16 %v310, %v306
    %v371 = vpack.c.b16 %v311, %v307
    %v372 = vpack.c.b16 %v316, %v312
    %v373 = vpack.c.b16 %v317, %v313
    %v374 = vpack.c.b16 %v318, %v314
    %v375 = vpack.c.b16 %v319, %v315
    %v376 = vpack.c.b16 %v324, %v320
    %v377 = vpack.c.b16 %v325, %v321
    %v378 = vpack.c.b16 %v326, %v322
    %v379 = vpack.c.b16 %v327, %v323
    %v380 = vpack.c.b16 %v332, %v328
    %v381 = vpack.c.b16 %v333, %v329
    %v382 = vpack.c.b16 %v334, %v330
    %v383 = vpack.c.b16 %v335, %v331
    %v384 = vpack.c.b16 %v340, %v336
    %v385 = vpack.c.b16 %v341, %v337
    %v386 = vpack.c.b16 %v342, %v338
    %v387 = vpack.c.b16 %v343, %v339
    %v388 = vpack.c.b16 %v348, %v344
    %v389 = vpack.c.b16 %v349, %v345
    %v390 = vpack.c.b16 %v350, %v346
    %v391 = vpack.c.b16 %v351, %v347
    %v392 = vpack.c.b16 %v356, %v352
    %v393 = vpack.c.b16 %v357, %v353
    %v394 = vpack.c.b16 %v358, %v354
    %v395 = vpack.c.b16 %v359, %v355
    %v396 = vpack.c.b16 %v364, %v360
    %v397 = vpack.c.b16 %v365, %v361
    %v398 = vpack.c.b16 %v366, %v362
    %v399 = vpack.c.b16 %v367, %v363
    %432 = vmatprep.subr.bf16.mxu0 %v369
    %433 = vmatpush1.bf16.msra.mxu0 %v368
    %434 = vmatprep.subr.bf16.mxu0 %v373
    %435 = vmatpush1.bf16.msra.mxu0 %v372
    %436 = vmatprep.subr.bf16.mxu0 %v377
    %437 = vmatpush1.bf16.msra.mxu0 %v376
    %438 = vmatprep.subr.bf16.mxu0 %v381
    %439 = vmatpush1.bf16.msra.mxu0 %v380
    %440 = vmatprep.subr.bf16.mxu0 %v385
    %441 = vmatpush1.bf16.msra.mxu0 %v384
    %442 = vmatprep.subr.bf16.mxu0 %v389
    %443 = vmatpush1.bf16.msra.mxu0 %v388
    %444 = vmatprep.subr.bf16.mxu0 %v393
    %445 = vmatpush1.bf16.msra.mxu0 %v392
    %446 = vmatprep.subr.bf16.mxu0 %v397
    %447 = vmatpush1.bf16.msra.mxu0 %v396
    %448 = vmatprep.subr.bf16.mxu0 0
    %449 = vmatpush1.bf16.msra.mxu0 0
    %450 = vmatprep.subr.bf16.mxu0 0
    %451 = vmatpush1.bf16.msra.mxu0 0
    %452 = vmatprep.subr.bf16.mxu0 0
    %453 = vmatpush1.bf16.msra.mxu0 0
    %454 = vmatprep.subr.bf16.mxu0 0
    %455 = vmatpush1.bf16.msra.mxu0 0
    %456 = vmatprep.subr.bf16.mxu0 0
    %457 = vmatpush1.bf16.msra.mxu0 0
    %458 = vmatprep.subr.bf16.mxu0 0
    %459 = vmatpush1.bf16.msra.mxu0 0
    %460 = vmatprep.subr.bf16.mxu0 0
    %461 = vmatpush1.bf16.msra.mxu0 0
    %462 = vmatprep.subr.bf16.mxu0 0
    %463 = vmatpush1.bf16.msra.mxu0 0
    %464 = vmatprep.mubr.bf16.mxu0 0
    %465 = vmatmul.mubr.bf16.gmra.mrb[0].mxu0 0
    %v466 = vpop.f32.mrb[0].mxu0
    %v467 = vadd.f32 0.0, %v466
    %v468 = vpop.f32.mrb[0].mxu0
    %v469 = vadd.f32 0.0, %v468
    %v470 = vpop.f32.mrb[0].mxu0
    %v471 = vpop.f32.mrb[0].mxu0
    %472 = vdwg.mxu0
    %473 = vmatprep.subr.bf16.mxu0 %v371
    %474 = vmatpush1.bf16.msra.mxu0 %v370
    %475 = vmatprep.subr.bf16.mxu0 %v375
    %476 = vmatpush1.bf16.msra.mxu0 %v374
    %477 = vmatprep.subr.bf16.mxu0 %v379
    %478 = vmatpush1.bf16.msra.mxu0 %v378
    %479 = vmatprep.subr.bf16.mxu0 %v383
    %480 = vmatpush1.bf16.msra.mxu0 %v382
    %481 = vmatprep.subr.bf16.mxu0 %v387
    %482 = vmatpush1.bf16.msra.mxu0 %v386
    %483 = vmatprep.subr.bf16.mxu0 %v391
    %484 = vmatpush1.bf16.msra.mxu0 %v390
    %485 = vmatprep.subr.bf16.mxu0 %v395
    %486 = vmatpush1.bf16.msra.mxu0 %v394
    %487 = vmatprep.subr.bf16.mxu0 %v399
    %488 = vmatpush1.bf16.msra.mxu0 %v398
    %489 = vmatprep.subr.bf16.mxu0 0
    %490 = vmatpush1.bf16.msra.mxu0 0
    %491 = vmatprep.subr.bf16.mxu0 0
    %492 = vmatpush1.bf16.msra.mxu0 0
    %493 = vmatprep.subr.bf16.mxu0 0
    %494 = vmatpush1.bf16.msra.mxu0 0
    %495 = vmatprep.subr.bf16.mxu0 0
    %496 = vmatpush1.bf16.msra.mxu0 0
    %497 = vmatprep.subr.bf16.mxu0 0
    %498 = vmatpush1.bf16.msra.mxu0 0
    %499 = vmatprep.subr.bf16.mxu0 0
    %500 = vmatpush1.bf16.msra.mxu0 0
    %501 = vmatprep.subr.bf16.mxu0 0
    %502 = vmatpush1.bf16.msra.mxu0 0
    %503 = vmatprep.subr.bf16.mxu0 0
    %504 = vmatpush1.bf16.msra.mxu0 0
    %505 = vmatprep.mubr.bf16.mxu0 0
    %506 = vmatmul.mubr.bf16.gmra.mrb[0].mxu0 0
    %v507 = vpop.f32.mrb[0].mxu0
    %v508 = vadd.f32 0.0, %v507
    %v509 = vpop.f32.mrb[0].mxu0
    %v510 = vadd.f32 0.0, %v509
    %v511 = vpop.f32.mrb[0].mxu0
    %v512 = vpop.f32.mrb[0].mxu0
    %513 = vdwg.mxu0
    %v514 = vadd.f32 %v256, %v467
    %v515 = vadd.f32 %v257, %v469
    %v516 = vadd.f32 %v258, %v508
    %v517 = vadd.f32 %v259, %v510
    %v518 = vtanh.pop %v514
    %v519 = vmul.f32 %v518, 0.5
    %v520 = vadd.f32 %v519, 0.5
    %v521 = vtanh.pop %v515
    %v522 = vmul.f32 %v521, 0.5
    %v523 = vadd.f32 %v522, 0.5
    %v524 = vtanh.pop %v516
    %v525 = vtanh.pop %v517
    %v526 = vmul.f32 %v525, 0.5
    %v527 = vadd.f32 %v526, 0.5
    %v528 = vmul.f32 %v523, 0.0
    %v529 = vmul.f32 %v520, %v524
    %v530 = vadd.f32 %v528, %v529
    %v531 = vtanh.pop %v530
    %v532 = vmul.f32 %v527, %v531
    %v533 = vpack.c.bf16 %v532, %v532
    %534 = vst [vmem:[#allocation2] sm:$0x3] %v533
    %535 = vmatprep.subr.bf16.mxu0 %v369
    %536 = vmatpush1.bf16.msra.mxu0 %v368
    %537 = vmatprep.subr.bf16.mxu0 %v373
    %538 = vmatpush1.bf16.msra.mxu0 %v372
    %539 = vmatprep.subr.bf16.mxu0 %v377
    %540 = vmatpush1.bf16.msra.mxu0 %v376
    %541 = vmatprep.subr.bf16.mxu0 %v381
    %542 = vmatpush1.bf16.msra.mxu0 %v380
    %543 = vmatprep.subr.bf16.mxu0 %v385
    %544 = vmatpush1.bf16.msra.mxu0 %v384
    %545 = vmatprep.subr.bf16.mxu0 %v389
    %546 = vmatpush1.bf16.msra.mxu0 %v388
    %547 = vmatprep.subr.bf16.mxu0 %v393
    %548 = vmatpush1.bf16.msra.mxu0 %v392
    %549 = vmatprep.subr.bf16.mxu0 %v397
    %550 = vmatpush1.bf16.msra.mxu0 %v396
    %551 = vmatprep.subr.bf16.mxu0 0
    %552 = vmatpush1.bf16.msra.mxu0 0
    %553 = vmatprep.subr.bf16.mxu0 0
    %554 = vmatpush1.bf16.msra.mxu0 0
    %555 = vmatprep.subr.bf16.mxu0 0
    %556 = vmatpush1.bf16.msra.mxu0 0
    %557 = vmatprep.subr.bf16.mxu0 0
    %558 = vmatpush1.bf16.msra.mxu0 0
    %559 = vmatprep.subr.bf16.mxu0 0
    %560 = vmatpush1.bf16.msra.mxu0 0
    %561 = vmatprep.subr.bf16.mxu0 0
    %562 = vmatpush1.bf16.msra.mxu0 0
    %563 = vmatprep.subr.bf16.mxu0 0
    %564 = vmatpush1.bf16.msra.mxu0 0
    %565 = vmatprep.subr.bf16.mxu0 0
    %566 = vmatpush1.bf16.msra.mxu0 0
    %567 = vmatprep.mubr.bf16.mxu0 0
    %568 = vmatmul.mubr.bf16.gmra.mrb[0].mxu0 %v533
    %v569 = vpop.f32.mrb[0].mxu0
    %v570 = vadd.f32 0.0, %v569
    %v571 = vpop.f32.mrb[0].mxu0
    %v572 = vadd.f32 0.0, %v571
    %v573 = vpop.f32.mrb[0].mxu0
    %v574 = vpop.f32.mrb[0].mxu0
    %575 = vdwg.mxu0
    %576 = vmatprep.subr.bf16.mxu0 %v371
    %577 = vmatpush1.bf16.msra.mxu0 %v370
    %578 = vmatprep.subr.bf16.mxu0 %v375
    %579 = vmatpush1.bf16.msra.mxu0 %v374
    %580 = vmatprep.subr.bf16.mxu0 %v379
    %581 = vmatpush1.bf16.msra.mxu0 %v378
    %582 = vmatprep.subr.bf16.mxu0 %v383
    %583 = vmatpush1.bf16.msra.mxu0 %v382
    %584 = vmatprep.subr.bf16.mxu0 %v387
    %585 = vmatpush1.bf16.msra.mxu0 %v386
    %586 = vmatprep.subr.bf16.mxu0 %v391
    %587 = vmatpush1.bf16.msra.mxu0 %v390
    %588 = vmatprep.subr.bf16.mxu0 %v395
    %589 = vmatpush1.bf16.msra.mxu0 %v394
    %590 = vmatprep.subr.bf16.mxu0 %v399
    %591 = vmatpush1.bf16.msra.mxu0 %v398
    %592 = vmatprep.subr.bf16.mxu0 0
    %593 = vmatpush1.bf16.msra.mxu0 0
    %594 = vmatprep.subr.bf16.mxu0 0
    %595 = vmatpush1.bf16.msra.mxu0 0
    %596 = vmatprep.subr.bf16.mxu0 0
    %597 = vmatpush1.bf16.msra.mxu0 0
    %598 = vmatprep.subr.bf16.mxu0 0
    %599 = vmatpush1.bf16.msra.mxu0 0
    %600 = vmatprep.subr.bf16.mxu0 0
    %601 = vmatpush1.bf16.msra.mxu0 0
    %602 = vmatprep.subr.bf16.mxu0 0
    %603 = vmatpush1.bf16.msra.mxu0 0
    %604 = vmatprep.subr.bf16.mxu0 0
    %605 = vmatpush1.bf16.msra.mxu0 0
    %606 = vmatprep.subr.bf16.mxu0 0
    %607 = vmatpush1.bf16.msra.mxu0 0
    %608 = vmatprep.mubr.bf16.mxu0 0
    %609 = vmatmul.mubr.bf16.gmra.mrb[0].mxu0 %v533
    %v610 = vpop.f32.mrb[0].mxu0
    %v611 = vadd.f32 0.0, %v610
    %v612 = vpop.f32.mrb[0].mxu0
    %v613 = vadd.f32 0.0, %v612
    %v614 = vpop.f32.mrb[0].mxu0
    %v615 = vpop.f32.mrb[0].mxu0
    %616 = vdwg.mxu0
    %v621 = vrot.slane %v570, 4
    %v622 = vrot.slane %v572, 4
    %v623 = vrot.slane %v611, 4
    %v624 = vrot.slane %v613, 4
    %v629 = vadd.f32 %v256, %v621
    %v630 = vadd.f32 %v257, %v622
    %v631 = vadd.f32 %v258, %v623
    %v632 = vadd.f32 %v259, %v624
    %v633 = vtanh.pop %v629
    %v634 = vmul.f32 %v633, 0.5
    %v635 = vadd.f32 %v634, 0.5
    %v636 = vtanh.pop %v630
    %v637 = vmul.f32 %v636, 0.5
    %v638 = vadd.f32 %v637, 0.5
    %v639 = vtanh.pop %v631
    %v640 = vtanh.pop %v632
    %v641 = vmul.f32 %v640, 0.5
    %v642 = vadd.f32 %v641, 0.5
    %v644 = vrot.slane %v530, 4
    %v646 = vmul.f32 %v638, %v644
    %v647 = vmul.f32 %v635, %v639
    %v648 = vadd.f32 %v646, %v647
    %v649 = vtanh.pop %v648
    %v650 = vmul.f32 %v642, %v649
    %v651 = vpack.c.bf16 %v650, %v650
    %652 = vst [vmem:[#allocation2] sm:$0xc] %v651
    %v654 = vrot.slane %v651, 2
    %656 = vmatprep.subr.bf16.mxu0 %v369
    %657 = vmatpush1.bf16.msra.mxu0 %v368
    %658 = vmatprep.subr.bf16.mxu0 %v373
    %659 = vmatpush1.bf16.msra.mxu0 %v372
    %660 = vmatprep.subr.bf16.mxu0 %v377
    %661 = vmatpush1.bf16.msra.mxu0 %v376
    %662 = vmatprep.subr.bf16.mxu0 %v381
    %663 = vmatpush1.bf16.msra.mxu0 %v380
    %664 = vmatprep.subr.bf16.mxu0 %v385
    %665 = vmatpush1.bf16.msra.mxu0 %v384
    %666 = vmatprep.subr.bf16.mxu0 %v389
    %667 = vmatpush1.bf16.msra.mxu0 %v388
    %668 = vmatprep.subr.bf16.mxu0 %v393
    %669 = vmatpush1.bf16.msra.mxu0 %v392
    %670 = vmatprep.subr.bf16.mxu0 %v397
    %671 = vmatpush1.bf16.msra.mxu0 %v396
    %672 = vmatprep.subr.bf16.mxu0 0
    %673 = vmatpush1.bf16.msra.mxu0 0
    %674 = vmatprep.subr.bf16.mxu0 0
    %675 = vmatpush1.bf16.msra.mxu0 0
    %676 = vmatprep.subr.bf16.mxu0 0
    %677 = vmatpush1.bf16.msra.mxu0 0
    %678 = vmatprep.subr.bf16.mxu0 0
    %679 = vmatpush1.bf16.msra.mxu0 0
    %680 = vmatprep.subr.bf16.mxu0 0
    %681 = vmatpush1.bf16.msra.mxu0 0
    %682 = vmatprep.subr.bf16.mxu0 0
    %683 = vmatpush1.bf16.msra.mxu0 0
    %684 = vmatprep.subr.bf16.mxu0 0
    %685 = vmatpush1.bf16.msra.mxu0 0
    %686 = vmatprep.subr.bf16.mxu0 0
    %687 = vmatpush1.bf16.msra.mxu0 0
    %688 = vmatprep.mubr.bf16.mxu0 0
    %689 = vmatmul.mubr.bf16.gmra.mrb[0].mxu0 %v654
    %v690 = vpop.f32.mrb[0].mxu0
    %v691 = vadd.f32 0.0, %v690
    %v692 = vpop.f32.mrb[0].mxu0
    %v693 = vadd.f32 0.0, %v692
    %v694 = vpop.f32.mrb[0].mxu0
    %v695 = vpop.f32.mrb[0].mxu0
    %696 = vdwg.mxu0
    %697 = vmatprep.subr.bf16.mxu0 %v371
    %698 = vmatpush1.bf16.msra.mxu0 %v370
    %699 = vmatprep.subr.bf16.mxu0 %v375
    %700 = vmatpush1.bf16.msra.mxu0 %v374
    %701 = vmatprep.subr.bf16.mxu0 %v379
    %702 = vmatpush1.bf16.msra.mxu0 %v378
    %703 = vmatprep.subr.bf16.mxu0 %v383
    %704 = vmatpush1.bf16.msra.mxu0 %v382
    %705 = vmatprep.subr.bf16.mxu0 %v387
    %706 = vmatpush1.bf16.msra.mxu0 %v386
    %707 = vmatprep.subr.bf16.mxu0 %v391
    %708 = vmatpush1.bf16.msra.mxu0 %v390
    %709 = vmatprep.subr.bf16.mxu0 %v395
    %710 = vmatpush1.bf16.msra.mxu0 %v394
    %711 = vmatprep.subr.bf16.mxu0 %v399
    %712 = vmatpush1.bf16.msra.mxu0 %v398
    %713 = vmatprep.subr.bf16.mxu0 0
    %714 = vmatpush1.bf16.msra.mxu0 0
    %715 = vmatprep.subr.bf16.mxu0 0
    %716 = vmatpush1.bf16.msra.mxu0 0
    %717 = vmatprep.subr.bf16.mxu0 0
    %718 = vmatpush1.bf16.msra.mxu0 0
    %719 = vmatprep.subr.bf16.mxu0 0
    %720 = vmatpush1.bf16.msra.mxu0 0
    %721 = vmatprep.subr.bf16.mxu0 0
    %722 = vmatpush1.bf16.msra.mxu0 0
    %723 = vmatprep.subr.bf16.mxu0 0
    %724 = vmatpush1.bf16.msra.mxu0 0
    %725 = vmatprep.subr.bf16.mxu0 0
    %726 = vmatpush1.bf16.msra.mxu0 0
    %727 = vmatprep.subr.bf16.mxu0 0
    %728 = vmatpush1.bf16.msra.mxu0 0
    %729 = vmatprep.mubr.bf16.mxu0 0
    %730 = vmatmul.mubr.bf16.gmra.mrb[0].mxu0 %v654
    %v731 = vpop.f32.mrb[0].mxu0
    %v732 = vadd.f32 0.0, %v731
    %v733 = vpop.f32.mrb[0].mxu0
    %v734 = vadd.f32 0.0, %v733
    %v735 = vpop.f32.mrb[0].mxu0
    %v736 = vpop.f32.mrb[0].mxu0
    %737 = vdwg.mxu0
    %v738 = vadd.f32 %v260, %v691
    %v739 = vadd.f32 %v261, %v693
    %v740 = vadd.f32 %v262, %v732
    %v741 = vadd.f32 %v263, %v734
    %v742 = vtanh.pop %v738
    %v743 = vmul.f32 %v742, 0.5
    %v744 = vadd.f32 %v743, 0.5
    %v745 = vtanh.pop %v739
    %v746 = vmul.f32 %v745, 0.5
    %v747 = vadd.f32 %v746, 0.5
    %v748 = vtanh.pop %v740
    %v749 = vtanh.pop %v741
    %v750 = vmul.f32 %v749, 0.5
    %v751 = vadd.f32 %v750, 0.5
    %v753 = vrot.slane %v648, 4
    %v755 = vmul.f32 %v747, %v753
    %v756 = vmul.f32 %v744, %v748
    %v757 = vadd.f32 %v755, %v756
    %v758 = vtanh.pop %v757
    %v759 = vmul.f32 %v751, %v758
    %v760 = vpack.c.bf16 %v759, %v759
    %v762 = vrot.slane %v760, 4
    %764 = vst [vmem:[#allocation2] sm:$0x30] %v762
    %765 = vmatprep.subr.bf16.mxu0 %v369
    %766 = vmatpush1.bf16.msra.mxu0 %v368
    %767 = vmatprep.subr.bf16.mxu0 %v373
    %768 = vmatpush1.bf16.msra.mxu0 %v372
    %769 = vmatprep.subr.bf16.mxu0 %v377
    %770 = vmatpush1.bf16.msra.mxu0 %v376
    %771 = vmatprep.subr.bf16.mxu0 %v381
    %772 = vmatpush1.bf16.msra.mxu0 %v380
    %773 = vmatprep.subr.bf16.mxu0 %v385
    %774 = vmatpush1.bf16.msra.mxu0 %v384
    %775 = vmatprep.subr.bf16.mxu0 %v389
    %776 = vmatpush1.bf16.msra.mxu0 %v388
    %777 = vmatprep.subr.bf16.mxu0 %v393
    %778 = vmatpush1.bf16.msra.mxu0 %v392
    %779 = vmatprep.subr.bf16.mxu0 %v397
    %780 = vmatpush1.bf16.msra.mxu0 %v396
    %781 = vmatprep.subr.bf16.mxu0 0
    %782 = vmatpush1.bf16.msra.mxu0 0
    %783 = vmatprep.subr.bf16.mxu0 0
    %784 = vmatpush1.bf16.msra.mxu0 0
    %785 = vmatprep.subr.bf16.mxu0 0
    %786 = vmatpush1.bf16.msra.mxu0 0
    %787 = vmatprep.subr.bf16.mxu0 0
    %788 = vmatpush1.bf16.msra.mxu0 0
    %789 = vmatprep.subr.bf16.mxu0 0
    %790 = vmatpush1.bf16.msra.mxu0 0
    %791 = vmatprep.subr.bf16.mxu0 0
    %792 = vmatpush1.bf16.msra.mxu0 0
    %793 = vmatprep.subr.bf16.mxu0 0
    %794 = vmatpush1.bf16.msra.mxu0 0
    %795 = vmatprep.subr.bf16.mxu0 0
    %796 = vmatpush1.bf16.msra.mxu0 0
    %797 = vmatprep.mubr.bf16.mxu0 0
    %798 = vmatmul.mubr.bf16.gmra.mrb[0].mxu0 %v760
    %v799 = vpop.f32.mrb[0].mxu0
    %v800 = vadd.f32 0.0, %v799
    %v801 = vpop.f32.mrb[0].mxu0
    %v802 = vadd.f32 0.0, %v801
    %v803 = vpop.f32.mrb[0].mxu0
    %v804 = vpop.f32.mrb[0].mxu0
    %805 = vdwg.mxu0
    %806 = vmatprep.subr.bf16.mxu0 %v371
    %807 = vmatpush1.bf16.msra.mxu0 %v370
    %808 = vmatprep.subr.bf16.mxu0 %v375
    %809 = vmatpush1.bf16.msra.mxu0 %v374
    %810 = vmatprep.subr.bf16.mxu0 %v379
    %811 = vmatpush1.bf16.msra.mxu0 %v378
    %812 = vmatprep.subr.bf16.mxu0 %v383
    %813 = vmatpush1.bf16.msra.mxu0 %v382
    %814 = vmatprep.subr.bf16.mxu0 %v387
    %815 = vmatpush1.bf16.msra.mxu0 %v386
    %816 = vmatprep.subr.bf16.mxu0 %v391
    %817 = vmatpush1.bf16.msra.mxu0 %v390
    %818 = vmatprep.subr.bf16.mxu0 %v395
    %819 = vmatpush1.bf16.msra.mxu0 %v394
    %820 = vmatprep.subr.bf16.mxu0 %v399
    %821 = vmatpush1.bf16.msra.mxu0 %v398
    %822 = vmatprep.subr.bf16.mxu0 0
    %823 = vmatpush1.bf16.msra.mxu0 0
    %824 = vmatprep.subr.bf16.mxu0 0
    %825 = vmatpush1.bf16.msra.mxu0 0
    %826 = vmatprep.subr.bf16.mxu0 0
    %827 = vmatpush1.bf16.msra.mxu0 0
    %828 = vmatprep.subr.bf16.mxu0 0
    %829 = vmatpush1.bf16.msra.mxu0 0
    %830 = vmatprep.subr.bf16.mxu0 0
    %831 = vmatpush1.bf16.msra.mxu0 0
    %832 = vmatprep.subr.bf16.mxu0 0
    %833 = vmatpush1.bf16.msra.mxu0 0
    %834 = vmatprep.subr.bf16.mxu0 0
    %835 = vmatpush1.bf16.msra.mxu0 0
    %836 = vmatprep.subr.bf16.mxu0 0
    %837 = vmatpush1.bf16.msra.mxu0 0
    %838 = vmatprep.mubr.bf16.mxu0 0
    %839 = vmatmul.mubr.bf16.gmra.mrb[0].mxu0 %v760
    %v840 = vpop.f32.mrb[0].mxu0
    %v841 = vadd.f32 0.0, %v840
    %v842 = vpop.f32.mrb[0].mxu0
    %v843 = vadd.f32 0.0, %v842
    %v844 = vpop.f32.mrb[0].mxu0
    %v845 = vpop.f32.mrb[0].mxu0
    %846 = vdwg.mxu0
    %v851 = vrot.slane %v800, 4
    %v852 = vrot.slane %v802, 4
    %v853 = vrot.slane %v841, 4
    %v854 = vrot.slane %v843, 4
    %v859 = vadd.f32 %v260, %v851
    %v860 = vadd.f32 %v261, %v852
    %v861 = vadd.f32 %v262, %v853
    %v862 = vadd.f32 %v263, %v854
    %v863 = vtanh.pop %v859
    %v864 = vmul.f32 %v863, 0.5
    %v865 = vadd.f32 %v864, 0.5
    %v866 = vtanh.pop %v860
    %v867 = vmul.f32 %v866, 0.5
    %v868 = vadd.f32 %v867, 0.5
    %v869 = vtanh.pop %v861
    %v870 = vtanh.pop %v862
    %v871 = vmul.f32 %v870, 0.5
    %v872 = vadd.f32 %v871, 0.5
    %v874 = vrot.slane %v757, 4
    %v876 = vmul.f32 %v868, %v874
    %v877 = vmul.f32 %v865, %v869
    %v878 = vadd.f32 %v876, %v877
    %v879 = vtanh.pop %v878
    %v880 = vmul.f32 %v872, %v879
    %v881 = vpack.c.bf16 %v880, %v880
    %v883 = vrot.slane %v881, 4
    %885 = vst [vmem:[#allocation2] sm:$0xc0] %v883
    %v886 = vrot.slane %v881, 2
    %888 = vmatprep.subr.bf16.mxu0 %v369
    %889 = vmatpush1.bf16.msra.mxu0 %v368
    %890 = vmatprep.subr.bf16.mxu0 %v373
    %891 = vmatpush1.bf16.msra.mxu0 %v372
    %892 = vmatprep.subr.bf16.mxu0 %v377
    %893 = vmatpush1.bf16.msra.mxu0 %v376
    %894 = vmatprep.subr.bf16.mxu0 %v381
    %895 = vmatpush1.bf16.msra.mxu0 %v380
    %896 = vmatprep.subr.bf16.mxu0 %v385
    %897 = vmatpush1.bf16.msra.mxu0 %v384
    %898 = vmatprep.subr.bf16.mxu0 %v389
    %899 = vmatpush1.bf16.msra.mxu0 %v388
    %900 = vmatprep.subr.bf16.mxu0 %v393
    %901 = vmatpush1.bf16.msra.mxu0 %v392
    %902 = vmatprep.subr.bf16.mxu0 %v397
    %903 = vmatpush1.bf16.msra.mxu0 %v396
    %904 = vmatprep.subr.bf16.mxu0 0
    %905 = vmatpush1.bf16.msra.mxu0 0
    %906 = vmatprep.subr.bf16.mxu0 0
    %907 = vmatpush1.bf16.msra.mxu0 0
    %908 = vmatprep.subr.bf16.mxu0 0
    %909 = vmatpush1.bf16.msra.mxu0 0
    %910 = vmatprep.subr.bf16.mxu0 0
    %911 = vmatpush1.bf16.msra.mxu0 0
    %912 = vmatprep.subr.bf16.mxu0 0
    %913 = vmatpush1.bf16.msra.mxu0 0
    %914 = vmatprep.subr.bf16.mxu0 0
    %915 = vmatpush1.bf16.msra.mxu0 0
    %916 = vmatprep.subr.bf16.mxu0 0
    %917 = vmatpush1.bf16.msra.mxu0 0
    %918 = vmatprep.subr.bf16.mxu0 0
    %919 = vmatpush1.bf16.msra.mxu0 0
    %920 = vmatprep.mubr.bf16.mxu0 0
    %921 = vmatmul.mubr.bf16.gmra.mrb[0].mxu0 %v886
    %v922 = vpop.f32.mrb[0].mxu0
    %v923 = vadd.f32 0.0, %v922
    %v924 = vpop.f32.mrb[0].mxu0
    %v925 = vadd.f32 0.0, %v924
    %v926 = vpop.f32.mrb[0].mxu0
    %v927 = vpop.f32.mrb[0].mxu0
    %928 = vdwg.mxu0
    %929 = vmatprep.subr.bf16.mxu0 %v371
    %930 = vmatpush1.bf16.msra.mxu0 %v370
    %931 = vmatprep.subr.bf16.mxu0 %v375
    %932 = vmatpush1.bf16.msra.mxu0 %v374
    %933 = vmatprep.subr.bf16.mxu0 %v379
    %934 = vmatpush1.bf16.msra.mxu0 %v378
    %935 = vmatprep.subr.bf16.mxu0 %v383
    %936 = vmatpush1.bf16.msra.mxu0 %v382
    %937 = vmatprep.subr.bf16.mxu0 %v387
    %938 = vmatpush1.bf16.msra.mxu0 %v386
    %939 = vmatprep.subr.bf16.mxu0 %v391
    %940 = vmatpush1.bf16.msra.mxu0 %v390
    %941 = vmatprep.subr.bf16.mxu0 %v395
    %942 = vmatpush1.bf16.msra.mxu0 %v394
    %943 = vmatprep.subr.bf16.mxu0 %v399
    %944 = vmatpush1.bf16.msra.mxu0 %v398
    %945 = vmatprep.subr.bf16.mxu0 0
    %946 = vmatpush1.bf16.msra.mxu0 0
    %947 = vmatprep.subr.bf16.mxu0 0
    %948 = vmatpush1.bf16.msra.mxu0 0
    %949 = vmatprep.subr.bf16.mxu0 0
    %950 = vmatpush1.bf16.msra.mxu0 0
    %951 = vmatprep.subr.bf16.mxu0 0
    %952 = vmatpush1.bf16.msra.mxu0 0
    %953 = vmatprep.subr.bf16.mxu0 0
    %954 = vmatpush1.bf16.msra.mxu0 0
    %955 = vmatprep.subr.bf16.mxu0 0
    %956 = vmatpush1.bf16.msra.mxu0 0
    %957 = vmatprep.subr.bf16.mxu0 0
    %958 = vmatpush1.bf16.msra.mxu0 0
    %959 = vmatprep.subr.bf16.mxu0 0
    %960 = vmatpush1.bf16.msra.mxu0 0
    %961 = vmatprep.mubr.bf16.mxu0 0
    %962 = vmatmul.mubr.bf16.gmra.mrb[0].mxu0 %v886
    %v963 = vpop.f32.mrb[0].mxu0
    %v964 = vadd.f32 0.0, %v963
    %v965 = vpop.f32.mrb[0].mxu0
    %v966 = vadd.f32 0.0, %v965
    %v967 = vpop.f32.mrb[0].mxu0
    %v968 = vpop.f32.mrb[0].mxu0
    %969 = vdwg.mxu0
    %v970 = vadd.f32 %v264, %v923
    %v971 = vadd.f32 %v265, %v925
    %v972 = vadd.f32 %v266, %v964
    %v973 = vadd.f32 %v267, %v966
    %v974 = vtanh.pop %v970
    %v975 = vmul.f32 %v974, 0.5
    %v976 = vadd.f32 %v975, 0.5
    %v977 = vtanh.pop %v971
    %v978 = vmul.f32 %v977, 0.5
    %v979 = vadd.f32 %v978, 0.5
    %v980 = vtanh.pop %v972
    %v981 = vtanh.pop %v973
    %v982 = vmul.f32 %v981, 0.5
    %v983 = vadd.f32 %v982, 0.5
    %v985 = vrot.slane %v878, 4
    %v987 = vmul.f32 %v979, %v985
    %v988 = vmul.f32 %v976, %v980
    %v989 = vadd.f32 %v987, %v988
    %v990 = vtanh.pop %v989
    %v991 = vmul.f32 %v983, %v990
    %v992 = vpack.c.bf16 %v991, %v991
    %993 = vst [vmem:[#allocation2 + $0x8] sm:$0x3] %v992
    %994 = vmatprep.subr.bf16.mxu0 %v369
    %995 = vmatpush1.bf16.msra.mxu0 %v368
    %996 = vmatprep.subr.bf16.mxu0 %v373
    %997 = vmatpush1.bf16.msra.mxu0 %v372
    %998 = vmatprep.subr.bf16.mxu0 %v377
    %999 = vmatpush1.bf16.msra.mxu0 %v376
    %1000 = vmatprep.subr.bf16.mxu0 %v381
    %1001 = vmatpush1.bf16.msra.mxu0 %v380
    %1002 = vmatprep.subr.bf16.mxu0 %v385
    %1003 = vmatpush1.bf16.msra.mxu0 %v384
    %1004 = vmatprep.subr.bf16.mxu0 %v389
    %1005 = vmatpush1.bf16.msra.mxu0 %v388
    %1006 = vmatprep.subr.bf16.mxu0 %v393
    %1007 = vmatpush1.bf16.msra.mxu0 %v392
    %1008 = vmatprep.subr.bf16.mxu0 %v397
    %1009 = vmatpush1.bf16.msra.mxu0 %v396
    %1010 = vmatprep.subr.bf16.mxu0 0
    %1011 = vmatpush1.bf16.msra.mxu0 0
    %1012 = vmatprep.subr.bf16.mxu0 0
    %1013 = vmatpush1.bf16.msra.mxu0 0
    %1014 = vmatprep.subr.bf16.mxu0 0
    %1015 = vmatpush1.bf16.msra.mxu0 0
    %1016 = vmatprep.subr.bf16.mxu0 0
    %1017 = vmatpush1.bf16.msra.mxu0 0
    %1018 = vmatprep.subr.bf16.mxu0 0
    %1019 = vmatpush1.bf16.msra.mxu0 0
    %1020 = vmatprep.subr.bf16.mxu0 0
    %1021 = vmatpush1.bf16.msra.mxu0 0
    %1022 = vmatprep.subr.bf16.mxu0 0
    %1023 = vmatpush1.bf16.msra.mxu0 0
    %1024 = vmatprep.subr.bf16.mxu0 0
    %1025 = vmatpush1.bf16.msra.mxu0 0
    %1026 = vmatprep.mubr.bf16.mxu0 0
    %1027 = vmatmul.mubr.bf16.gmra.mrb[0].mxu0 %v992
    %v1028 = vpop.f32.mrb[0].mxu0
    %v1029 = vadd.f32 0.0, %v1028
    %v1030 = vpop.f32.mrb[0].mxu0
    %v1031 = vadd.f32 0.0, %v1030
    %v1032 = vpop.f32.mrb[0].mxu0
    %v1033 = vpop.f32.mrb[0].mxu0
    %1034 = vdwg.mxu0
    %1035 = vmatprep.subr.bf16.mxu0 %v371
    %1036 = vmatpush1.bf16.msra.mxu0 %v370
    %1037 = vmatprep.subr.bf16.mxu0 %v375
    %1038 = vmatpush1.bf16.msra.mxu0 %v374
    %1039 = vmatprep.subr.bf16.mxu0 %v379
    %1040 = vmatpush1.bf16.msra.mxu0 %v378
    %1041 = vmatprep.subr.bf16.mxu0 %v383
    %1042 = vmatpush1.bf16.msra.mxu0 %v382
    %1043 = vmatprep.subr.bf16.mxu0 %v387
    %1044 = vmatpush1.bf16.msra.mxu0 %v386
    %1045 = vmatprep.subr.bf16.mxu0 %v391
    %1046 = vmatpush1.bf16.msra.mxu0 %v390
    %1047 = vmatprep.subr.bf16.mxu0 %v395
    %1048 = vmatpush1.bf16.msra.mxu0 %v394
    %1049 = vmatprep.subr.bf16.mxu0 %v399
    %1050 = vmatpush1.bf16.msra.mxu0 %v398
    %1051 = vmatprep.subr.bf16.mxu0 0
    %1052 = vmatpush1.bf16.msra.mxu0 0
    %1053 = vmatprep.subr.bf16.mxu0 0
    %1054 = vmatpush1.bf16.msra.mxu0 0
    %1055 = vmatprep.subr.bf16.mxu0 0
    %1056 = vmatpush1.bf16.msra.mxu0 0
    %1057 = vmatprep.subr.bf16.mxu0 0
    %1058 = vmatpush1.bf16.msra.mxu0 0
    %1059 = vmatprep.subr.bf16.mxu0 0
    %1060 = vmatpush1.bf16.msra.mxu0 0
    %1061 = vmatprep.subr.bf16.mxu0 0
    %1062 = vmatpush1.bf16.msra.mxu0 0
    %1063 = vmatprep.subr.bf16.mxu0 0
    %1064 = vmatpush1.bf16.msra.mxu0 0
    %1065 = vmatprep.subr.bf16.mxu0 0
    %1066 = vmatpush1.bf16.msra.mxu0 0
    %1067 = vmatprep.mubr.bf16.mxu0 0
    %1068 = vmatmul.mubr.bf16.gmra.mrb[0].mxu0 %v992
    %v1069 = vpop.f32.mrb[0].mxu0
    %v1070 = vadd.f32 0.0, %v1069
    %v1071 = vpop.f32.mrb[0].mxu0
    %v1072 = vadd.f32 0.0, %v1071
    %v1073 = vpop.f32.mrb[0].mxu0
    %v1074 = vpop.f32.mrb[0].mxu0
    %1075 = vdwg.mxu0
    %v1080 = vrot.slane %v1029, 4
    %v1081 = vrot.slane %v1031, 4
    %v1082 = vrot.slane %v1070, 4
    %v1083 = vrot.slane %v1072, 4
    %v1088 = vadd.f32 %v264, %v1080
    %v1089 = vadd.f32 %v265, %v1081
    %v1090 = vadd.f32 %v266, %v1082
    %v1091 = vadd.f32 %v267, %v1083
    %v1092 = vtanh.pop %v1088
    %v1093 = vmul.f32 %v1092, 0.5
    %v1094 = vadd.f32 %v1093, 0.5
    %v1095 = vtanh.pop %v1089
    %v1096 = vmul.f32 %v1095, 0.5
    %v1097 = vadd.f32 %v1096, 0.5
    %v1098 = vtanh.pop %v1090
    %v1099 = vtanh.pop %v1091
    %v1100 = vmul.f32 %v1099, 0.5
    %v1101 = vadd.f32 %v1100, 0.5
    %v1103 = vrot.slane %v989, 4
    %v1105 = vmul.f32 %v1097, %v1103
    %v1106 = vmul.f32 %v1094, %v1098
    %v1107 = vadd.f32 %v1105, %v1106
    %v1108 = vtanh.pop %v1107
    %v1109 = vmul.f32 %v1101, %v1108
    %v1110 = vpack.c.bf16 %v1109, %v1109
    %1111 = vst [vmem:[#allocation2 + $0x8] sm:$0xc] %v1110
    %v1113 = vrot.slane %v1110, 2
    %1115 = vmatprep.subr.bf16.mxu0 %v369
    %1116 = vmatpush1.bf16.msra.mxu0 %v368
    %1117 = vmatprep.subr.bf16.mxu0 %v373
    %1118 = vmatpush1.bf16.msra.mxu0 %v372
    %1119 = vmatprep.subr.bf16.mxu0 %v377
    %1120 = vmatpush1.bf16.msra.mxu0 %v376
    %1121 = vmatprep.subr.bf16.mxu0 %v381
    %1122 = vmatpush1.bf16.msra.mxu0 %v380
    %1123 = vmatprep.subr.bf16.mxu0 %v385
    %1124 = vmatpush1.bf16.msra.mxu0 %v384
    %1125 = vmatprep.subr.bf16.mxu0 %v389
    %1126 = vmatpush1.bf16.msra.mxu0 %v388
    %1127 = vmatprep.subr.bf16.mxu0 %v393
    %1128 = vmatpush1.bf16.msra.mxu0 %v392
    %1129 = vmatprep.subr.bf16.mxu0 %v397
    %1130 = vmatpush1.bf16.msra.mxu0 %v396
    %1131 = vmatprep.subr.bf16.mxu0 0
    %1132 = vmatpush1.bf16.msra.mxu0 0
    %1133 = vmatprep.subr.bf16.mxu0 0
    %1134 = vmatpush1.bf16.msra.mxu0 0
    %1135 = vmatprep.subr.bf16.mxu0 0
    %1136 = vmatpush1.bf16.msra.mxu0 0
    %1137 = vmatprep.subr.bf16.mxu0 0
    %1138 = vmatpush1.bf16.msra.mxu0 0
    %1139 = vmatprep.subr.bf16.mxu0 0
    %1140 = vmatpush1.bf16.msra.mxu0 0
    %1141 = vmatprep.subr.bf16.mxu0 0
    %1142 = vmatpush1.bf16.msra.mxu0 0
    %1143 = vmatprep.subr.bf16.mxu0 0
    %1144 = vmatpush1.bf16.msra.mxu0 0
    %1145 = vmatprep.subr.bf16.mxu0 0
    %1146 = vmatpush1.bf16.msra.mxu0 0
    %1147 = vmatprep.mubr.bf16.mxu0 0
    %1148 = vmatmul.mubr.bf16.gmra.mrb[0].mxu0 %v1113
    %v1149 = vpop.f32.mrb[0].mxu0
    %v1150 = vadd.f32 0.0, %v1149
    %v1151 = vpop.f32.mrb[0].mxu0
    %v1152 = vadd.f32 0.0, %v1151
    %v1153 = vpop.f32.mrb[0].mxu0
    %v1154 = vpop.f32.mrb[0].mxu0
    %1155 = vdwg.mxu0
    %1156 = vmatprep.subr.bf16.mxu0 %v371
    %1157 = vmatpush1.bf16.msra.mxu0 %v370
    %1158 = vmatprep.subr.bf16.mxu0 %v375
    %1159 = vmatpush1.bf16.msra.mxu0 %v374
    %1160 = vmatprep.subr.bf16.mxu0 %v379
    %1161 = vmatpush1.bf16.msra.mxu0 %v378
    %1162 = vmatprep.subr.bf16.mxu0 %v383
    %1163 = vmatpush1.bf16.msra.mxu0 %v382
    %1164 = vmatprep.subr.bf16.mxu0 %v387
    %1165 = vmatpush1.bf16.msra.mxu0 %v386
    %1166 = vmatprep.subr.bf16.mxu0 %v391
    %1167 = vmatpush1.bf16.msra.mxu0 %v390
    %1168 = vmatprep.subr.bf16.mxu0 %v395
    %1169 = vmatpush1.bf16.msra.mxu0 %v394
    %1170 = vmatprep.subr.bf16.mxu0 %v399
    %1171 = vmatpush1.bf16.msra.mxu0 %v398
    %1172 = vmatprep.subr.bf16.mxu0 0
    %1173 = vmatpush1.bf16.msra.mxu0 0
    %1174 = vmatprep.subr.bf16.mxu0 0
    %1175 = vmatpush1.bf16.msra.mxu0 0
    %1176 = vmatprep.subr.bf16.mxu0 0
    %1177 = vmatpush1.bf16.msra.mxu0 0
    %1178 = vmatprep.subr.bf16.mxu0 0
    %1179 = vmatpush1.bf16.msra.mxu0 0
    %1180 = vmatprep.subr.bf16.mxu0 0
    %1181 = vmatpush1.bf16.msra.mxu0 0
    %1182 = vmatprep.subr.bf16.mxu0 0
    %1183 = vmatpush1.bf16.msra.mxu0 0
    %1184 = vmatprep.subr.bf16.mxu0 0
    %1185 = vmatpush1.bf16.msra.mxu0 0
    %1186 = vmatprep.subr.bf16.mxu0 0
    %1187 = vmatpush1.bf16.msra.mxu0 0
    %1188 = vmatprep.mubr.bf16.mxu0 0
    %1189 = vmatmul.mubr.bf16.gmra.mrb[0].mxu0 %v1113
    %v1190 = vpop.f32.mrb[0].mxu0
    %v1191 = vadd.f32 0.0, %v1190
    %v1192 = vpop.f32.mrb[0].mxu0
    %v1193 = vadd.f32 0.0, %v1192
    %v1194 = vpop.f32.mrb[0].mxu0
    %v1195 = vpop.f32.mrb[0].mxu0
    %1196 = vdwg.mxu0
    %v1197 = vadd.f32 %v268, %v1150
    %v1198 = vadd.f32 %v269, %v1152
    %v1199 = vadd.f32 %v270, %v1191
    %v1200 = vadd.f32 %v271, %v1193
    %v1201 = vtanh.pop %v1197
    %v1202 = vmul.f32 %v1201, 0.5
    %v1203 = vadd.f32 %v1202, 0.5
    %v1204 = vtanh.pop %v1198
    %v1205 = vmul.f32 %v1204, 0.5
    %v1206 = vadd.f32 %v1205, 0.5
    %v1207 = vtanh.pop %v1199
    %v1208 = vtanh.pop %v1200
    %v1209 = vmul.f32 %v1208, 0.5
    %v1210 = vadd.f32 %v1209, 0.5
    %v1212 = vrot.slane %v1107, 4
    %v1214 = vmul.f32 %v1206, %v1212
    %v1215 = vmul.f32 %v1203, %v1207
    %v1216 = vadd.f32 %v1214, %v1215
    %v1217 = vtanh.pop %v1216
    %v1218 = vmul.f32 %v1210, %v1217
    %v1219 = vpack.c.bf16 %v1218, %v1218
    %v1221 = vrot.slane %v1219, 4
    %1223 = vst [vmem:[#allocation2 + $0x8] sm:$0x30] %v1221
    %1224 = vmatprep.subr.bf16.mxu0 %v369
    %1225 = vmatpush1.bf16.msra.mxu0 %v368
    %1226 = vmatprep.subr.bf16.mxu0 %v373
    %1227 = vmatpush1.bf16.msra.mxu0 %v372
    %1228 = vmatprep.subr.bf16.mxu0 %v377
    %1229 = vmatpush1.bf16.msra.mxu0 %v376
    %1230 = vmatprep.subr.bf16.mxu0 %v381
    %1231 = vmatpush1.bf16.msra.mxu0 %v380
    %1232 = vmatprep.subr.bf16.mxu0 %v385
    %1233 = vmatpush1.bf16.msra.mxu0 %v384
    %1234 = vmatprep.subr.bf16.mxu0 %v389
    %1235 = vmatpush1.bf16.msra.mxu0 %v388
    %1236 = vmatprep.subr.bf16.mxu0 %v393
    %1237 = vmatpush1.bf16.msra.mxu0 %v392
    %1238 = vmatprep.subr.bf16.mxu0 %v397
    %1239 = vmatpush1.bf16.msra.mxu0 %v396
    %1240 = vmatprep.subr.bf16.mxu0 0
    %1241 = vmatpush1.bf16.msra.mxu0 0
    %1242 = vmatprep.subr.bf16.mxu0 0
    %1243 = vmatpush1.bf16.msra.mxu0 0
    %1244 = vmatprep.subr.bf16.mxu0 0
    %1245 = vmatpush1.bf16.msra.mxu0 0
    %1246 = vmatprep.subr.bf16.mxu0 0
    %1247 = vmatpush1.bf16.msra.mxu0 0
    %1248 = vmatprep.subr.bf16.mxu0 0
    %1249 = vmatpush1.bf16.msra.mxu0 0
    %1250 = vmatprep.subr.bf16.mxu0 0
    %1251 = vmatpush1.bf16.msra.mxu0 0
    %1252 = vmatprep.subr.bf16.mxu0 0
    %1253 = vmatpush1.bf16.msra.mxu0 0
    %1254 = vmatprep.subr.bf16.mxu0 0
    %1255 = vmatpush1.bf16.msra.mxu0 0
    %1256 = vmatprep.mubr.bf16.mxu0 0
    %1257 = vmatmul.mubr.bf16.gmra.mrb[0].mxu0 %v1219
    %v1258 = vpop.f32.mrb[0].mxu0
    %v1259 = vadd.f32 0.0, %v1258
    %v1260 = vpop.f32.mrb[0].mxu0
    %v1261 = vadd.f32 0.0, %v1260
    %v1262 = vpop.f32.mrb[0].mxu0
    %v1263 = vpop.f32.mrb[0].mxu0
    %1264 = vdwg.mxu0
    %1265 = vmatprep.subr.bf16.mxu0 %v371
    %1266 = vmatpush1.bf16.msra.mxu0 %v370
    %1267 = vmatprep.subr.bf16.mxu0 %v375
    %1268 = vmatpush1.bf16.msra.mxu0 %v374
    %1269 = vmatprep.subr.bf16.mxu0 %v379
    %1270 = vmatpush1.bf16.msra.mxu0 %v378
    %1271 = vmatprep.subr.bf16.mxu0 %v383
    %1272 = vmatpush1.bf16.msra.mxu0 %v382
    %1273 = vmatprep.subr.bf16.mxu0 %v387
    %1274 = vmatpush1.bf16.msra.mxu0 %v386
    %1275 = vmatprep.subr.bf16.mxu0 %v391
    %1276 = vmatpush1.bf16.msra.mxu0 %v390
    %1277 = vmatprep.subr.bf16.mxu0 %v395
    %1278 = vmatpush1.bf16.msra.mxu0 %v394
    %1279 = vmatprep.subr.bf16.mxu0 %v399
    %1280 = vmatpush1.bf16.msra.mxu0 %v398
    %1281 = vmatprep.subr.bf16.mxu0 0
    %1282 = vmatpush1.bf16.msra.mxu0 0
    %1283 = vmatprep.subr.bf16.mxu0 0
    %1284 = vmatpush1.bf16.msra.mxu0 0
    %1285 = vmatprep.subr.bf16.mxu0 0
    %1286 = vmatpush1.bf16.msra.mxu0 0
    %1287 = vmatprep.subr.bf16.mxu0 0
    %1288 = vmatpush1.bf16.msra.mxu0 0
    %1289 = vmatprep.subr.bf16.mxu0 0
    %1290 = vmatpush1.bf16.msra.mxu0 0
    %1291 = vmatprep.subr.bf16.mxu0 0
    %1292 = vmatpush1.bf16.msra.mxu0 0
    %1293 = vmatprep.subr.bf16.mxu0 0
    %1294 = vmatpush1.bf16.msra.mxu0 0
    %1295 = vmatprep.subr.bf16.mxu0 0
    %1296 = vmatpush1.bf16.msra.mxu0 0
    %1297 = vmatprep.mubr.bf16.mxu0 0
    %1298 = vmatmul.mubr.bf16.gmra.mrb[0].mxu0 %v1219
    %v1299 = vpop.f32.mrb[0].mxu0
    %v1300 = vadd.f32 0.0, %v1299
    %v1301 = vpop.f32.mrb[0].mxu0
    %v1302 = vadd.f32 0.0, %v1301
    %v1303 = vpop.f32.mrb[0].mxu0
    %v1304 = vpop.f32.mrb[0].mxu0
    %1305 = vdwg.mxu0
    %v1310 = vrot.slane %v1259, 4
    %v1311 = vrot.slane %v1261, 4
    %v1312 = vrot.slane %v1300, 4
    %v1313 = vrot.slane %v1302, 4
    %v1318 = vadd.f32 %v268, %v1310
    %v1319 = vadd.f32 %v269, %v1311
    %v1320 = vadd.f32 %v270, %v1312
    %v1321 = vadd.f32 %v271, %v1313
    %v1322 = vtanh.pop %v1318
    %v1323 = vmul.f32 %v1322, 0.5
    %v1324 = vadd.f32 %v1323, 0.5
    %v1325 = vtanh.pop %v1319
    %v1326 = vmul.f32 %v1325, 0.5
    %v1327 = vadd.f32 %v1326, 0.5
    %v1328 = vtanh.pop %v1320
    %v1329 = vtanh.pop %v1321
    %v1330 = vmul.f32 %v1329, 0.5
    %v1331 = vadd.f32 %v1330, 0.5
    %v1333 = vrot.slane %v1216, 4
    %v1335 = vmul.f32 %v1327, %v1333
    %v1336 = vmul.f32 %v1324, %v1328
    %v1337 = vadd.f32 %v1335, %v1336
    %v1338 = vtanh.pop %v1337
    %v1339 = vmul.f32 %v1331, %v1338
    %v1340 = vpack.c.bf16 %v1339, %v1339
    %v1342 = vrot.slane %v1340, 4
    %1344 = vst [vmem:[#allocation2 + $0x8] sm:$0xc0] %v1342
    %v1345 = vld [vmem:[#allocation2] sm:$0xff]
    %v1346 = vld [vmem:[#allocation2 + $0x8] sm:$0xff]
    %v1347 = vld [vmem:[%s6] sm:$0xf]
    %v1349 = vlaneseq
    %v1350 = vshrl.u32 %v1349, 7
    %v1351 = vsub.s32 0, %v1350
    %v1352 = vrot.slane %v1347, %v1351
    %v1353 = vlaneseq
    %v1354 = vshrl.u32 %v1353, 7
    %v1355 = vsub.s32 1, %v1354
    %v1356 = vrot.slane %v1347, %v1355
    %v1357 = vlaneseq
    %v1358 = vshrl.u32 %v1357, 7
    %v1359 = vsub.s32 2, %v1358
    %v1360 = vrot.slane %v1347, %v1359
    %v1361 = vlaneseq
    %v1362 = vshrl.u32 %v1361, 7
    %v1363 = vsub.s32 3, %v1362
    %v1364 = vrot.slane %v1347, %v1363
    %v1401 = vunpack.c.l.b16 %v108
    %v1402 = vunpack.c.h.b16 %v108
    %v1403 = vunpack.c.l.b16 %v109
    %v1404 = vunpack.c.h.b16 %v109
    %v1405 = vunpack.c.l.b16 %v110
    %v1406 = vunpack.c.h.b16 %v110
    %v1407 = vunpack.c.l.b16 %v111
    %v1408 = vunpack.c.h.b16 %v111
    %v1409 = vunpack.c.l.b16 %v112
    %v1410 = vunpack.c.h.b16 %v112
    %v1411 = vunpack.c.l.b16 %v113
    %v1412 = vunpack.c.h.b16 %v113
    %v1413 = vunpack.c.l.b16 %v114
    %v1414 = vunpack.c.h.b16 %v114
    %v1415 = vunpack.c.l.b16 %v115
    %v1416 = vunpack.c.h.b16 %v115
    %v1417 = vunpack.c.l.b16 %v116
    %v1418 = vunpack.c.h.b16 %v116
    %v1419 = vunpack.c.l.b16 %v117
    %v1420 = vunpack.c.h.b16 %v117
    %v1421 = vunpack.c.l.b16 %v118
    %v1422 = vunpack.c.h.b16 %v118
    %v1423 = vunpack.c.l.b16 %v119
    %v1424 = vunpack.c.h.b16 %v119
    %v1425 = vunpack.c.l.b16 %v120
    %v1426 = vunpack.c.h.b16 %v120
    %v1427 = vunpack.c.l.b16 %v121
    %v1428 = vunpack.c.h.b16 %v121
    %v1429 = vunpack.c.l.b16 %v122
    %v1430 = vunpack.c.h.b16 %v122
    %v1431 = vunpack.c.l.b16 %v123
    %v1432 = vunpack.c.h.b16 %v123
    %v1433 = vunpack.c.l.b16 %v124
    %v1434 = vunpack.c.h.b16 %v124
    %v1435 = vunpack.c.l.b16 %v125
    %v1436 = vunpack.c.h.b16 %v125
    %v1437 = vunpack.c.l.b16 %v126
    %v1438 = vunpack.c.h.b16 %v126
    %v1439 = vunpack.c.l.b16 %v127
    %v1440 = vunpack.c.h.b16 %v127
    %v1441 = vunpack.c.l.b16 %v128
    %v1442 = vunpack.c.h.b16 %v128
    %v1443 = vunpack.c.l.b16 %v129
    %v1444 = vunpack.c.h.b16 %v129
    %v1445 = vunpack.c.l.b16 %v130
    %v1446 = vunpack.c.h.b16 %v130
    %v1447 = vunpack.c.l.b16 %v131
    %v1448 = vunpack.c.h.b16 %v131
    %v1449 = vunpack.c.l.b16 %v132
    %v1450 = vunpack.c.h.b16 %v132
    %v1451 = vunpack.c.l.b16 %v133
    %v1452 = vunpack.c.h.b16 %v133
    %v1453 = vunpack.c.l.b16 %v134
    %v1454 = vunpack.c.h.b16 %v134
    %v1455 = vunpack.c.l.b16 %v135
    %v1456 = vunpack.c.h.b16 %v135
    %v1457 = vunpack.c.l.b16 %v136
    %v1458 = vunpack.c.h.b16 %v136
    %v1459 = vunpack.c.l.b16 %v137
    %v1460 = vunpack.c.h.b16 %v137
    %v1461 = vunpack.c.l.b16 %v138
    %v1462 = vunpack.c.h.b16 %v138
    %v1463 = vunpack.c.l.b16 %v139
    %v1464 = vunpack.c.h.b16 %v139
    %v1465 = vpack.c.b16 %v1405, %v1401
    %v1466 = vpack.c.b16 %v1406, %v1402
    %v1467 = vpack.c.b16 %v1407, %v1403
    %v1468 = vpack.c.b16 %v1408, %v1404
    %v1469 = vpack.c.b16 %v1413, %v1409
    %v1470 = vpack.c.b16 %v1414, %v1410
    %v1471 = vpack.c.b16 %v1415, %v1411
    %v1472 = vpack.c.b16 %v1416, %v1412
    %v1473 = vpack.c.b16 %v1421, %v1417
    %v1474 = vpack.c.b16 %v1422, %v1418
    %v1475 = vpack.c.b16 %v1423, %v1419
    %v1476 = vpack.c.b16 %v1424, %v1420
    %v1477 = vpack.c.b16 %v1429, %v1425
    %v1478 = vpack.c.b16 %v1430, %v1426
    %v1479 = vpack.c.b16 %v1431, %v1427
    %v1480 = vpack.c.b16 %v1432, %v1428
    %v1481 = vpack.c.b16 %v1437, %v1433
    %v1482 = vpack.c.b16 %v1438, %v1434
    %v1483 = vpack.c.b16 %v1439, %v1435
    %v1484 = vpack.c.b16 %v1440, %v1436
    %v1485 = vpack.c.b16 %v1445, %v1441
    %v1486 = vpack.c.b16 %v1446, %v1442
    %v1487 = vpack.c.b16 %v1447, %v1443
    %v1488 = vpack.c.b16 %v1448, %v1444
    %v1489 = vpack.c.b16 %v1453, %v1449
    %v1490 = vpack.c.b16 %v1454, %v1450
    %v1491 = vpack.c.b16 %v1455, %v1451
    %v1492 = vpack.c.b16 %v1456, %v1452
    %v1493 = vpack.c.b16 %v1461, %v1457
    %v1494 = vpack.c.b16 %v1462, %v1458
    %v1495 = vpack.c.b16 %v1463, %v1459
    %v1496 = vpack.c.b16 %v1464, %v1460
    %1529 = vmatprep.subr.bf16.mxu0 %v1466
    %1530 = vmatpush1.bf16.msra.mxu0 %v1465
    %1531 = vmatprep.subr.bf16.mxu0 %v1470
    %1532 = vmatpush1.bf16.msra.mxu0 %v1469
    %1533 = vmatprep.subr.bf16.mxu0 %v1474
    %1534 = vmatpush1.bf16.msra.mxu0 %v1473
    %1535 = vmatprep.subr.bf16.mxu0 %v1478
    %1536 = vmatpush1.bf16.msra.mxu0 %v1477
    %1537 = vmatprep.subr.bf16.mxu0 %v1482
    %1538 = vmatpush1.bf16.msra.mxu0 %v1481
    %1539 = vmatprep.subr.bf16.mxu0 %v1486
    %1540 = vmatpush1.bf16.msra.mxu0 %v1485
    %1541 = vmatprep.subr.bf16.mxu0 %v1490
    %1542 = vmatpush1.bf16.msra.mxu0 %v1489
    %1543 = vmatprep.subr.bf16.mxu0 %v1494
    %1544 = vmatpush1.bf16.msra.mxu0 %v1493
    %1545 = vmatprep.subr.bf16.mxu0 0
    %1546 = vmatpush1.bf16.msra.mxu0 0
    %1547 = vmatprep.subr.bf16.mxu0 0
    %1548 = vmatpush1.bf16.msra.mxu0 0
    %1549 = vmatprep.subr.bf16.mxu0 0
    %1550 = vmatpush1.bf16.msra.mxu0 0
    %1551 = vmatprep.subr.bf16.mxu0 0
    %1552 = vmatpush1.bf16.msra.mxu0 0
    %1553 = vmatprep.subr.bf16.mxu0 0
    %1554 = vmatpush1.bf16.msra.mxu0 0
    %1555 = vmatprep.subr.bf16.mxu0 0
    %1556 = vmatpush1.bf16.msra.mxu0 0
    %1557 = vmatprep.subr.bf16.mxu0 0
    %1558 = vmatpush1.bf16.msra.mxu0 0
    %1559 = vmatprep.subr.bf16.mxu0 0
    %1560 = vmatpush1.bf16.msra.mxu0 0
    %1561 = vmatprep.mubr.bf16.mxu0 0
    %1562 = vmatmul.mubr.bf16.gmra.mrb[0].mxu0 %v1345
    %v1563 = vpop.f32.mrb[0].mxu0
    %v1564 = vadd.f32 %v1352, %v1563
    %v1565 = vpop.f32.mrb[0].mxu0
    %v1566 = vadd.f32 %v1356, %v1565
    %v1567 = vpop.f32.mrb[0].mxu0
    %v1568 = vadd.f32 %v1352, %v1567
    %v1569 = vpop.f32.mrb[0].mxu0
    %v1570 = vadd.f32 %v1356, %v1569
    %1571 = vmatprep.mubr.bf16.mxu0 0
    %1572 = vmatmul.mubr.bf16.gmra.mrb[0].mxu0 %v1346
    %v1573 = vpop.f32.mrb[0].mxu0
    %v1574 = vadd.f32 %v1352, %v1573
    %v1575 = vpop.f32.mrb[0].mxu0
    %v1576 = vadd.f32 %v1356, %v1575
    %v1577 = vpop.f32.mrb[0].mxu0
    %v1578 = vadd.f32 %v1352, %v1577
    %v1579 = vpop.f32.mrb[0].mxu0
    %v1580 = vadd.f32 %v1356, %v1579
    %1581 = vdwg.mxu0
    %1582 = vmatprep.subr.bf16.mxu0 %v1468
    %1583 = vmatpush1.bf16.msra.mxu0 %v1467
    %1584 = vmatprep.subr.bf16.mxu0 %v1472
    %1585 = vmatpush1.bf16.msra.mxu0 %v1471
    %1586 = vmatprep.subr.bf16.mxu0 %v1476
    %1587 = vmatpush1.bf16.msra.mxu0 %v1475
    %1588 = vmatprep.subr.bf16.mxu0 %v1480
    %1589 = vmatpush1.bf16.msra.mxu0 %v1479
    %1590 = vmatprep.subr.bf16.mxu0 %v1484
    %1591 = vmatpush1.bf16.msra.mxu0 %v1483
    %1592 = vmatprep.subr.bf16.mxu0 %v1488
    %1593 = vmatpush1.bf16.msra.mxu0 %v1487
    %1594 = vmatprep.subr.bf16.mxu0 %v1492
    %1595 = vmatpush1.bf16.msra.mxu0 %v1491
    %1596 = vmatprep.subr.bf16.mxu0 %v1496
    %1597 = vmatpush1.bf16.msra.mxu0 %v1495
    %1598 = vmatprep.subr.bf16.mxu0 0
    %1599 = vmatpush1.bf16.msra.mxu0 0
    %1600 = vmatprep.subr.bf16.mxu0 0
    %1601 = vmatpush1.bf16.msra.mxu0 0
    %1602 = vmatprep.subr.bf16.mxu0 0
    %1603 = vmatpush1.bf16.msra.mxu0 0
    %1604 = vmatprep.subr.bf16.mxu0 0
    %1605 = vmatpush1.bf16.msra.mxu0 0
    %1606 = vmatprep.subr.bf16.mxu0 0
    %1607 = vmatpush1.bf16.msra.mxu0 0
    %1608 = vmatprep.subr.bf16.mxu0 0
    %1609 = vmatpush1.bf16.msra.mxu0 0
    %1610 = vmatprep.subr.bf16.mxu0 0
    %1611 = vmatpush1.bf16.msra.mxu0 0
    %1612 = vmatprep.subr.bf16.mxu0 0
    %1613 = vmatpush1.bf16.msra.mxu0 0
    %1614 = vmatprep.mubr.bf16.mxu0 0
    %1615 = vmatmul.mubr.bf16.gmra.mrb[0].mxu0 %v1345
    %v1616 = vpop.f32.mrb[0].mxu0
    %v1617 = vadd.f32 %v1360, %v1616
    %v1618 = vpop.f32.mrb[0].mxu0
    %v1619 = vadd.f32 %v1364, %v1618
    %v1620 = vpop.f32.mrb[0].mxu0
    %v1621 = vadd.f32 %v1360, %v1620
    %v1622 = vpop.f32.mrb[0].mxu0
    %v1623 = vadd.f32 %v1364, %v1622
    %1624 = vmatprep.mubr.bf16.mxu0 0
    %1625 = vmatmul.mubr.bf16.gmra.mrb[0].mxu0 %v1346
    %v1626 = vpop.f32.mrb[0].mxu0
    %v1627 = vadd.f32 %v1360, %v1626
    %v1628 = vpop.f32.mrb[0].mxu0
    %v1629 = vadd.f32 %v1364, %v1628
    %v1630 = vpop.f32.mrb[0].mxu0
    %v1631 = vadd.f32 %v1360, %v1630
    %v1632 = vpop.f32.mrb[0].mxu0
    %v1633 = vadd.f32 %v1364, %v1632
    %1634 = vdwg.mxu0
    %v1667 = vunpack.c.l.b16 %v140
    %v1668 = vunpack.c.h.b16 %v140
    %v1669 = vunpack.c.l.b16 %v141
    %v1670 = vunpack.c.h.b16 %v141
    %v1671 = vunpack.c.l.b16 %v142
    %v1672 = vunpack.c.h.b16 %v142
    %v1673 = vunpack.c.l.b16 %v143
    %v1674 = vunpack.c.h.b16 %v143
    %v1675 = vunpack.c.l.b16 %v144
    %v1676 = vunpack.c.h.b16 %v144
    %v1677 = vunpack.c.l.b16 %v145
    %v1678 = vunpack.c.h.b16 %v145
    %v1679 = vunpack.c.l.b16 %v146
    %v1680 = vunpack.c.h.b16 %v146
    %v1681 = vunpack.c.l.b16 %v147
    %v1682 = vunpack.c.h.b16 %v147
    %v1683 = vunpack.c.l.b16 %v148
    %v1684 = vunpack.c.h.b16 %v148
    %v1685 = vunpack.c.l.b16 %v149
    %v1686 = vunpack.c.h.b16 %v149
    %v1687 = vunpack.c.l.b16 %v150
    %v1688 = vunpack.c.h.b16 %v150
    %v1689 = vunpack.c.l.b16 %v151
    %v1690 = vunpack.c.h.b16 %v151
    %v1691 = vunpack.c.l.b16 %v152
    %v1692 = vunpack.c.h.b16 %v152
    %v1693 = vunpack.c.l.b16 %v153
    %v1694 = vunpack.c.h.b16 %v153
    %v1695 = vunpack.c.l.b16 %v154
    %v1696 = vunpack.c.h.b16 %v154
    %v1697 = vunpack.c.l.b16 %v155
    %v1698 = vunpack.c.h.b16 %v155
    %v1699 = vunpack.c.l.b16 %v156
    %v1700 = vunpack.c.h.b16 %v156
    %v1701 = vunpack.c.l.b16 %v157
    %v1702 = vunpack.c.h.b16 %v157
    %v1703 = vunpack.c.l.b16 %v158
    %v1704 = vunpack.c.h.b16 %v158
    %v1705 = vunpack.c.l.b16 %v159
    %v1706 = vunpack.c.h.b16 %v159
    %v1707 = vunpack.c.l.b16 %v160
    %v1708 = vunpack.c.h.b16 %v160
    %v1709 = vunpack.c.l.b16 %v161
    %v1710 = vunpack.c.h.b16 %v161
    %v1711 = vunpack.c.l.b16 %v162
    %v1712 = vunpack.c.h.b16 %v162
    %v1713 = vunpack.c.l.b16 %v163
    %v1714 = vunpack.c.h.b16 %v163
    %v1715 = vunpack.c.l.b16 %v164
    %v1716 = vunpack.c.h.b16 %v164
    %v1717 = vunpack.c.l.b16 %v165
    %v1718 = vunpack.c.h.b16 %v165
    %v1719 = vunpack.c.l.b16 %v166
    %v1720 = vunpack.c.h.b16 %v166
    %v1721 = vunpack.c.l.b16 %v167
    %v1722 = vunpack.c.h.b16 %v167
    %v1723 = vunpack.c.l.b16 %v168
    %v1724 = vunpack.c.h.b16 %v168
    %v1725 = vunpack.c.l.b16 %v169
    %v1726 = vunpack.c.h.b16 %v169
    %v1727 = vunpack.c.l.b16 %v170
    %v1728 = vunpack.c.h.b16 %v170
    %v1729 = vunpack.c.l.b16 %v171
    %v1730 = vunpack.c.h.b16 %v171
    %v1731 = vpack.c.b16 %v1671, %v1667
    %v1732 = vpack.c.b16 %v1672, %v1668
    %v1733 = vpack.c.b16 %v1673, %v1669
    %v1734 = vpack.c.b16 %v1674, %v1670
    %v1735 = vpack.c.b16 %v1679, %v1675
    %v1736 = vpack.c.b16 %v1680, %v1676
    %v1737 = vpack.c.b16 %v1681, %v1677
    %v1738 = vpack.c.b16 %v1682, %v1678
    %v1739 = vpack.c.b16 %v1687, %v1683
    %v1740 = vpack.c.b16 %v1688, %v1684
    %v1741 = vpack.c.b16 %v1689, %v1685
    %v1742 = vpack.c.b16 %v1690, %v1686
    %v1743 = vpack.c.b16 %v1695, %v1691
    %v1744 = vpack.c.b16 %v1696, %v1692
    %v1745 = vpack.c.b16 %v1697, %v1693
    %v1746 = vpack.c.b16 %v1698, %v1694
    %v1747 = vpack.c.b16 %v1703, %v1699
    %v1748 = vpack.c.b16 %v1704, %v1700
    %v1749 = vpack.c.b16 %v1705, %v1701
    %v1750 = vpack.c.b16 %v1706, %v1702
    %v1751 = vpack.c.b16 %v1711, %v1707
    %v1752 = vpack.c.b16 %v1712, %v1708
    %v1753 = vpack.c.b16 %v1713, %v1709
    %v1754 = vpack.c.b16 %v1714, %v1710
    %v1755 = vpack.c.b16 %v1719, %v1715
    %v1756 = vpack.c.b16 %v1720, %v1716
    %v1757 = vpack.c.b16 %v1721, %v1717
    %v1758 = vpack.c.b16 %v1722, %v1718
    %v1759 = vpack.c.b16 %v1727, %v1723
    %v1760 = vpack.c.b16 %v1728, %v1724
    %v1761 = vpack.c.b16 %v1729, %v1725
    %v1762 = vpack.c.b16 %v1730, %v1726
    %1795 = vmatprep.subr.bf16.mxu0 %v1732
    %1796 = vmatpush1.bf16.msra.mxu0 %v1731
    %1797 = vmatprep.subr.bf16.mxu0 %v1736
    %1798 = vmatpush1.bf16.msra.mxu0 %v1735
    %1799 = vmatprep.subr.bf16.mxu0 %v1740
    %1800 = vmatpush1.bf16.msra.mxu0 %v1739
    %1801 = vmatprep.subr.bf16.mxu0 %v1744
    %1802 = vmatpush1.bf16.msra.mxu0 %v1743
    %1803 = vmatprep.subr.bf16.mxu0 %v1748
    %1804 = vmatpush1.bf16.msra.mxu0 %v1747
    %1805 = vmatprep.subr.bf16.mxu0 %v1752
    %1806 = vmatpush1.bf16.msra.mxu0 %v1751
    %1807 = vmatprep.subr.bf16.mxu0 %v1756
    %1808 = vmatpush1.bf16.msra.mxu0 %v1755
    %1809 = vmatprep.subr.bf16.mxu0 %v1760
    %1810 = vmatpush1.bf16.msra.mxu0 %v1759
    %1811 = vmatprep.subr.bf16.mxu0 0
    %1812 = vmatpush1.bf16.msra.mxu0 0
    %1813 = vmatprep.subr.bf16.mxu0 0
    %1814 = vmatpush1.bf16.msra.mxu0 0
    %1815 = vmatprep.subr.bf16.mxu0 0
    %1816 = vmatpush1.bf16.msra.mxu0 0
    %1817 = vmatprep.subr.bf16.mxu0 0
    %1818 = vmatpush1.bf16.msra.mxu0 0
    %1819 = vmatprep.subr.bf16.mxu0 0
    %1820 = vmatpush1.bf16.msra.mxu0 0
    %1821 = vmatprep.subr.bf16.mxu0 0
    %1822 = vmatpush1.bf16.msra.mxu0 0
    %1823 = vmatprep.subr.bf16.mxu0 0
    %1824 = vmatpush1.bf16.msra.mxu0 0
    %1825 = vmatprep.subr.bf16.mxu0 0
    %1826 = vmatpush1.bf16.msra.mxu0 0
    %1827 = vmatprep.mubr.bf16.mxu0 0
    %1828 = vmatmul.mubr.bf16.gmra.mrb[0].mxu0 0
    %v1829 = vpop.f32.mrb[0].mxu0
    %v1830 = vadd.f32 0.0, %v1829
    %v1831 = vpop.f32.mrb[0].mxu0
    %v1832 = vadd.f32 0.0, %v1831
    %v1833 = vpop.f32.mrb[0].mxu0
    %v1834 = vpop.f32.mrb[0].mxu0
    %1835 = vdwg.mxu0
    %1836 = vmatprep.subr.bf16.mxu0 %v1734
    %1837 = vmatpush1.bf16.msra.mxu0 %v1733
    %1838 = vmatprep.subr.bf16.mxu0 %v1738
    %1839 = vmatpush1.bf16.msra.mxu0 %v1737
    %1840 = vmatprep.subr.bf16.mxu0 %v1742
    %1841 = vmatpush1.bf16.msra.mxu0 %v1741
    %1842 = vmatprep.subr.bf16.mxu0 %v1746
    %1843 = vmatpush1.bf16.msra.mxu0 %v1745
    %1844 = vmatprep.subr.bf16.mxu0 %v1750
    %1845 = vmatpush1.bf16.msra.mxu0 %v1749
    %1846 = vmatprep.subr.bf16.mxu0 %v1754
    %1847 = vmatpush1.bf16.msra.mxu0 %v1753
    %1848 = vmatprep.subr.bf16.mxu0 %v1758
    %1849 = vmatpush1.bf16.msra.mxu0 %v1757
    %1850 = vmatprep.subr.bf16.mxu0 %v1762
    %1851 = vmatpush1.bf16.msra.mxu0 %v1761
    %1852 = vmatprep.subr.bf16.mxu0 0
    %1853 = vmatpush1.bf16.msra.mxu0 0
    %1854 = vmatprep.subr.bf16.mxu0 0
    %1855 = vmatpush1.bf16.msra.mxu0 0
    %1856 = vmatprep.subr.bf16.mxu0 0
    %1857 = vmatpush1.bf16.msra.mxu0 0
    %1858 = vmatprep.subr.bf16.mxu0 0
    %1859 = vmatpush1.bf16.msra.mxu0 0
    %1860 = vmatprep.subr.bf16.mxu0 0
    %1861 = vmatpush1.bf16.msra.mxu0 0
    %1862 = vmatprep.subr.bf16.mxu0 0
    %1863 = vmatpush1.bf16.msra.mxu0 0
    %1864 = vmatprep.subr.bf16.mxu0 0
    %1865 = vmatpush1.bf16.msra.mxu0 0
    %1866 = vmatprep.subr.bf16.mxu0 0
    %1867 = vmatpush1.bf16.msra.mxu0 0
    %1868 = vmatprep.mubr.bf16.mxu0 0
    %1869 = vmatmul.mubr.bf16.gmra.mrb[0].mxu0 0
    %v1870 = vpop.f32.mrb[0].mxu0
    %v1871 = vadd.f32 0.0, %v1870
    %v1872 = vpop.f32.mrb[0].mxu0
    %v1873 = vadd.f32 0.0, %v1872
    %v1874 = vpop.f32.mrb[0].mxu0
    %v1875 = vpop.f32.mrb[0].mxu0
    %1876 = vdwg.mxu0
    %v1877 = vadd.f32 %v1564, %v1830
    %v1878 = vadd.f32 %v1566, %v1832
    %v1879 = vadd.f32 %v1617, %v1871
    %v1880 = vadd.f32 %v1619, %v1873
    %v1881 = vtanh.pop %v1877
    %v1882 = vmul.f32 %v1881, 0.5
    %v1883 = vadd.f32 %v1882, 0.5
    %v1884 = vtanh.pop %v1878
    %v1885 = vmul.f32 %v1884, 0.5
    %v1886 = vadd.f32 %v1885, 0.5
    %v1887 = vtanh.pop %v1879
    %v1888 = vtanh.pop %v1880
    %v1889 = vmul.f32 %v1888, 0.5
    %v1890 = vadd.f32 %v1889, 0.5
    %v1891 = vmul.f32 %v1886, 0.0
    %v1892 = vmul.f32 %v1883, %v1887
    %v1893 = vadd.f32 %v1891, %v1892
    %v1894 = vtanh.pop %v1893
    %v1895 = vmul.f32 %v1890, %v1894
    %v1896 = vpack.c.bf16 %v1895, %v1895
    %1897 = vmatprep.subr.bf16.mxu0 %v1732
    %1898 = vmatpush1.bf16.msra.mxu0 %v1731
    %1899 = vmatprep.subr.bf16.mxu0 %v1736
    %1900 = vmatpush1.bf16.msra.mxu0 %v1735
    %1901 = vmatprep.subr.bf16.mxu0 %v1740
    %1902 = vmatpush1.bf16.msra.mxu0 %v1739
    %1903 = vmatprep.subr.bf16.mxu0 %v1744
    %1904 = vmatpush1.bf16.msra.mxu0 %v1743
    %1905 = vmatprep.subr.bf16.mxu0 %v1748
    %1906 = vmatpush1.bf16.msra.mxu0 %v1747
    %1907 = vmatprep.subr.bf16.mxu0 %v1752
    %1908 = vmatpush1.bf16.msra.mxu0 %v1751
    %1909 = vmatprep.subr.bf16.mxu0 %v1756
    %1910 = vmatpush1.bf16.msra.mxu0 %v1755
    %1911 = vmatprep.subr.bf16.mxu0 %v1760
    %1912 = vmatpush1.bf16.msra.mxu0 %v1759
    %1913 = vmatprep.subr.bf16.mxu0 0
    %1914 = vmatpush1.bf16.msra.mxu0 0
    %1915 = vmatprep.subr.bf16.mxu0 0
    %1916 = vmatpush1.bf16.msra.mxu0 0
    %1917 = vmatprep.subr.bf16.mxu0 0
    %1918 = vmatpush1.bf16.msra.mxu0 0
    %1919 = vmatprep.subr.bf16.mxu0 0
    %1920 = vmatpush1.bf16.msra.mxu0 0
    %1921 = vmatprep.subr.bf16.mxu0 0
    %1922 = vmatpush1.bf16.msra.mxu0 0
    %1923 = vmatprep.subr.bf16.mxu0 0
    %1924 = vmatpush1.bf16.msra.mxu0 0
    %1925 = vmatprep.subr.bf16.mxu0 0
    %1926 = vmatpush1.bf16.msra.mxu0 0
    %1927 = vmatprep.subr.bf16.mxu0 0
    %1928 = vmatpush1.bf16.msra.mxu0 0
    %1929 = vmatprep.mubr.bf16.mxu0 0
    %1930 = vmatmul.mubr.bf16.gmra.mrb[0].mxu0 %v1896
    %v1931 = vpop.f32.mrb[0].mxu0
    %v1932 = vadd.f32 0.0, %v1931
    %v1933 = vpop.f32.mrb[0].mxu0
    %v1934 = vadd.f32 0.0, %v1933
    %v1935 = vpop.f32.mrb[0].mxu0
    %v1936 = vpop.f32.mrb[0].mxu0
    %1937 = vdwg.mxu0
    %1938 = vmatprep.subr.bf16.mxu0 %v1734
    %1939 = vmatpush1.bf16.msra.mxu0 %v1733
    %1940 = vmatprep.subr.bf16.mxu0 %v1738
    %1941 = vmatpush1.bf16.msra.mxu0 %v1737
    %1942 = vmatprep.subr.bf16.mxu0 %v1742
    %1943 = vmatpush1.bf16.msra.mxu0 %v1741
    %1944 = vmatprep.subr.bf16.mxu0 %v1746
    %1945 = vmatpush1.bf16.msra.mxu0 %v1745
    %1946 = vmatprep.subr.bf16.mxu0 %v1750
    %1947 = vmatpush1.bf16.msra.mxu0 %v1749
    %1948 = vmatprep.subr.bf16.mxu0 %v1754
    %1949 = vmatpush1.bf16.msra.mxu0 %v1753
    %1950 = vmatprep.subr.bf16.mxu0 %v1758
    %1951 = vmatpush1.bf16.msra.mxu0 %v1757
    %1952 = vmatprep.subr.bf16.mxu0 %v1762
    %1953 = vmatpush1.bf16.msra.mxu0 %v1761
    %1954 = vmatprep.subr.bf16.mxu0 0
    %1955 = vmatpush1.bf16.msra.mxu0 0
    %1956 = vmatprep.subr.bf16.mxu0 0
    %1957 = vmatpush1.bf16.msra.mxu0 0
    %1958 = vmatprep.subr.bf16.mxu0 0
    %1959 = vmatpush1.bf16.msra.mxu0 0
    %1960 = vmatprep.subr.bf16.mxu0 0
    %1961 = vmatpush1.bf16.msra.mxu0 0
    %1962 = vmatprep.subr.bf16.mxu0 0
    %1963 = vmatpush1.bf16.msra.mxu0 0
    %1964 = vmatprep.subr.bf16.mxu0 0
    %1965 = vmatpush1.bf16.msra.mxu0 0
    %1966 = vmatprep.subr.bf16.mxu0 0
    %1967 = vmatpush1.bf16.msra.mxu0 0
    %1968 = vmatprep.subr.bf16.mxu0 0
    %1969 = vmatpush1.bf16.msra.mxu0 0
    %1970 = vmatprep.mubr.bf16.mxu0 0
    %1971 = vmatmul.mubr.bf16.gmra.mrb[0].mxu0 %v1896
    %v1972 = vpop.f32.mrb[0].mxu0
    %v1973 = vadd.f32 0.0, %v1972
    %v1974 = vpop.f32.mrb[0].mxu0
    %v1975 = vadd.f32 0.0, %v1974
    %v1976 = vpop.f32.mrb[0].mxu0
    %v1977 = vpop.f32.mrb[0].mxu0
    %1978 = vdwg.mxu0
    %v1983 = vrot.slane %v1932, 4
    %v1984 = vrot.slane %v1934, 4
    %v1985 = vrot.slane %v1973, 4
    %v1986 = vrot.slane %v1975, 4
    %v1991 = vadd.f32 %v1564, %v1983
    %v1992 = vadd.f32 %v1566, %v1984
    %v1993 = vadd.f32 %v1617, %v1985
    %v1994 = vadd.f32 %v1619, %v1986
    %v1995 = vtanh.pop %v1991
    %v1996 = vmul.f32 %v1995, 0.5
    %v1997 = vadd.f32 %v1996, 0.5
    %v1998 = vtanh.pop %v1992
    %v1999 = vmul.f32 %v1998, 0.5
    %v2000 = vadd.f32 %v1999, 0.5
    %v2001 = vtanh.pop %v1993
    %v2002 = vtanh.pop %v1994
    %v2003 = vmul.f32 %v2002, 0.5
    %v2004 = vadd.f32 %v2003, 0.5
    %v2006 = vrot.slane %v1893, 4
    %v2008 = vmul.f32 %v2000, %v2006
    %v2009 = vmul.f32 %v1997, %v2001
    %v2010 = vadd.f32 %v2008, %v2009
    %v2011 = vtanh.pop %v2010
    %v2012 = vmul.f32 %v2004, %v2011
    %v2013 = vpack.c.bf16 %v2012, %v2012
    %v2015 = vrot.slane %v2013, 2
    %2017 = vmatprep.subr.bf16.mxu0 %v1732
    %2018 = vmatpush1.bf16.msra.mxu0 %v1731
    %2019 = vmatprep.subr.bf16.mxu0 %v1736
    %2020 = vmatpush1.bf16.msra.mxu0 %v1735
    %2021 = vmatprep.subr.bf16.mxu0 %v1740
    %2022 = vmatpush1.bf16.msra.mxu0 %v1739
    %2023 = vmatprep.subr.bf16.mxu0 %v1744
    %2024 = vmatpush1.bf16.msra.mxu0 %v1743
    %2025 = vmatprep.subr.bf16.mxu0 %v1748
    %2026 = vmatpush1.bf16.msra.mxu0 %v1747
    %2027 = vmatprep.subr.bf16.mxu0 %v1752
    %2028 = vmatpush1.bf16.msra.mxu0 %v1751
    %2029 = vmatprep.subr.bf16.mxu0 %v1756
    %2030 = vmatpush1.bf16.msra.mxu0 %v1755
    %2031 = vmatprep.subr.bf16.mxu0 %v1760
    %2032 = vmatpush1.bf16.msra.mxu0 %v1759
    %2033 = vmatprep.subr.bf16.mxu0 0
    %2034 = vmatpush1.bf16.msra.mxu0 0
    %2035 = vmatprep.subr.bf16.mxu0 0
    %2036 = vmatpush1.bf16.msra.mxu0 0
    %2037 = vmatprep.subr.bf16.mxu0 0
    %2038 = vmatpush1.bf16.msra.mxu0 0
    %2039 = vmatprep.subr.bf16.mxu0 0
    %2040 = vmatpush1.bf16.msra.mxu0 0
    %2041 = vmatprep.subr.bf16.mxu0 0
    %2042 = vmatpush1.bf16.msra.mxu0 0
    %2043 = vmatprep.subr.bf16.mxu0 0
    %2044 = vmatpush1.bf16.msra.mxu0 0
    %2045 = vmatprep.subr.bf16.mxu0 0
    %2046 = vmatpush1.bf16.msra.mxu0 0
    %2047 = vmatprep.subr.bf16.mxu0 0
    %2048 = vmatpush1.bf16.msra.mxu0 0
    %2049 = vmatprep.mubr.bf16.mxu0 0
    %2050 = vmatmul.mubr.bf16.gmra.mrb[0].mxu0 %v2015
    %v2051 = vpop.f32.mrb[0].mxu0
    %v2052 = vadd.f32 0.0, %v2051
    %v2053 = vpop.f32.mrb[0].mxu0
    %v2054 = vadd.f32 0.0, %v2053
    %v2055 = vpop.f32.mrb[0].mxu0
    %v2056 = vpop.f32.mrb[0].mxu0
    %2057 = vdwg.mxu0
    %2058 = vmatprep.subr.bf16.mxu0 %v1734
    %2059 = vmatpush1.bf16.msra.mxu0 %v1733
    %2060 = vmatprep.subr.bf16.mxu0 %v1738
    %2061 = vmatpush1.bf16.msra.mxu0 %v1737
    %2062 = vmatprep.subr.bf16.mxu0 %v1742
    %2063 = vmatpush1.bf16.msra.mxu0 %v1741
    %2064 = vmatprep.subr.bf16.mxu0 %v1746
    %2065 = vmatpush1.bf16.msra.mxu0 %v1745
    %2066 = vmatprep.subr.bf16.mxu0 %v1750
    %2067 = vmatpush1.bf16.msra.mxu0 %v1749
    %2068 = vmatprep.subr.bf16.mxu0 %v1754
    %2069 = vmatpush1.bf16.msra.mxu0 %v1753
    %2070 = vmatprep.subr.bf16.mxu0 %v1758
    %2071 = vmatpush1.bf16.msra.mxu0 %v1757
    %2072 = vmatprep.subr.bf16.mxu0 %v1762
    %2073 = vmatpush1.bf16.msra.mxu0 %v1761
    %2074 = vmatprep.subr.bf16.mxu0 0
    %2075 = vmatpush1.bf16.msra.mxu0 0
    %2076 = vmatprep.subr.bf16.mxu0 0
    %2077 = vmatpush1.bf16.msra.mxu0 0
    %2078 = vmatprep.subr.bf16.mxu0 0
    %2079 = vmatpush1.bf16.msra.mxu0 0
    %2080 = vmatprep.subr.bf16.mxu0 0
    %2081 = vmatpush1.bf16.msra.mxu0 0
    %2082 = vmatprep.subr.bf16.mxu0 0
    %2083 = vmatpush1.bf16.msra.mxu0 0
    %2084 = vmatprep.subr.bf16.mxu0 0
    %2085 = vmatpush1.bf16.msra.mxu0 0
    %2086 = vmatprep.subr.bf16.mxu0 0
    %2087 = vmatpush1.bf16.msra.mxu0 0
    %2088 = vmatprep.subr.bf16.mxu0 0
    %2089 = vmatpush1.bf16.msra.mxu0 0
    %2090 = vmatprep.mubr.bf16.mxu0 0
    %2091 = vmatmul.mubr.bf16.gmra.mrb[0].mxu0 %v2015
    %v2092 = vpop.f32.mrb[0].mxu0
    %v2093 = vadd.f32 0.0, %v2092
    %v2094 = vpop.f32.mrb[0].mxu0
    %v2095 = vadd.f32 0.0, %v2094
    %v2096 = vpop.f32.mrb[0].mxu0
    %v2097 = vpop.f32.mrb[0].mxu0
    %2098 = vdwg.mxu0
    %v2099 = vadd.f32 %v1568, %v2052
    %v2100 = vadd.f32 %v1570, %v2054
    %v2101 = vadd.f32 %v1621, %v2093
    %v2102 = vadd.f32 %v1623, %v2095
    %v2103 = vtanh.pop %v2099
    %v2104 = vmul.f32 %v2103, 0.5
    %v2105 = vadd.f32 %v2104, 0.5
    %v2106 = vtanh.pop %v2100
    %v2107 = vmul.f32 %v2106, 0.5
    %v2108 = vadd.f32 %v2107, 0.5
    %v2109 = vtanh.pop %v2101
    %v2110 = vtanh.pop %v2102
    %v2111 = vmul.f32 %v2110, 0.5
    %v2112 = vadd.f32 %v2111, 0.5
    %v2114 = vrot.slane %v2010, 4
    %v2116 = vmul.f32 %v2108, %v2114
    %v2117 = vmul.f32 %v2105, %v2109
    %v2118 = vadd.f32 %v2116, %v2117
    %v2119 = vtanh.pop %v2118
    %v2120 = vmul.f32 %v2112, %v2119
    %v2121 = vpack.c.bf16 %v2120, %v2120
    %2122 = vmatprep.subr.bf16.mxu0 %v1732
    %2123 = vmatpush1.bf16.msra.mxu0 %v1731
    %2124 = vmatprep.subr.bf16.mxu0 %v1736
    %2125 = vmatpush1.bf16.msra.mxu0 %v1735
    %2126 = vmatprep.subr.bf16.mxu0 %v1740
    %2127 = vmatpush1.bf16.msra.mxu0 %v1739
    %2128 = vmatprep.subr.bf16.mxu0 %v1744
    %2129 = vmatpush1.bf16.msra.mxu0 %v1743
    %2130 = vmatprep.subr.bf16.mxu0 %v1748
    %2131 = vmatpush1.bf16.msra.mxu0 %v1747
    %2132 = vmatprep.subr.bf16.mxu0 %v1752
    %2133 = vmatpush1.bf16.msra.mxu0 %v1751
    %2134 = vmatprep.subr.bf16.mxu0 %v1756
    %2135 = vmatpush1.bf16.msra.mxu0 %v1755
    %2136 = vmatprep.subr.bf16.mxu0 %v1760
    %2137 = vmatpush1.bf16.msra.mxu0 %v1759
    %2138 = vmatprep.subr.bf16.mxu0 0
    %2139 = vmatpush1.bf16.msra.mxu0 0
    %2140 = vmatprep.subr.bf16.mxu0 0
    %2141 = vmatpush1.bf16.msra.mxu0 0
    %2142 = vmatprep.subr.bf16.mxu0 0
    %2143 = vmatpush1.bf16.msra.mxu0 0
    %2144 = vmatprep.subr.bf16.mxu0 0
    %2145 = vmatpush1.bf16.msra.mxu0 0
    %2146 = vmatprep.subr.bf16.mxu0 0
    %2147 = vmatpush1.bf16.msra.mxu0 0
    %2148 = vmatprep.subr.bf16.mxu0 0
    %2149 = vmatpush1.bf16.msra.mxu0 0
    %2150 = vmatprep.subr.bf16.mxu0 0
    %2151 = vmatpush1.bf16.msra.mxu0 0
    %2152 = vmatprep.subr.bf16.mxu0 0
    %2153 = vmatpush1.bf16.msra.mxu0 0
    %2154 = vmatprep.mubr.bf16.mxu0 0
    %2155 = vmatmul.mubr.bf16.gmra.mrb[0].mxu0 %v2121
    %v2156 = vpop.f32.mrb[0].mxu0
    %v2157 = vadd.f32 0.0, %v2156
    %v2158 = vpop.f32.mrb[0].mxu0
    %v2159 = vadd.f32 0.0, %v2158
    %v2160 = vpop.f32.mrb[0].mxu0
    %v2161 = vpop.f32.mrb[0].mxu0
    %2162 = vdwg.mxu0
    %2163 = vmatprep.subr.bf16.mxu0 %v1734
    %2164 = vmatpush1.bf16.msra.mxu0 %v1733
    %2165 = vmatprep.subr.bf16.mxu0 %v1738
    %2166 = vmatpush1.bf16.msra.mxu0 %v1737
    %2167 = vmatprep.subr.bf16.mxu0 %v1742
    %2168 = vmatpush1.bf16.msra.mxu0 %v1741
    %2169 = vmatprep.subr.bf16.mxu0 %v1746
    %2170 = vmatpush1.bf16.msra.mxu0 %v1745
    %2171 = vmatprep.subr.bf16.mxu0 %v1750
    %2172 = vmatpush1.bf16.msra.mxu0 %v1749
    %2173 = vmatprep.subr.bf16.mxu0 %v1754
    %2174 = vmatpush1.bf16.msra.mxu0 %v1753
    %2175 = vmatprep.subr.bf16.mxu0 %v1758
    %2176 = vmatpush1.bf16.msra.mxu0 %v1757
    %2177 = vmatprep.subr.bf16.mxu0 %v1762
    %2178 = vmatpush1.bf16.msra.mxu0 %v1761
    %2179 = vmatprep.subr.bf16.mxu0 0
    %2180 = vmatpush1.bf16.msra.mxu0 0
    %2181 = vmatprep.subr.bf16.mxu0 0
    %2182 = vmatpush1.bf16.msra.mxu0 0
    %2183 = vmatprep.subr.bf16.mxu0 0
    %2184 = vmatpush1.bf16.msra.mxu0 0
    %2185 = vmatprep.subr.bf16.mxu0 0
    %2186 = vmatpush1.bf16.msra.mxu0 0
    %2187 = vmatprep.subr.bf16.mxu0 0
    %2188 = vmatpush1.bf16.msra.mxu0 0
    %2189 = vmatprep.subr.bf16.mxu0 0
    %2190 = vmatpush1.bf16.msra.mxu0 0
    %2191 = vmatprep.subr.bf16.mxu0 0
    %2192 = vmatpush1.bf16.msra.mxu0 0
    %2193 = vmatprep.subr.bf16.mxu0 0
    %2194 = vmatpush1.bf16.msra.mxu0 0
    %2195 = vmatprep.mubr.bf16.mxu0 0
    %2196 = vmatmul.mubr.bf16.gmra.mrb[0].mxu0 %v2121
    %v2197 = vpop.f32.mrb[0].mxu0
    %v2198 = vadd.f32 0.0, %v2197
    %v2199 = vpop.f32.mrb[0].mxu0
    %v2200 = vadd.f32 0.0, %v2199
    %v2201 = vpop.f32.mrb[0].mxu0
    %v2202 = vpop.f32.mrb[0].mxu0
    %2203 = vdwg.mxu0
    %v2208 = vrot.slane %v2157, 4
    %v2209 = vrot.slane %v2159, 4
    %v2210 = vrot.slane %v2198, 4
    %v2211 = vrot.slane %v2200, 4
    %v2216 = vadd.f32 %v1568, %v2208
    %v2217 = vadd.f32 %v1570, %v2209
    %v2218 = vadd.f32 %v1621, %v2210
    %v2219 = vadd.f32 %v1623, %v2211
    %v2220 = vtanh.pop %v2216
    %v2221 = vmul.f32 %v2220, 0.5
    %v2222 = vadd.f32 %v2221, 0.5
    %v2223 = vtanh.pop %v2217
    %v2224 = vmul.f32 %v2223, 0.5
    %v2225 = vadd.f32 %v2224, 0.5
    %v2226 = vtanh.pop %v2218
    %v2227 = vtanh.pop %v2219
    %v2228 = vmul.f32 %v2227, 0.5
    %v2229 = vadd.f32 %v2228, 0.5
    %v2231 = vrot.slane %v2118, 4
    %v2233 = vmul.f32 %v2225, %v2231
    %v2234 = vmul.f32 %v2222, %v2226
    %v2235 = vadd.f32 %v2233, %v2234
    %v2236 = vtanh.pop %v2235
    %v2237 = vmul.f32 %v2229, %v2236
    %v2238 = vpack.c.bf16 %v2237, %v2237
    %v2240 = vrot.slane %v2238, 2
    %2242 = vmatprep.subr.bf16.mxu0 %v1732
    %2243 = vmatpush1.bf16.msra.mxu0 %v1731
    %2244 = vmatprep.subr.bf16.mxu0 %v1736
    %2245 = vmatpush1.bf16.msra.mxu0 %v1735
    %2246 = vmatprep.subr.bf16.mxu0 %v1740
    %2247 = vmatpush1.bf16.msra.mxu0 %v1739
    %2248 = vmatprep.subr.bf16.mxu0 %v1744
    %2249 = vmatpush1.bf16.msra.mxu0 %v1743
    %2250 = vmatprep.subr.bf16.mxu0 %v1748
    %2251 = vmatpush1.bf16.msra.mxu0 %v1747
    %2252 = vmatprep.subr.bf16.mxu0 %v1752
    %2253 = vmatpush1.bf16.msra.mxu0 %v1751
    %2254 = vmatprep.subr.bf16.mxu0 %v1756
    %2255 = vmatpush1.bf16.msra.mxu0 %v1755
    %2256 = vmatprep.subr.bf16.mxu0 %v1760
    %2257 = vmatpush1.bf16.msra.mxu0 %v1759
    %2258 = vmatprep.subr.bf16.mxu0 0
    %2259 = vmatpush1.bf16.msra.mxu0 0
    %2260 = vmatprep.subr.bf16.mxu0 0
    %2261 = vmatpush1.bf16.msra.mxu0 0
    %2262 = vmatprep.subr.bf16.mxu0 0
    %2263 = vmatpush1.bf16.msra.mxu0 0
    %2264 = vmatprep.subr.bf16.mxu0 0
    %2265 = vmatpush1.bf16.msra.mxu0 0
    %2266 = vmatprep.subr.bf16.mxu0 0
    %2267 = vmatpush1.bf16.msra.mxu0 0
    %2268 = vmatprep.subr.bf16.mxu0 0
    %2269 = vmatpush1.bf16.msra.mxu0 0
    %2270 = vmatprep.subr.bf16.mxu0 0
    %2271 = vmatpush1.bf16.msra.mxu0 0
    %2272 = vmatprep.subr.bf16.mxu0 0
    %2273 = vmatpush1.bf16.msra.mxu0 0
    %2274 = vmatprep.mubr.bf16.mxu0 0
    %2275 = vmatmul.mubr.bf16.gmra.mrb[0].mxu0 %v2240
    %v2276 = vpop.f32.mrb[0].mxu0
    %v2277 = vadd.f32 0.0, %v2276
    %v2278 = vpop.f32.mrb[0].mxu0
    %v2279 = vadd.f32 0.0, %v2278
    %v2280 = vpop.f32.mrb[0].mxu0
    %v2281 = vpop.f32.mrb[0].mxu0
    %2282 = vdwg.mxu0
    %2283 = vmatprep.subr.bf16.mxu0 %v1734
    %2284 = vmatpush1.bf16.msra.mxu0 %v1733
    %2285 = vmatprep.subr.bf16.mxu0 %v1738
    %2286 = vmatpush1.bf16.msra.mxu0 %v1737
    %2287 = vmatprep.subr.bf16.mxu0 %v1742
    %2288 = vmatpush1.bf16.msra.mxu0 %v1741
    %2289 = vmatprep.subr.bf16.mxu0 %v1746
    %2290 = vmatpush1.bf16.msra.mxu0 %v1745
    %2291 = vmatprep.subr.bf16.mxu0 %v1750
    %2292 = vmatpush1.bf16.msra.mxu0 %v1749
    %2293 = vmatprep.subr.bf16.mxu0 %v1754
    %2294 = vmatpush1.bf16.msra.mxu0 %v1753
    %2295 = vmatprep.subr.bf16.mxu0 %v1758
    %2296 = vmatpush1.bf16.msra.mxu0 %v1757
    %2297 = vmatprep.subr.bf16.mxu0 %v1762
    %2298 = vmatpush1.bf16.msra.mxu0 %v1761
    %2299 = vmatprep.subr.bf16.mxu0 0
    %2300 = vmatpush1.bf16.msra.mxu0 0
    %2301 = vmatprep.subr.bf16.mxu0 0
    %2302 = vmatpush1.bf16.msra.mxu0 0
    %2303 = vmatprep.subr.bf16.mxu0 0
    %2304 = vmatpush1.bf16.msra.mxu0 0
    %2305 = vmatprep.subr.bf16.mxu0 0
    %2306 = vmatpush1.bf16.msra.mxu0 0
    %2307 = vmatprep.subr.bf16.mxu0 0
    %2308 = vmatpush1.bf16.msra.mxu0 0
    %2309 = vmatprep.subr.bf16.mxu0 0
    %2310 = vmatpush1.bf16.msra.mxu0 0
    %2311 = vmatprep.subr.bf16.mxu0 0
    %2312 = vmatpush1.bf16.msra.mxu0 0
    %2313 = vmatprep.subr.bf16.mxu0 0
    %2314 = vmatpush1.bf16.msra.mxu0 0
    %2315 = vmatprep.mubr.bf16.mxu0 0
    %2316 = vmatmul.mubr.bf16.gmra.mrb[0].mxu0 %v2240
    %v2317 = vpop.f32.mrb[0].mxu0
    %v2318 = vadd.f32 0.0, %v2317
    %v2319 = vpop.f32.mrb[0].mxu0
    %v2320 = vadd.f32 0.0, %v2319
    %v2321 = vpop.f32.mrb[0].mxu0
    %v2322 = vpop.f32.mrb[0].mxu0
    %2323 = vdwg.mxu0
    %v2324 = vadd.f32 %v1574, %v2277
    %v2325 = vadd.f32 %v1576, %v2279
    %v2326 = vadd.f32 %v1627, %v2318
    %v2327 = vadd.f32 %v1629, %v2320
    %v2328 = vtanh.pop %v2324
    %v2329 = vmul.f32 %v2328, 0.5
    %v2330 = vadd.f32 %v2329, 0.5
    %v2331 = vtanh.pop %v2325
    %v2332 = vmul.f32 %v2331, 0.5
    %v2333 = vadd.f32 %v2332, 0.5
    %v2334 = vtanh.pop %v2326
    %v2335 = vtanh.pop %v2327
    %v2336 = vmul.f32 %v2335, 0.5
    %v2337 = vadd.f32 %v2336, 0.5
    %v2339 = vrot.slane %v2235, 4
    %v2341 = vmul.f32 %v2333, %v2339
    %v2342 = vmul.f32 %v2330, %v2334
    %v2343 = vadd.f32 %v2341, %v2342
    %v2344 = vtanh.pop %v2343
    %v2345 = vmul.f32 %v2337, %v2344
    %v2346 = vpack.c.bf16 %v2345, %v2345
    %2347 = vmatprep.subr.bf16.mxu0 %v1732
    %2348 = vmatpush1.bf16.msra.mxu0 %v1731
    %2349 = vmatprep.subr.bf16.mxu0 %v1736
    %2350 = vmatpush1.bf16.msra.mxu0 %v1735
    %2351 = vmatprep.subr.bf16.mxu0 %v1740
    %2352 = vmatpush1.bf16.msra.mxu0 %v1739
    %2353 = vmatprep.subr.bf16.mxu0 %v1744
    %2354 = vmatpush1.bf16.msra.mxu0 %v1743
    %2355 = vmatprep.subr.bf16.mxu0 %v1748
    %2356 = vmatpush1.bf16.msra.mxu0 %v1747
    %2357 = vmatprep.subr.bf16.mxu0 %v1752
    %2358 = vmatpush1.bf16.msra.mxu0 %v1751
    %2359 = vmatprep.subr.bf16.mxu0 %v1756
    %2360 = vmatpush1.bf16.msra.mxu0 %v1755
    %2361 = vmatprep.subr.bf16.mxu0 %v1760
    %2362 = vmatpush1.bf16.msra.mxu0 %v1759
    %2363 = vmatprep.subr.bf16.mxu0 0
    %2364 = vmatpush1.bf16.msra.mxu0 0
    %2365 = vmatprep.subr.bf16.mxu0 0
    %2366 = vmatpush1.bf16.msra.mxu0 0
    %2367 = vmatprep.subr.bf16.mxu0 0
    %2368 = vmatpush1.bf16.msra.mxu0 0
    %2369 = vmatprep.subr.bf16.mxu0 0
    %2370 = vmatpush1.bf16.msra.mxu0 0
    %2371 = vmatprep.subr.bf16.mxu0 0
    %2372 = vmatpush1.bf16.msra.mxu0 0
    %2373 = vmatprep.subr.bf16.mxu0 0
    %2374 = vmatpush1.bf16.msra.mxu0 0
    %2375 = vmatprep.subr.bf16.mxu0 0
    %2376 = vmatpush1.bf16.msra.mxu0 0
    %2377 = vmatprep.subr.bf16.mxu0 0
    %2378 = vmatpush1.bf16.msra.mxu0 0
    %2379 = vmatprep.mubr.bf16.mxu0 0
    %2380 = vmatmul.mubr.bf16.gmra.mrb[0].mxu0 %v2346
    %v2381 = vpop.f32.mrb[0].mxu0
    %v2382 = vadd.f32 0.0, %v2381
    %v2383 = vpop.f32.mrb[0].mxu0
    %v2384 = vadd.f32 0.0, %v2383
    %v2385 = vpop.f32.mrb[0].mxu0
    %v2386 = vpop.f32.mrb[0].mxu0
    %2387 = vdwg.mxu0
    %2388 = vmatprep.subr.bf16.mxu0 %v1734
    %2389 = vmatpush1.bf16.msra.mxu0 %v1733
    %2390 = vmatprep.subr.bf16.mxu0 %v1738
    %2391 = vmatpush1.bf16.msra.mxu0 %v1737
    %2392 = vmatprep.subr.bf16.mxu0 %v1742
    %2393 = vmatpush1.bf16.msra.mxu0 %v1741
    %2394 = vmatprep.subr.bf16.mxu0 %v1746
    %2395 = vmatpush1.bf16.msra.mxu0 %v1745
    %2396 = vmatprep.subr.bf16.mxu0 %v1750
    %2397 = vmatpush1.bf16.msra.mxu0 %v1749
    %2398 = vmatprep.subr.bf16.mxu0 %v1754
    %2399 = vmatpush1.bf16.msra.mxu0 %v1753
    %2400 = vmatprep.subr.bf16.mxu0 %v1758
    %2401 = vmatpush1.bf16.msra.mxu0 %v1757
    %2402 = vmatprep.subr.bf16.mxu0 %v1762
    %2403 = vmatpush1.bf16.msra.mxu0 %v1761
    %2404 = vmatprep.subr.bf16.mxu0 0
    %2405 = vmatpush1.bf16.msra.mxu0 0
    %2406 = vmatprep.subr.bf16.mxu0 0
    %2407 = vmatpush1.bf16.msra.mxu0 0
    %2408 = vmatprep.subr.bf16.mxu0 0
    %2409 = vmatpush1.bf16.msra.mxu0 0
    %2410 = vmatprep.subr.bf16.mxu0 0
    %2411 = vmatpush1.bf16.msra.mxu0 0
    %2412 = vmatprep.subr.bf16.mxu0 0
    %2413 = vmatpush1.bf16.msra.mxu0 0
    %2414 = vmatprep.subr.bf16.mxu0 0
    %2415 = vmatpush1.bf16.msra.mxu0 0
    %2416 = vmatprep.subr.bf16.mxu0 0
    %2417 = vmatpush1.bf16.msra.mxu0 0
    %2418 = vmatprep.subr.bf16.mxu0 0
    %2419 = vmatpush1.bf16.msra.mxu0 0
    %2420 = vmatprep.mubr.bf16.mxu0 0
    %2421 = vmatmul.mubr.bf16.gmra.mrb[0].mxu0 %v2346
    %v2422 = vpop.f32.mrb[0].mxu0
    %v2423 = vadd.f32 0.0, %v2422
    %v2424 = vpop.f32.mrb[0].mxu0
    %v2425 = vadd.f32 0.0, %v2424
    %v2426 = vpop.f32.mrb[0].mxu0
    %v2427 = vpop.f32.mrb[0].mxu0
    %2428 = vdwg.mxu0
    %v2433 = vrot.slane %v2382, 4
    %v2434 = vrot.slane %v2384, 4
    %v2435 = vrot.slane %v2423, 4
    %v2436 = vrot.slane %v2425, 4
    %v2441 = vadd.f32 %v1574, %v2433
    %v2442 = vadd.f32 %v1576, %v2434
    %v2443 = vadd.f32 %v1627, %v2435
    %v2444 = vadd.f32 %v1629, %v2436
    %v2445 = vtanh.pop %v2441
    %v2446 = vmul.f32 %v2445, 0.5
    %v2447 = vadd.f32 %v2446, 0.5
    %v2448 = vtanh.pop %v2442
    %v2449 = vmul.f32 %v2448, 0.5
    %v2450 = vadd.f32 %v2449, 0.5
    %v2451 = vtanh.pop %v2443
    %v2452 = vtanh.pop %v2444
    %v2453 = vmul.f32 %v2452, 0.5
    %v2454 = vadd.f32 %v2453, 0.5
    %v2456 = vrot.slane %v2343, 4
    %v2458 = vmul.f32 %v2450, %v2456
    %v2459 = vmul.f32 %v2447, %v2451
    %v2460 = vadd.f32 %v2458, %v2459
    %v2461 = vtanh.pop %v2460
    %v2462 = vmul.f32 %v2454, %v2461
    %v2463 = vpack.c.bf16 %v2462, %v2462
    %v2465 = vrot.slane %v2463, 2
    %2467 = vmatprep.subr.bf16.mxu0 %v1732
    %2468 = vmatpush1.bf16.msra.mxu0 %v1731
    %2469 = vmatprep.subr.bf16.mxu0 %v1736
    %2470 = vmatpush1.bf16.msra.mxu0 %v1735
    %2471 = vmatprep.subr.bf16.mxu0 %v1740
    %2472 = vmatpush1.bf16.msra.mxu0 %v1739
    %2473 = vmatprep.subr.bf16.mxu0 %v1744
    %2474 = vmatpush1.bf16.msra.mxu0 %v1743
    %2475 = vmatprep.subr.bf16.mxu0 %v1748
    %2476 = vmatpush1.bf16.msra.mxu0 %v1747
    %2477 = vmatprep.subr.bf16.mxu0 %v1752
    %2478 = vmatpush1.bf16.msra.mxu0 %v1751
    %2479 = vmatprep.subr.bf16.mxu0 %v1756
    %2480 = vmatpush1.bf16.msra.mxu0 %v1755
    %2481 = vmatprep.subr.bf16.mxu0 %v1760
    %2482 = vmatpush1.bf16.msra.mxu0 %v1759
    %2483 = vmatprep.subr.bf16.mxu0 0
    %2484 = vmatpush1.bf16.msra.mxu0 0
    %2485 = vmatprep.subr.bf16.mxu0 0
    %2486 = vmatpush1.bf16.msra.mxu0 0
    %2487 = vmatprep.subr.bf16.mxu0 0
    %2488 = vmatpush1.bf16.msra.mxu0 0
    %2489 = vmatprep.subr.bf16.mxu0 0
    %2490 = vmatpush1.bf16.msra.mxu0 0
    %2491 = vmatprep.subr.bf16.mxu0 0
    %2492 = vmatpush1.bf16.msra.mxu0 0
    %2493 = vmatprep.subr.bf16.mxu0 0
    %2494 = vmatpush1.bf16.msra.mxu0 0
    %2495 = vmatprep.subr.bf16.mxu0 0
    %2496 = vmatpush1.bf16.msra.mxu0 0
    %2497 = vmatprep.subr.bf16.mxu0 0
    %2498 = vmatpush1.bf16.msra.mxu0 0
    %2499 = vmatprep.mubr.bf16.mxu0 0
    %2500 = vmatmul.mubr.bf16.gmra.mrb[0].mxu0 %v2465
    %v2501 = vpop.f32.mrb[0].mxu0
    %v2502 = vadd.f32 0.0, %v2501
    %v2503 = vpop.f32.mrb[0].mxu0
    %v2504 = vadd.f32 0.0, %v2503
    %v2505 = vpop.f32.mrb[0].mxu0
    %v2506 = vpop.f32.mrb[0].mxu0
    %2507 = vdwg.mxu0
    %2508 = vmatprep.subr.bf16.mxu0 %v1734
    %2509 = vmatpush1.bf16.msra.mxu0 %v1733
    %2510 = vmatprep.subr.bf16.mxu0 %v1738
    %2511 = vmatpush1.bf16.msra.mxu0 %v1737
    %2512 = vmatprep.subr.bf16.mxu0 %v1742
    %2513 = vmatpush1.bf16.msra.mxu0 %v1741
    %2514 = vmatprep.subr.bf16.mxu0 %v1746
    %2515 = vmatpush1.bf16.msra.mxu0 %v1745
    %2516 = vmatprep.subr.bf16.mxu0 %v1750
    %2517 = vmatpush1.bf16.msra.mxu0 %v1749
    %2518 = vmatprep.subr.bf16.mxu0 %v1754
    %2519 = vmatpush1.bf16.msra.mxu0 %v1753
    %2520 = vmatprep.subr.bf16.mxu0 %v1758
    %2521 = vmatpush1.bf16.msra.mxu0 %v1757
    %2522 = vmatprep.subr.bf16.mxu0 %v1762
    %2523 = vmatpush1.bf16.msra.mxu0 %v1761
    %2524 = vmatprep.subr.bf16.mxu0 0
    %2525 = vmatpush1.bf16.msra.mxu0 0
    %2526 = vmatprep.subr.bf16.mxu0 0
    %2527 = vmatpush1.bf16.msra.mxu0 0
    %2528 = vmatprep.subr.bf16.mxu0 0
    %2529 = vmatpush1.bf16.msra.mxu0 0
    %2530 = vmatprep.subr.bf16.mxu0 0
    %2531 = vmatpush1.bf16.msra.mxu0 0
    %2532 = vmatprep.subr.bf16.mxu0 0
    %2533 = vmatpush1.bf16.msra.mxu0 0
    %2534 = vmatprep.subr.bf16.mxu0 0
    %2535 = vmatpush1.bf16.msra.mxu0 0
    %2536 = vmatprep.subr.bf16.mxu0 0
    %2537 = vmatpush1.bf16.msra.mxu0 0
    %2538 = vmatprep.subr.bf16.mxu0 0
    %2539 = vmatpush1.bf16.msra.mxu0 0
    %2540 = vmatprep.mubr.bf16.mxu0 0
    %2541 = vmatmul.mubr.bf16.gmra.mrb[0].mxu0 %v2465
    %v2542 = vpop.f32.mrb[0].mxu0
    %v2543 = vadd.f32 0.0, %v2542
    %v2544 = vpop.f32.mrb[0].mxu0
    %v2545 = vadd.f32 0.0, %v2544
    %v2546 = vpop.f32.mrb[0].mxu0
    %v2547 = vpop.f32.mrb[0].mxu0
    %2548 = vdwg.mxu0
    %v2549 = vadd.f32 %v1578, %v2502
    %v2550 = vadd.f32 %v1580, %v2504
    %v2551 = vadd.f32 %v1631, %v2543
    %v2552 = vadd.f32 %v1633, %v2545
    %v2553 = vtanh.pop %v2549
    %v2554 = vmul.f32 %v2553, 0.5
    %v2555 = vadd.f32 %v2554, 0.5
    %v2556 = vtanh.pop %v2550
    %v2557 = vmul.f32 %v2556, 0.5
    %v2558 = vadd.f32 %v2557, 0.5
    %v2559 = vtanh.pop %v2551
    %v2560 = vtanh.pop %v2552
    %v2561 = vmul.f32 %v2560, 0.5
    %v2562 = vadd.f32 %v2561, 0.5
    %v2564 = vrot.slane %v2460, 4
    %v2566 = vmul.f32 %v2558, %v2564
    %v2567 = vmul.f32 %v2555, %v2559
    %v2568 = vadd.f32 %v2566, %v2567
    %v2569 = vtanh.pop %v2568
    %v2570 = vmul.f32 %v2562, %v2569
    %v2571 = vpack.c.bf16 %v2570, %v2570
    %2572 = vmatprep.subr.bf16.mxu0 %v1732
    %2573 = vmatpush1.bf16.msra.mxu0 %v1731
    %2574 = vmatprep.subr.bf16.mxu0 %v1736
    %2575 = vmatpush1.bf16.msra.mxu0 %v1735
    %2576 = vmatprep.subr.bf16.mxu0 %v1740
    %2577 = vmatpush1.bf16.msra.mxu0 %v1739
    %2578 = vmatprep.subr.bf16.mxu0 %v1744
    %2579 = vmatpush1.bf16.msra.mxu0 %v1743
    %2580 = vmatprep.subr.bf16.mxu0 %v1748
    %2581 = vmatpush1.bf16.msra.mxu0 %v1747
    %2582 = vmatprep.subr.bf16.mxu0 %v1752
    %2583 = vmatpush1.bf16.msra.mxu0 %v1751
    %2584 = vmatprep.subr.bf16.mxu0 %v1756
    %2585 = vmatpush1.bf16.msra.mxu0 %v1755
    %2586 = vmatprep.subr.bf16.mxu0 %v1760
    %2587 = vmatpush1.bf16.msra.mxu0 %v1759
    %2588 = vmatprep.subr.bf16.mxu0 0
    %2589 = vmatpush1.bf16.msra.mxu0 0
    %2590 = vmatprep.subr.bf16.mxu0 0
    %2591 = vmatpush1.bf16.msra.mxu0 0
    %2592 = vmatprep.subr.bf16.mxu0 0
    %2593 = vmatpush1.bf16.msra.mxu0 0
    %2594 = vmatprep.subr.bf16.mxu0 0
    %2595 = vmatpush1.bf16.msra.mxu0 0
    %2596 = vmatprep.subr.bf16.mxu0 0
    %2597 = vmatpush1.bf16.msra.mxu0 0
    %2598 = vmatprep.subr.bf16.mxu0 0
    %2599 = vmatpush1.bf16.msra.mxu0 0
    %2600 = vmatprep.subr.bf16.mxu0 0
    %2601 = vmatpush1.bf16.msra.mxu0 0
    %2602 = vmatprep.subr.bf16.mxu0 0
    %2603 = vmatpush1.bf16.msra.mxu0 0
    %2604 = vmatprep.mubr.bf16.mxu0 0
    %2605 = vmatmul.mubr.bf16.gmra.mrb[0].mxu0 %v2571
    %v2606 = vpop.f32.mrb[0].mxu0
    %v2607 = vadd.f32 0.0, %v2606
    %v2608 = vpop.f32.mrb[0].mxu0
    %v2609 = vadd.f32 0.0, %v2608
    %v2610 = vpop.f32.mrb[0].mxu0
    %v2611 = vpop.f32.mrb[0].mxu0
    %2612 = vdwg.mxu0
    %2613 = vmatprep.subr.bf16.mxu0 %v1734
    %2614 = vmatpush1.bf16.msra.mxu0 %v1733
    %2615 = vmatprep.subr.bf16.mxu0 %v1738
    %2616 = vmatpush1.bf16.msra.mxu0 %v1737
    %2617 = vmatprep.subr.bf16.mxu0 %v1742
    %2618 = vmatpush1.bf16.msra.mxu0 %v1741
    %2619 = vmatprep.subr.bf16.mxu0 %v1746
    %2620 = vmatpush1.bf16.msra.mxu0 %v1745
    %2621 = vmatprep.subr.bf16.mxu0 %v1750
    %2622 = vmatpush1.bf16.msra.mxu0 %v1749
    %2623 = vmatprep.subr.bf16.mxu0 %v1754
    %2624 = vmatpush1.bf16.msra.mxu0 %v1753
    %2625 = vmatprep.subr.bf16.mxu0 %v1758
    %2626 = vmatpush1.bf16.msra.mxu0 %v1757
    %2627 = vmatprep.subr.bf16.mxu0 %v1762
    %2628 = vmatpush1.bf16.msra.mxu0 %v1761
    %2629 = vmatprep.subr.bf16.mxu0 0
    %2630 = vmatpush1.bf16.msra.mxu0 0
    %2631 = vmatprep.subr.bf16.mxu0 0
    %2632 = vmatpush1.bf16.msra.mxu0 0
    %2633 = vmatprep.subr.bf16.mxu0 0
    %2634 = vmatpush1.bf16.msra.mxu0 0
    %2635 = vmatprep.subr.bf16.mxu0 0
    %2636 = vmatpush1.bf16.msra.mxu0 0
    %2637 = vmatprep.subr.bf16.mxu0 0
    %2638 = vmatpush1.bf16.msra.mxu0 0
    %2639 = vmatprep.subr.bf16.mxu0 0
    %2640 = vmatpush1.bf16.msra.mxu0 0
    %2641 = vmatprep.subr.bf16.mxu0 0
    %2642 = vmatpush1.bf16.msra.mxu0 0
    %2643 = vmatprep.subr.bf16.mxu0 0
    %2644 = vmatpush1.bf16.msra.mxu0 0
    %2645 = vmatprep.mubr.bf16.mxu0 0
    %2646 = vmatmul.mubr.bf16.gmra.mrb[0].mxu0 %v2571
    %v2647 = vpop.f32.mrb[0].mxu0
    %v2648 = vadd.f32 0.0, %v2647
    %v2649 = vpop.f32.mrb[0].mxu0
    %v2650 = vadd.f32 0.0, %v2649
    %v2651 = vpop.f32.mrb[0].mxu0
    %v2652 = vpop.f32.mrb[0].mxu0
    %2653 = vdwg.mxu0
    %v2658 = vrot.slane %v2607, 4
    %v2659 = vrot.slane %v2609, 4
    %v2660 = vrot.slane %v2648, 4
    %v2661 = vrot.slane %v2650, 4
    %v2666 = vadd.f32 %v1578, %v2658
    %v2667 = vadd.f32 %v1580, %v2659
    %v2668 = vadd.f32 %v1631, %v2660
    %v2669 = vadd.f32 %v1633, %v2661
    %v2670 = vtanh.pop %v2666
    %v2671 = vmul.f32 %v2670, 0.5
    %v2672 = vadd.f32 %v2671, 0.5
    %v2673 = vtanh.pop %v2667
    %v2674 = vmul.f32 %v2673, 0.5
    %v2675 = vadd.f32 %v2674, 0.5
    %v2676 = vtanh.pop %v2668
    %v2677 = vtanh.pop %v2669
    %v2678 = vmul.f32 %v2677, 0.5
    %v2679 = vadd.f32 %v2678, 0.5
    %v2681 = vrot.slane %v2568, 4
    %v2683 = vmul.f32 %v2675, %v2681
    %v2684 = vmul.f32 %v2672, %v2676
    %v2685 = vadd.f32 %v2683, %v2684
    %v2686 = vtanh.pop %v2685
    %v2687 = vmul.f32 %v2679, %v2686
    %v2688 = vld [vmem:[%s7] sm:$0x1]
    %v2689 = vld [vmem:[#allocation3] sm:$0x1]
    %v2691 = vlaneseq
    %v2692 = vshrl.u32 %v2691, 7
    %v2693 = vsub.s32 0, %v2692
    %v2694 = vrot.slane %v2688, %v2693
    %v2696 = vmul.f32 %v2687, %v2694
    %vm2697 = vcmask 1047556
    %v2698 = vsel %vm2697, %v2696, 0.0
    %2699 = vadd.xlane.f32.xlu0 %v2698
    %v2700 = vpop.xlane.xlu0 %2699
    %v2702 = vlaneseq
    %v2703 = vshrl.u32 %v2702, 7
    %v2704 = vsub.s32 0, %v2703
    %v2705 = vrot.slane %v2689, %v2704
    %v2707 = vadd.f32 %v2700, %v2705
    %vm2708 = vcmask 7172
    %2709 = vst.msk [vmem:[%s9 - $0x4] sm:$0xf0] %vm2708, %v2707
    // Predicated region
    $region50: #{tpu_custom_call.1} parent=1 // pred_check
      _
    $region51: #{tpu_custom_call.1} parent=1 // pred_check_branch
      %2711 = sbr.rel (0) target = $region53
    $region52: #{tpu_custom_call.1} parent=1 // pred_region
      _
    $region53: #{tpu_custom_call.1} parent=1 // pred_fallthru
      _
    // Predicated region
    $region54: #{tpu_custom_call.1} parent=1 // pred_check
      _
    $region55: #{tpu_custom_call.1} parent=1 // pred_check_branch
      %2713 = sbr.rel (0) target = $region57
    $region56: #{tpu_custom_call.1} parent=1 // pred_region
      _
    $region57: #{tpu_custom_call.1} parent=1 // pred_fallthru
      _
    %2714 = vsyncpa [#allocation5], 1
    %2715 = vsyncpa [#allocation7], 1

</llo_original>
